<compile_context>
chip_gen: v5e
topology: v5e:2x2
jax: 0.10.0
libtpu: 0.0.40
codegen_flags: <defaults>
</compile_context>

<pallas_src>
import functools
import math

import jax
import jax.numpy as jnp
from jax.experimental import pallas as pl
from jax.experimental.pallas import tpu as pltpu


# ----------------------------------------------------------------------------
# Kernel
# ----------------------------------------------------------------------------
def _bisoftmax_kernel(x_ref, wqk_ref, wv_ref, w12_ref, o_ref, *,
                      head_block, seq_len, d_model):
    Hb, S, D = head_block, seq_len, d_model

    # Activation block: (Hb, S, D) bf16 -> (Hb*S, D) rows for all projections.
    xh = x_ref[...].reshape(Hb * S, D)

    def branch(i):
        # wqk columns: [ Wq1^T/sqrt(S) | Wk1^T | Wq2^T/sqrt(S) | Wk2^T ]
        q = jnp.dot(xh, wqk_ref[:, (2 * i) * S:(2 * i + 1) * S],
                    preferred_element_type=jnp.float32)
        k = jnp.dot(xh, wqk_ref[:, (2 * i + 1) * S:(2 * i + 2) * S],
                    preferred_element_type=jnp.float32)
        q = q.astype(jnp.bfloat16).reshape(Hb, S, S)
        k = k.astype(jnp.bfloat16).reshape(Hb, S, S)
        # Contract-last-dims einsum == q @ k^T without any in-kernel transpose.
        s = jnp.einsum('hqd,hkd->hqk', q, k, preferred_element_type=jnp.float32)
        m = jnp.max(s, axis=-1, keepdims=True)
        e = jnp.exp(s - m)
        a = e * pl.reciprocal(jnp.sum(e, axis=-1, keepdims=True), approx=True)
        return a.astype(jnp.bfloat16).reshape(Hb * S, S)

    # Branches computed sequentially so their intermediates never coexist.
    a1 = branch(0)
    a2 = branch(1)

    # Fused (score1 - score2): [a1 | a2] @ [W1^T ; -W2^T], f32 accum on the MXU.
    diff = jnp.dot(jnp.concatenate([a1, a2], axis=-1), w12_ref[...],
                   preferred_element_type=jnp.float32)                 # (Hb*S, S)
    circle = (diff * diff).astype(jnp.bfloat16).reshape(Hb, S, S)

    # Deferred V projection: only materialized when actually needed.
    v = jnp.dot(xh, wv_ref[...], preferred_element_type=jnp.float32)
    v = v.astype(jnp.bfloat16).reshape(Hb, S, S)

    out = jnp.einsum('hqk,hkd->hqd', circle, v, preferred_element_type=jnp.float32)
    o_ref[...] = out.astype(o_ref.dtype)


# ----------------------------------------------------------------------------
# Host-side helpers
# ----------------------------------------------------------------------------
def _vmem_budget_bytes():
    """~75% of physical VMEM: ~48 MiB on v7x, ~96 MiB on v5e/v6e."""
    cap = 128 << 20
    try:
        cap = int(getattr(pltpu.get_tpu_info(), "vmem_capacity_bytes", cap))
    except Exception:
        pass
    return max(32 << 20, int(cap * 3) // 4)


def _pick_head_block(n_head, seq_len, d_model, vmem_budget):
    """Largest divisor of n_head that (a) keeps >= 2 grid iterations (megacore),
    (b) fits the estimated VMEM working set, (c) prefers Hb*S % 256 == 0."""
    S, D = seq_len, d_model
    weight_bytes = 14 * S * S            # bf16: wqk(4S*S) + wv(S*S) + w12(2S*S)

    def fits(hb):
        act = hb * S * D * (2 * 2 + 4 * 2)   # x bf16 x2 bufs + out f32 x2 bufs
        live = 18 * hb * S * S               # peak in-kernel intermediates (est.)
        return weight_bytes + act + live <= vmem_budget

    hb_cap = n_head if n_head < 2 else max(1, n_head // 2)
    cands = [hb for hb in range(1, hb_cap + 1) if n_head % hb == 0 and fits(hb)]
    if not cands:
        return 1
    aligned = [hb for hb in cands if (hb * S) % 256 == 0]
    return max(aligned) if aligned else max(cands)


def prepare_weights(params, sequence_len):
    """Hoisted out of the per-forward path: transpose once, fold 1/sqrt(S) into
    Wq*, fuse W1/-W2, cast everything to bf16."""
    S = sequence_len
    inv_sqrt_s = 1.0 / math.sqrt(S)
    wqk = jnp.concatenate(
        [params["Wq1"].T * inv_sqrt_s,
         params["Wk1"].T,
         params["Wq2"].T * inv_sqrt_s,
         params["Wk2"].T],
        axis=1).astype(jnp.bfloat16)                                   # (S, 4S)
    wv = params["Wv"].T.astype(jnp.bfloat16)                           # (S, S)
    w12 = jnp.concatenate([params["W1"].T, -params["W2"].T],
                          axis=0).astype(jnp.bfloat16)                 # (2S, S)
    return wqk, wv, w12


def bisoftmax_forward(x, prepped_weights, *, n_head, sequence_len, d_model,
                      out_dtype=jnp.float32):
    """x: (n_head * S, D) f32 -> (n_head, S, D)."""
    H, S, D = n_head, sequence_len, d_model
    assert x.shape == (H * S, D)
    assert D == S, "nn.Linear(S, S) on the last dim requires d_model == sequence_len"
    wqk, wv, w12 = prepped_weights

    budget = _vmem_budget_bytes()
    Hb = _pick_head_block(H, S, D, budget)

    xr = x.reshape(H, S, D).astype(jnp.bfloat16)
    kernel = functools.partial(_bisoftmax_kernel,
                               head_block=Hb, seq_len=S, d_model=D)

    def call(single_buffer_weights):
        wmode = dict(pipeline_mode=pl.Buffered(1)) if single_buffer_weights else {}
        return pl.pallas_call(
            kernel,
            out_shape=jax.ShapeDtypeStruct((H, S, D), out_dtype),
            grid=(H // Hb,),
            in_specs=[
                pl.BlockSpec((Hb, S, D), lambda h: (h, 0, 0)),          # activations
                pl.BlockSpec((S, 4 * S), lambda h: (0, 0), **wmode),    # [Wq1|Wk1|Wq2|Wk2]^T
                pl.BlockSpec((S, S), lambda h: (0, 0), **wmode),        # Wv^T
                pl.BlockSpec((2 * S, S), lambda h: (0, 0), **wmode),    # [W1^T ; -W2^T]
            ],
            out_specs=pl.BlockSpec((Hb, S, D), lambda h: (h, 0, 0)),
            compiler_params=pltpu.CompilerParams(
                dimension_semantics=("parallel",),
                vmem_limit_bytes=budget),
        )(xr, wqk, wv, w12)

    try:
        return call(True)
    except Exception:
        # TODO(synk): drop fallback once pl.Buffered(1) is supported everywhere.
        return call(False)


# ----------------------------------------------------------------------------
# Init / reference (pure JAX, f32) for validation
# ----------------------------------------------------------------------------
def init_params(key, sequence_len):
    """xavier_normal_: gain(sigmoid)=1.0, gain(linear)=1.0 -> std = 1/sqrt(S)."""
    S = sequence_len
    std = math.sqrt(2.0 / (S + S))
    names = ["Wq1", "Wq2", "Wk1", "Wk2", "Wv", "W1", "W2"]
    keys = jax.random.split(key, len(names))
    return {n: std * jax.random.normal(k, (S, S), dtype=jnp.float32)
            for n, k in zip(names, keys)}


def bisoftmax_reference(x, params, *, n_head, sequence_len, d_model):
    xr = x.reshape(n_head, sequence_len, d_model)
    lin = lambda a, w: jnp.einsum("hsd,od->hso", a, w)
    q1, q2 = lin(xr, params["Wq1"]), lin(xr, params["Wq2"])
    k1, k2 = lin(xr, params["Wk1"]), lin(xr, params["Wk2"])
    v = lin(xr, params["Wv"])
    scale = 1.0 / math.sqrt(sequence_len)
    a1 = jax.nn.softmax(jnp.einsum("hqd,hkd->hqk", q1, k1) * scale, axis=-1)
    a2 = jax.nn.softmax(jnp.einsum("hqd,hkd->hqk", q2, k2) * scale, axis=-1)
    s1 = lin(a1, params["W1"])
    s2 = lin(a2, params["W2"])
    circle = (s1 - s2) ** 2
    return jnp.einsum("hqk,hkd->hqd", circle, v)


# ----------------------------------------------------------------------------
# Demo
# ----------------------------------------------------------------------------
if __name__ == "__main__":
    n_head = 4
    sequence_len = 128
    d_model = 128      # must equal sequence_len (Linear(S, S) acts on last dim)

    key = jax.random.PRNGKey(0)
    kx, kp = jax.random.split(key)
    x = jax.random.normal(kx, (n_head * sequence_len, d_model), dtype=jnp.float32)
    params = init_params(kp, sequence_len)

    # Weight prep is hoisted: done once, reused for every forward call.
    prepped = prepare_weights(params, sequence_len)

    out = bisoftmax_forward(x, prepped, n_head=n_head,
                            sequence_len=sequence_len, d_model=d_model)
    out = jax.block_until_ready(out)

    ref = bisoftmax_reference(x, params, n_head=n_head,
                              sequence_len=sequence_len, d_model=d_model)
    assert out.shape == (n_head, sequence_len, d_model)
    # bf16 MXU operands + approx reciprocal -> scale-aware tolerance vs f32 ref.
    rel_err = float(jnp.max(jnp.abs(out - ref)) / (jnp.max(jnp.abs(ref)) + 1e-12))
    assert rel_err < 2e-2, f"mismatch vs reference: rel_err={rel_err}"

    print("KERNEL_OK")
</pallas_src>

<mosaic_0001>
module attributes {stable_mosaic.version = 11 : i64} {
  func.func @_bisoftmax_kernel(%arg0: i32, %arg1: memref<2x128x128xbf16, #tpu.memory_space<vmem>>, %arg2: memref<128x512xbf16, #tpu.memory_space<vmem>>, %arg3: memref<128x128xbf16, #tpu.memory_space<vmem>>, %arg4: memref<256x128xbf16, #tpu.memory_space<vmem>>, %arg5: memref<2x128x128xf32, #tpu.memory_space<vmem>>) attributes {dimension_semantics = [#tpu.dimension_semantics<parallel>], iteration_bounds = array<i64: 2>, scalar_prefetch = 0 : i64, scratch_operands = 0 : i64, tpu.core_type = #tpu.core_type<tc>, window_params = [{transform_indices = @transform_0, window_bounds = array<i64: 2, 128, 128>}, {pipeline_mode = #tpu.pipeline_mode<synchronous>, transform_indices = @transform_1, window_bounds = array<i64: 128, 512>}, {pipeline_mode = #tpu.pipeline_mode<synchronous>, transform_indices = @transform_2, window_bounds = array<i64: 128, 128>}, {pipeline_mode = #tpu.pipeline_mode<synchronous>, transform_indices = @transform_3, window_bounds = array<i64: 256, 128>}, {transform_indices = @transform_4, window_bounds = array<i64: 2, 128, 128>}]} {
    %c0 = arith.constant 0 : index
    %c0_0 = arith.constant 0 : index
    %c0_1 = arith.constant 0 : index
    %0 = vector.load %arg1[%c0, %c0_0, %c0_1] : memref<2x128x128xbf16, #tpu.memory_space<vmem>>, vector<2x128x128xbf16>
    %1 = vector.shape_cast %0 : vector<2x128x128xbf16> to vector<256x128xbf16>
    %c0_2 = arith.constant 0 : index
    %c0_3 = arith.constant 0 : index
    %2 = vector.load %arg2[%c0_2, %c0_3] : memref<128x512xbf16, #tpu.memory_space<vmem>>, vector<128x128xbf16>
    %cst = arith.constant dense<0.000000e+00> : vector<256x128xf32>
    %3 = tpu.matmul %1, %2, %cst {dimension_numbers = #tpu.dot_dimension_numbers<[1], [0], [0], [1], [0, 0, 1, 1], [], []>} : vector<256x128xbf16>, vector<128x128xbf16>, vector<256x128xf32> -> vector<256x128xf32>
    %c0_4 = arith.constant 0 : index
    %c128 = arith.constant 128 : index
    %4 = vector.load %arg2[%c0_4, %c128] : memref<128x512xbf16, #tpu.memory_space<vmem>>, vector<128x128xbf16>
    %cst_5 = arith.constant dense<0.000000e+00> : vector<256x128xf32>
    %5 = tpu.matmul %1, %4, %cst_5 {dimension_numbers = #tpu.dot_dimension_numbers<[1], [0], [0], [1], [0, 0, 1, 1], [], []>} : vector<256x128xbf16>, vector<128x128xbf16>, vector<256x128xf32> -> vector<256x128xf32>
    %6 = arith.truncf %3 : vector<256x128xf32> to vector<256x128xbf16>
    %7 = vector.shape_cast %6 : vector<256x128xbf16> to vector<2x128x128xbf16>
    %8 = arith.truncf %5 : vector<256x128xf32> to vector<256x128xbf16>
    %9 = vector.shape_cast %8 : vector<256x128xbf16> to vector<2x128x128xbf16>
    "tpu.trace_start"() <{level = 10 : i32, message = "hqd,hkd->hqk"}> : () -> ()
    %cst_6 = arith.constant dense<0.000000e+00> : vector<2x128x128xf32>
    %10 = tpu.matmul %7, %9, %cst_6 {dimension_numbers = #tpu.dot_dimension_numbers<[2], [2], [1], [1], [0, 0, 0, 1, 1, 1], [0], [0]>} : vector<2x128x128xbf16>, vector<2x128x128xbf16>, vector<2x128x128xf32> -> vector<2x128x128xf32>
    "tpu.trace_stop"() : () -> ()
    %cst_7 = arith.constant dense<0xFF800000> : vector<2x128xf32>
    %11 = vector.multi_reduction <maximumf>, %10, %cst_7 [2] : vector<2x128x128xf32> to vector<2x128xf32>
    %12 = vector.shape_cast %11 : vector<2x128xf32> to vector<2x128x1xf32>
    %13 = vector.broadcast %12 : vector<2x128x1xf32> to vector<2x128x128xf32>
    %14 = arith.subf %10, %13 : vector<2x128x128xf32>
    %15 = math.exp %14 : vector<2x128x128xf32>
    %cst_8 = arith.constant dense<0.000000e+00> : vector<2x128xf32>
    %16 = vector.multi_reduction <add>, %15, %cst_8 [2] : vector<2x128x128xf32> to vector<2x128xf32>
    %17 = vector.shape_cast %16 : vector<2x128xf32> to vector<2x128x1xf32>
    %18 = tpu.reciprocal %17 {approx = true} : vector<2x128x1xf32> -> vector<2x128x1xf32>
    %19 = vector.broadcast %18 : vector<2x128x1xf32> to vector<2x128x128xf32>
    %20 = arith.mulf %15, %19 : vector<2x128x128xf32>
    %21 = arith.truncf %20 : vector<2x128x128xf32> to vector<2x128x128xbf16>
    %22 = vector.shape_cast %21 : vector<2x128x128xbf16> to vector<256x128xbf16>
    %c0_9 = arith.constant 0 : index
    %c256 = arith.constant 256 : index
    %23 = vector.load %arg2[%c0_9, %c256] : memref<128x512xbf16, #tpu.memory_space<vmem>>, vector<128x128xbf16>
    %cst_10 = arith.constant dense<0.000000e+00> : vector<256x128xf32>
    %24 = tpu.matmul %1, %23, %cst_10 {dimension_numbers = #tpu.dot_dimension_numbers<[1], [0], [0], [1], [0, 0, 1, 1], [], []>} : vector<256x128xbf16>, vector<128x128xbf16>, vector<256x128xf32> -> vector<256x128xf32>
    %c0_11 = arith.constant 0 : index
    %c384 = arith.constant 384 : index
    %25 = vector.load %arg2[%c0_11, %c384] : memref<128x512xbf16, #tpu.memory_space<vmem>>, vector<128x128xbf16>
    %cst_12 = arith.constant dense<0.000000e+00> : vector<256x128xf32>
    %26 = tpu.matmul %1, %25, %cst_12 {dimension_numbers = #tpu.dot_dimension_numbers<[1], [0], [0], [1], [0, 0, 1, 1], [], []>} : vector<256x128xbf16>, vector<128x128xbf16>, vector<256x128xf32> -> vector<256x128xf32>
    %27 = arith.truncf %24 : vector<256x128xf32> to vector<256x128xbf16>
    %28 = vector.shape_cast %27 : vector<256x128xbf16> to vector<2x128x128xbf16>
    %29 = arith.truncf %26 : vector<256x128xf32> to vector<256x128xbf16>
    %30 = vector.shape_cast %29 : vector<256x128xbf16> to vector<2x128x128xbf16>
    "tpu.trace_start"() <{level = 10 : i32, message = "hqd,hkd->hqk"}> : () -> ()
    %cst_13 = arith.constant dense<0.000000e+00> : vector<2x128x128xf32>
    %31 = tpu.matmul %28, %30, %cst_13 {dimension_numbers = #tpu.dot_dimension_numbers<[2], [2], [1], [1], [0, 0, 0, 1, 1, 1], [0], [0]>} : vector<2x128x128xbf16>, vector<2x128x128xbf16>, vector<2x128x128xf32> -> vector<2x128x128xf32>
    "tpu.trace_stop"() : () -> ()
    %cst_14 = arith.constant dense<0xFF800000> : vector<2x128xf32>
    %32 = vector.multi_reduction <maximumf>, %31, %cst_14 [2] : vector<2x128x128xf32> to vector<2x128xf32>
    %33 = vector.shape_cast %32 : vector<2x128xf32> to vector<2x128x1xf32>
    %34 = vector.broadcast %33 : vector<2x128x1xf32> to vector<2x128x128xf32>
    %35 = arith.subf %31, %34 : vector<2x128x128xf32>
    %36 = math.exp %35 : vector<2x128x128xf32>
    %cst_15 = arith.constant dense<0.000000e+00> : vector<2x128xf32>
    %37 = vector.multi_reduction <add>, %36, %cst_15 [2] : vector<2x128x128xf32> to vector<2x128xf32>
    %38 = vector.shape_cast %37 : vector<2x128xf32> to vector<2x128x1xf32>
    %39 = tpu.reciprocal %38 {approx = true} : vector<2x128x1xf32> -> vector<2x128x1xf32>
    %40 = vector.broadcast %39 : vector<2x128x1xf32> to vector<2x128x128xf32>
    %41 = arith.mulf %36, %40 : vector<2x128x128xf32>
    %42 = arith.truncf %41 : vector<2x128x128xf32> to vector<2x128x128xbf16>
    %43 = vector.shape_cast %42 : vector<2x128x128xbf16> to vector<256x128xbf16>
    %44 = tpu.concatenate %22, %43 in 1 : vector<256x128xbf16>, vector<256x128xbf16> -> vector<256x256xbf16>
    %c0_16 = arith.constant 0 : index
    %c0_17 = arith.constant 0 : index
    %45 = vector.load %arg4[%c0_16, %c0_17] : memref<256x128xbf16, #tpu.memory_space<vmem>>, vector<256x128xbf16>
    %cst_18 = arith.constant dense<0.000000e+00> : vector<256x128xf32>
    %46 = tpu.matmul %44, %45, %cst_18 {dimension_numbers = #tpu.dot_dimension_numbers<[1], [0], [0], [1], [0, 0, 1, 1], [], []>} : vector<256x256xbf16>, vector<256x128xbf16>, vector<256x128xf32> -> vector<256x128xf32>
    %47 = arith.mulf %46, %46 : vector<256x128xf32>
    %48 = arith.truncf %47 : vector<256x128xf32> to vector<256x128xbf16>
    %49 = vector.shape_cast %48 : vector<256x128xbf16> to vector<2x128x128xbf16>
    %c0_19 = arith.constant 0 : index
    %c0_20 = arith.constant 0 : index
    %50 = vector.load %arg3[%c0_19, %c0_20] : memref<128x128xbf16, #tpu.memory_space<vmem>>, vector<128x128xbf16>
    %cst_21 = arith.constant dense<0.000000e+00> : vector<256x128xf32>
    %51 = tpu.matmul %1, %50, %cst_21 {dimension_numbers = #tpu.dot_dimension_numbers<[1], [0], [0], [1], [0, 0, 1, 1], [], []>} : vector<256x128xbf16>, vector<128x128xbf16>, vector<256x128xf32> -> vector<256x128xf32>
    %52 = arith.truncf %51 : vector<256x128xf32> to vector<256x128xbf16>
    %53 = vector.shape_cast %52 : vector<256x128xbf16> to vector<2x128x128xbf16>
    "tpu.trace_start"() <{level = 10 : i32, message = "hqk,hkd->hqd"}> : () -> ()
    %cst_22 = arith.constant dense<0.000000e+00> : vector<2x128x128xf32>
    %54 = tpu.matmul %49, %53, %cst_22 {dimension_numbers = #tpu.dot_dimension_numbers<[2], [1], [1], [2], [0, 0, 0, 1, 1, 2], [0], [0]>} : vector<2x128x128xbf16>, vector<2x128x128xbf16>, vector<2x128x128xf32> -> vector<2x128x128xf32>
    "tpu.trace_stop"() : () -> ()
    %c0_23 = arith.constant 0 : index
    %c0_24 = arith.constant 0 : index
    %c0_25 = arith.constant 0 : index
    %55 = vector.load %arg5[%c0_23, %c0_24, %c0_25] : memref<2x128x128xf32, #tpu.memory_space<vmem>>, vector<2x128x128xf32>
    tpu.vector_store %arg5[%c0_23, %c0_24, %c0_25], %54 {strides = array<i32>} : memref<2x128x128xf32, #tpu.memory_space<vmem>>, vector<2x128x128xf32>,
    return
  }
  func.func @transform_0(%arg0: i32) -> (i32, i32, i32) {
    %c0_i32 = arith.constant 0 : i32
    %c0_i32_0 = arith.constant 0 : i32
    %c0_i32_1 = arith.constant 0 : i32
    return %arg0, %c0_i32, %c0_i32_0 : i32, i32, i32
  }
  func.func @transform_1(%arg0: i32) -> (i32, i32) {
    %c0_i32 = arith.constant 0 : i32
    %c0_i32_0 = arith.constant 0 : i32
    %c0_i32_1 = arith.constant 0 : i32
    return %c0_i32, %c0_i32_0 : i32, i32
  }
  func.func @transform_2(%arg0: i32) -> (i32, i32) {
    %c0_i32 = arith.constant 0 : i32
    %c0_i32_0 = arith.constant 0 : i32
    %c0_i32_1 = arith.constant 0 : i32
    return %c0_i32, %c0_i32_0 : i32, i32
  }
  func.func @transform_3(%arg0: i32) -> (i32, i32) {
    %c0_i32 = arith.constant 0 : i32
    %c0_i32_0 = arith.constant 0 : i32
    %c0_i32_1 = arith.constant 0 : i32
    return %c0_i32, %c0_i32_0 : i32, i32
  }
  func.func @transform_4(%arg0: i32) -> (i32, i32, i32) {
    %c0_i32 = arith.constant 0 : i32
    %c0_i32_0 = arith.constant 0 : i32
    %c0_i32_1 = arith.constant 0 : i32
    return %arg0, %c0_i32, %c0_i32_0 : i32, i32, i32
  }
}

module attributes {stable_mosaic.version = 11 : i64} {
  func.func @_bisoftmax_kernel(%arg0: i32, %arg1: memref<2x128x128xbf16, #tpu.memory_space<vmem>>, %arg2: memref<128x512xbf16, #tpu.memory_space<vmem>>, %arg3: memref<128x128xbf16, #tpu.memory_space<vmem>>, %arg4: memref<256x128xbf16, #tpu.memory_space<vmem>>, %arg5: memref<2x128x128xf32, #tpu.memory_space<vmem>>) attributes {dimension_semantics = [#tpu.dimension_semantics<parallel>], iteration_bounds = array<i64: 2>, scalar_prefetch = 0 : i64, scratch_operands = 0 : i64, tpu.core_type = #tpu.core_type<tc>, window_params = [{transform_indices = @transform_0, window_bounds = array<i64: 2, 128, 128>}, {pipeline_mode = #tpu.pipeline_mode<synchronous>, transform_indices = @transform_1, window_bounds = array<i64: 128, 512>}, {pipeline_mode = #tpu.pipeline_mode<synchronous>, transform_indices = @transform_2, window_bounds = array<i64: 128, 128>}, {pipeline_mode = #tpu.pipeline_mode<synchronous>, transform_indices = @transform_3, window_bounds = array<i64: 256, 128>}, {transform_indices = @transform_4, window_bounds = array<i64: 2, 128, 128>}]} {
    %c0 = arith.constant 0 : index
    %c0_0 = arith.constant 0 : index
    %c0_1 = arith.constant 0 : index
    %0 = vector.load %arg1[%c0, %c0_0, %c0_1] : memref<2x128x128xbf16, #tpu.memory_space<vmem>>, vector<2x128x128xbf16>
    %1 = vector.shape_cast %0 : vector<2x128x128xbf16> to vector<256x128xbf16>
    %c0_2 = arith.constant 0 : index
    %c0_3 = arith.constant 0 : index
    %2 = vector.load %arg2[%c0_2, %c0_3] : memref<128x512xbf16, #tpu.memory_space<vmem>>, vector<128x128xbf16>
    %cst = arith.constant dense<0.000000e+00> : vector<256x128xf32>
    %3 = tpu.matmul %1, %2, %cst {dimension_numbers = #tpu.dot_dimension_numbers<[1], [0], [0], [1], [0, 0, 1, 1], [], []>} : vector<256x128xbf16>, vector<128x128xbf16>, vector<256x128xf32> -> vector<256x128xf32>
    %c0_4 = arith.constant 0 : index
    %c128 = arith.constant 128 : index
    %4 = vector.load %arg2[%c0_4, %c128] : memref<128x512xbf16, #tpu.memory_space<vmem>>, vector<128x128xbf16>
    %cst_5 = arith.constant dense<0.000000e+00> : vector<256x128xf32>
    %5 = tpu.matmul %1, %4, %cst_5 {dimension_numbers = #tpu.dot_dimension_numbers<[1], [0], [0], [1], [0, 0, 1, 1], [], []>} : vector<256x128xbf16>, vector<128x128xbf16>, vector<256x128xf32> -> vector<256x128xf32>
    %6 = arith.truncf %3 : vector<256x128xf32> to vector<256x128xbf16>
    %7 = vector.shape_cast %6 : vector<256x128xbf16> to vector<2x128x128xbf16>
    %8 = arith.truncf %5 : vector<256x128xf32> to vector<256x128xbf16>
    %9 = vector.shape_cast %8 : vector<256x128xbf16> to vector<2x128x128xbf16>
    "tpu.trace_start"() <{level = 10 : i32, message = "hqd,hkd->hqk"}> : () -> ()
    %cst_6 = arith.constant dense<0.000000e+00> : vector<2x128x128xf32>
    %10 = tpu.matmul %7, %9, %cst_6 {dimension_numbers = #tpu.dot_dimension_numbers<[2], [2], [1], [1], [0, 0, 0, 1, 1, 1], [0], [0]>} : vector<2x128x128xbf16>, vector<2x128x128xbf16>, vector<2x128x128xf32> -> vector<2x128x128xf32>
    "tpu.trace_stop"() : () -> ()
    %cst_7 = arith.constant dense<0xFF800000> : vector<2x128xf32>
    %11 = vector.multi_reduction <maximumf>, %10, %cst_7 [2] : vector<2x128x128xf32> to vector<2x128xf32>
    %12 = vector.shape_cast %11 : vector<2x128xf32> to vector<2x128x1xf32>
    %13 = vector.broadcast %12 : vector<2x128x1xf32> to vector<2x128x128xf32>
    %14 = arith.subf %10, %13 : vector<2x128x128xf32>
    %15 = math.exp %14 : vector<2x128x128xf32>
    %cst_8 = arith.constant dense<0.000000e+00> : vector<2x128xf32>
    %16 = vector.multi_reduction <add>, %15, %cst_8 [2] : vector<2x128x128xf32> to vector<2x128xf32>
    %17 = vector.shape_cast %16 : vector<2x128xf32> to vector<2x128x1xf32>
    %18 = tpu.reciprocal %17 {approx = true} : vector<2x128x1xf32> -> vector<2x128x1xf32>
    %19 = vector.broadcast %18 : vector<2x128x1xf32> to vector<2x128x128xf32>
    %20 = arith.mulf %15, %19 : vector<2x128x128xf32>
    %21 = arith.truncf %20 : vector<2x128x128xf32> to vector<2x128x128xbf16>
    %22 = vector.shape_cast %21 : vector<2x128x128xbf16> to vector<256x128xbf16>
    %c0_9 = arith.constant 0 : index
    %c256 = arith.constant 256 : index
    %23 = vector.load %arg2[%c0_9, %c256] : memref<128x512xbf16, #tpu.memory_space<vmem>>, vector<128x128xbf16>
    %cst_10 = arith.constant dense<0.000000e+00> : vector<256x128xf32>
    %24 = tpu.matmul %1, %23, %cst_10 {dimension_numbers = #tpu.dot_dimension_numbers<[1], [0], [0], [1], [0, 0, 1, 1], [], []>} : vector<256x128xbf16>, vector<128x128xbf16>, vector<256x128xf32> -> vector<256x128xf32>
    %c0_11 = arith.constant 0 : index
    %c384 = arith.constant 384 : index
    %25 = vector.load %arg2[%c0_11, %c384] : memref<128x512xbf16, #tpu.memory_space<vmem>>, vector<128x128xbf16>
    %cst_12 = arith.constant dense<0.000000e+00> : vector<256x128xf32>
    %26 = tpu.matmul %1, %25, %cst_12 {dimension_numbers = #tpu.dot_dimension_numbers<[1], [0], [0], [1], [0, 0, 1, 1], [], []>} : vector<256x128xbf16>, vector<128x128xbf16>, vector<256x128xf32> -> vector<256x128xf32>
    %27 = arith.truncf %24 : vector<256x128xf32> to vector<256x128xbf16>
    %28 = vector.shape_cast %27 : vector<256x128xbf16> to vector<2x128x128xbf16>
    %29 = arith.truncf %26 : vector<256x128xf32> to vector<256x128xbf16>
    %30 = vector.shape_cast %29 : vector<256x128xbf16> to vector<2x128x128xbf16>
    "tpu.trace_start"() <{level = 10 : i32, message = "hqd,hkd->hqk"}> : () -> ()
    %cst_13 = arith.constant dense<0.000000e+00> : vector<2x128x128xf32>
    %31 = tpu.matmul %28, %30, %cst_13 {dimension_numbers = #tpu.dot_dimension_numbers<[2], [2], [1], [1], [0, 0, 0, 1, 1, 1], [0], [0]>} : vector<2x128x128xbf16>, vector<2x128x128xbf16>, vector<2x128x128xf32> -> vector<2x128x128xf32>
    "tpu.trace_stop"() : () -> ()
    %cst_14 = arith.constant dense<0xFF800000> : vector<2x128xf32>
    %32 = vector.multi_reduction <maximumf>, %31, %cst_14 [2] : vector<2x128x128xf32> to vector<2x128xf32>
    %33 = vector.shape_cast %32 : vector<2x128xf32> to vector<2x128x1xf32>
    %34 = vector.broadcast %33 : vector<2x128x1xf32> to vector<2x128x128xf32>
    %35 = arith.subf %31, %34 : vector<2x128x128xf32>
    %36 = math.exp %35 : vector<2x128x128xf32>
    %cst_15 = arith.constant dense<0.000000e+00> : vector<2x128xf32>
    %37 = vector.multi_reduction <add>, %36, %cst_15 [2] : vector<2x128x128xf32> to vector<2x128xf32>
    %38 = vector.shape_cast %37 : vector<2x128xf32> to vector<2x128x1xf32>
    %39 = tpu.reciprocal %38 {approx = true} : vector<2x128x1xf32> -> vector<2x128x1xf32>
    %40 = vector.broadcast %39 : vector<2x128x1xf32> to vector<2x128x128xf32>
    %41 = arith.mulf %36, %40 : vector<2x128x128xf32>
    %42 = arith.truncf %41 : vector<2x128x128xf32> to vector<2x128x128xbf16>
    %43 = vector.shape_cast %42 : vector<2x128x128xbf16> to vector<256x128xbf16>
    %44 = tpu.concatenate %22, %43 in 1 : vector<256x128xbf16>, vector<256x128xbf16> -> vector<256x256xbf16>
    %c0_16 = arith.constant 0 : index
    %c0_17 = arith.constant 0 : index
    %45 = vector.load %arg4[%c0_16, %c0_17] : memref<256x128xbf16, #tpu.memory_space<vmem>>, vector<256x128xbf16>
    %cst_18 = arith.constant dense<0.000000e+00> : vector<256x128xf32>
    %46 = tpu.matmul %44, %45, %cst_18 {dimension_numbers = #tpu.dot_dimension_numbers<[1], [0], [0], [1], [0, 0, 1, 1], [], []>} : vector<256x256xbf16>, vector<256x128xbf16>, vector<256x128xf32> -> vector<256x128xf32>
    %47 = arith.mulf %46, %46 : vector<256x128xf32>
    %48 = arith.truncf %47 : vector<256x128xf32> to vector<256x128xbf16>
    %49 = vector.shape_cast %48 : vector<256x128xbf16> to vector<2x128x128xbf16>
    %c0_19 = arith.constant 0 : index
    %c0_20 = arith.constant 0 : index
    %50 = vector.load %arg3[%c0_19, %c0_20] : memref<128x128xbf16, #tpu.memory_space<vmem>>, vector<128x128xbf16>
    %cst_21 = arith.constant dense<0.000000e+00> : vector<256x128xf32>
    %51 = tpu.matmul %1, %50, %cst_21 {dimension_numbers = #tpu.dot_dimension_numbers<[1], [0], [0], [1], [0, 0, 1, 1], [], []>} : vector<256x128xbf16>, vector<128x128xbf16>, vector<256x128xf32> -> vector<256x128xf32>
    %52 = arith.truncf %51 : vector<256x128xf32> to vector<256x128xbf16>
    %53 = vector.shape_cast %52 : vector<256x128xbf16> to vector<2x128x128xbf16>
    "tpu.trace_start"() <{level = 10 : i32, message = "hqk,hkd->hqd"}> : () -> ()
    %cst_22 = arith.constant dense<0.000000e+00> : vector<2x128x128xf32>
    %54 = tpu.matmul %49, %53, %cst_22 {dimension_numbers = #tpu.dot_dimension_numbers<[2], [1], [1], [2], [0, 0, 0, 1, 1, 2], [0], [0]>} : vector<2x128x128xbf16>, vector<2x128x128xbf16>, vector<2x128x128xf32> -> vector<2x128x128xf32>
    "tpu.trace_stop"() : () -> ()
    %c0_23 = arith.constant 0 : index
    %c0_24 = arith.constant 0 : index
    %c0_25 = arith.constant 0 : index
    %55 = vector.load %arg5[%c0_23, %c0_24, %c0_25] : memref<2x128x128xf32, #tpu.memory_space<vmem>>, vector<2x128x128xf32>
    tpu.vector_store %arg5[%c0_23, %c0_24, %c0_25], %54 {strides = array<i32>} : memref<2x128x128xf32, #tpu.memory_space<vmem>>, vector<2x128x128xf32>,
    return
  }
  func.func @transform_0(%arg0: i32) -> (i32, i32, i32) {
    %c0_i32 = arith.constant 0 : i32
    %c0_i32_0 = arith.constant 0 : i32
    %c0_i32_1 = arith.constant 0 : i32
    return %arg0, %c0_i32, %c0_i32_0 : i32, i32, i32
  }
  func.func @transform_1(%arg0: i32) -> (i32, i32) {
    %c0_i32 = arith.constant 0 : i32
    %c0_i32_0 = arith.constant 0 : i32
    %c0_i32_1 = arith.constant 0 : i32
    return %c0_i32, %c0_i32_0 : i32, i32
  }
  func.func @transform_2(%arg0: i32) -> (i32, i32) {
    %c0_i32 = arith.constant 0 : i32
    %c0_i32_0 = arith.constant 0 : i32
    %c0_i32_1 = arith.constant 0 : i32
    return %c0_i32, %c0_i32_0 : i32, i32
  }
  func.func @transform_3(%arg0: i32) -> (i32, i32) {
    %c0_i32 = arith.constant 0 : i32
    %c0_i32_0 = arith.constant 0 : i32
    %c0_i32_1 = arith.constant 0 : i32
    return %c0_i32, %c0_i32_0 : i32, i32
  }
  func.func @transform_4(%arg0: i32) -> (i32, i32, i32) {
    %c0_i32 = arith.constant 0 : i32
    %c0_i32_0 = arith.constant 0 : i32
    %c0_i32_1 = arith.constant 0 : i32
    return %arg0, %c0_i32, %c0_i32_0 : i32, i32, i32
  }
}

</mosaic_0001>

<llo_original>
// kernel: tpu_custom_call.1
$region0: #{tpu_custom_call.1}
  #allocation0 [shape = 'u32[]', space=smem, size = 0x4, offset = 0x4, fixed_abs, tag = 'smem constant byte address 0x4 - core index']
  #allocation1 [shape = 'u32[72,128]{1,0:T(1,128)}', space=vmem, size = 0x9000, scoped, tag = 'internal scratch']
  %s0 = inlined_call_operand.hbm [shape: bf16[4,128,128], index: 0, kind: input, shape index: {}]
  %s1 = inlined_call_operand.hbm [shape: bf16[128,512], index: 1, kind: input, shape index: {}]
  %s2 = inlined_call_operand.hbm [shape: bf16[128,128], index: 2, kind: input, shape index: {}]
  %s3 = inlined_call_operand.hbm [shape: bf16[256,128], index: 3, kind: input, shape index: {}]
  %s4 = inlined_call_operand.hbm [shape: f32[4,128,128], index: 4, kind: output, shape index: {}]
  %s5 = sld [smem:[#allocation0]]
  $region65: #{tpu_custom_call.1} parent=0
    _
  %s7 = ssub.s32 1, %s5
  %s8 = scalar_select 0, %s7, %s5
  $region1: #{tpu_custom_call.1} parent=0
    #allocation2 [shape = 'u8[131072]{0}', space=vmem, size = 0x20000, scoped, tag = 'input window, operand 0']
    #allocation3 [shape = 's32[2]{0}', space=sflag, size = 0x8, scoped, tag = 'scoped memory for tpu_custom_call.1']
    #allocation4 [shape = 's32[2]{0}', space=sflag, size = 0x8, scoped, tag = 'scoped memory for tpu_custom_call.1']
    #allocation5 [shape = 'u8[131072]{0}', space=vmem, size = 0x20000, scoped, tag = 'input window, operand 1, single buffered']
    #allocation6 [shape = 's32[1]{0}', space=sflag, size = 0x4, scoped, tag = 'scoped memory for tpu_custom_call.1']
    #allocation7 [shape = 'u8[32768]{0}', space=vmem, size = 0x8000, scoped, tag = 'input window, operand 2, single buffered']
    #allocation8 [shape = 'u8[65536]{0}', space=vmem, size = 0x10000, scoped, tag = 'input window, operand 3, single buffered']
    #allocation9 [shape = 's32[1]{0}', space=sflag, size = 0x4, scoped, tag = 'scoped memory for tpu_custom_call.1']
    #allocation10 [shape = 'u8[262144]{0}', space=vmem, size = 0x40000, scoped, tag = 'output window, operand 0']
    %9 = vsyncpa [#allocation3], 0
    %s10 = scalar_lea.sflag [#allocation3], 1
    %11 = vsyncpa %s10, 0
    %12 = vsyncpa [#allocation6], 0
    %13 = vsyncpa [#allocation9], 0
    %14 = vsyncpa [#allocation4], 0
    %s15 = scalar_lea.sflag [#allocation4], 1
    %16 = vsyncpa %s15, 0
    loop: start=0, step=1, limit=4
    $region2: #{tpu_custom_call.1} parent=1 // loop_pre_header
      _
    $region3: #{tpu_custom_call.1} parent=1 // loop_header
      %s18 = sphi 0, %s22
      %p19 = scmp.ge.s32.totalorder %s18, 4
      %s28 = sphi 0, %s30
      %s31 = sphi 0, %s28
      %s32 = sphi 0, %s31
      %s48 = sphi 0, %s32
      %s52 = sphi 0, %s52
      %s54 = sphi 0, %s52
      %s55 = sphi 0, %s54
      %s69 = sphi 0, %s55
      %s73 = sphi 0, %s73
      %s75 = sphi 0, %s73
      %s76 = sphi 0, %s75
      %s90 = sphi 0, %s76
      %s94 = sphi 0, %s94
      %s96 = sphi 0, %s94
      %s97 = sphi 0, %s96
      %s111 = sphi 0, %s97
      %s117 = sphi 0, %s119
      %s120 = sphi 0, %s117
      %s121 = sphi 0, %s120
      %s137 = sphi 0, %s121
    $region4: #{tpu_custom_call.1} parent=1 // loop_header_branch
      %21 = sbr.rel (%p19) target = $region8
    $region5: #{tpu_custom_call.1} parent=1 // loop_body
      %s23 = ssub.s32 %s18, 1
      %s24 = ssub.s32 %s18, 2
      %s25 = sadd.s32 %s18, 1
      %s26 = ssub.s32 %s18, %s25
      %p27 = scmp.eq.s32.totalorder %s26, 0
      %s29 = sadd.s32 %s28, 1
      %s30 = scalar_select %p27, %s28, %s29
      %p33 = pneg %p27
      %p34 = scmp.eq.s32.totalorder %s18, 1
      %p35 = por %p33, %p34
      %p36 = scmp.ne.s32.totalorder %s28, %s31
      %p37 = scmp.eq.s32.totalorder %s18, 0
      %p38 = por %p36, %p37
      %p39 = scmp.ne.s32.totalorder %s28, %s31
      %p40 = scmp.eq.s32.totalorder %s23, 1
      %p41 = por %p39, %p40
      %p42 = scmp.ne.s32.totalorder %s31, %s32
      %p43 = scmp.eq.s32.totalorder %s23, 0
      %p44 = por %p42, %p43
      %p45 = scmp.ne.s32.totalorder %s31, %s32
      %p46 = scmp.eq.s32.totalorder %s24, 1
      %p47 = por %p45, %p46
      %p49 = scmp.ne.s32.totalorder %s32, %s48
      %p50 = scmp.eq.s32.totalorder %s24, 0
      %p51 = por %p49, %p50
      %s53 = sadd.s32 %s52, 1
      %p56 = scmp.eq.s32.totalorder %s18, 1
      %p57 = scmp.ne.s32.totalorder %s52, %s54
      %p58 = scmp.eq.s32.totalorder %s18, 0
      %p59 = por %p57, %p58
      %p60 = scmp.ne.s32.totalorder %s52, %s54
      %p61 = scmp.eq.s32.totalorder %s23, 1
      %p62 = por %p60, %p61
      %p63 = scmp.ne.s32.totalorder %s54, %s55
      %p64 = scmp.eq.s32.totalorder %s23, 0
      %p65 = por %p63, %p64
      %p66 = scmp.ne.s32.totalorder %s54, %s55
      %p67 = scmp.eq.s32.totalorder %s24, 1
      %p68 = por %p66, %p67
      %p70 = scmp.ne.s32.totalorder %s55, %s69
      %p71 = scmp.eq.s32.totalorder %s24, 0
      %p72 = por %p70, %p71
      %s74 = sadd.s32 %s73, 1
      %p77 = scmp.eq.s32.totalorder %s18, 1
      %p78 = scmp.ne.s32.totalorder %s73, %s75
      %p79 = scmp.eq.s32.totalorder %s18, 0
      %p80 = por %p78, %p79
      %p81 = scmp.ne.s32.totalorder %s73, %s75
      %p82 = scmp.eq.s32.totalorder %s23, 1
      %p83 = por %p81, %p82
      %p84 = scmp.ne.s32.totalorder %s75, %s76
      %p85 = scmp.eq.s32.totalorder %s23, 0
      %p86 = por %p84, %p85
      %p87 = scmp.ne.s32.totalorder %s75, %s76
      %p88 = scmp.eq.s32.totalorder %s24, 1
      %p89 = por %p87, %p88
      %p91 = scmp.ne.s32.totalorder %s76, %s90
      %p92 = scmp.eq.s32.totalorder %s24, 0
      %p93 = por %p91, %p92
      %s95 = sadd.s32 %s94, 1
      %p98 = scmp.eq.s32.totalorder %s18, 1
      %p99 = scmp.ne.s32.totalorder %s94, %s96
      %p100 = scmp.eq.s32.totalorder %s18, 0
      %p101 = por %p99, %p100
      %p102 = scmp.ne.s32.totalorder %s94, %s96
      %p103 = scmp.eq.s32.totalorder %s23, 1
      %p104 = por %p102, %p103
      %p105 = scmp.ne.s32.totalorder %s96, %s97
      %p106 = scmp.eq.s32.totalorder %s23, 0
      %p107 = por %p105, %p106
      %p108 = scmp.ne.s32.totalorder %s96, %s97
      %p109 = scmp.eq.s32.totalorder %s24, 1
      %p110 = por %p108, %p109
      %p112 = scmp.ne.s32.totalorder %s97, %s111
      %p113 = scmp.eq.s32.totalorder %s24, 0
      %p114 = por %p112, %p113
      %s115 = ssub.s32 %s18, %s25
      %p116 = scmp.eq.s32.totalorder %s115, 0
      %s118 = sadd.s32 %s117, 1
      %s119 = scalar_select %p116, %s117, %s118
      %p122 = pneg %p116
      %p123 = scmp.eq.s32.totalorder %s18, 1
      %p124 = por %p122, %p123
      %p125 = scmp.ne.s32.totalorder %s117, %s120
      %p126 = scmp.eq.s32.totalorder %s18, 0
      %p127 = por %p125, %p126
      %p128 = scmp.ne.s32.totalorder %s117, %s120
      %p129 = scmp.eq.s32.totalorder %s23, 1
      %p130 = por %p128, %p129
      %p131 = scmp.ne.s32.totalorder %s120, %s121
      %p132 = scmp.eq.s32.totalorder %s23, 0
      %p133 = por %p131, %p132
      %p134 = scmp.ne.s32.totalorder %s120, %s121
      %p135 = scmp.eq.s32.totalorder %s24, 1
      %p136 = por %p134, %p135
      %p138 = scmp.ne.s32.totalorder %s121, %s137
      %p139 = scmp.eq.s32.totalorder %s24, 0
      %p140 = por %p138, %p139
      %p141 = scmp.le.s32.totalorder 1, %s18
      %p142 = scmp.lt.s32.totalorder %s18, 3
      %p143 = pnand %p141, %p142
      %p144 = pneg %p143
      // Predicated region
      $region9: #{tpu_custom_call.1} parent=5 // pred_check
        _
      $region10: #{tpu_custom_call.1} parent=5 // pred_check_branch
        %146 = sbr.rel (%p143) target = $region12
      $region11: #{tpu_custom_call.1} parent=5 // pred_region
        %s147 = ssub.s32 %s18, 1
        // Predicated region
        $region13: #{tpu_custom_call.1} parent=11 // pred_check
          %p148 = pneg %p65
        $region14: #{tpu_custom_call.1} parent=11 // pred_check_branch
          %150 = sbr.rel (%p148) target = $region16
        $region15: #{tpu_custom_call.1} parent=11 // pred_region
          %152 = vsyncadd [#allocation6], 0
          %s153 = sshll.u32 %s1, 4
          %s154 = int_to_ptr.hbm [resolvable:$true] %s153
          %s155 = sshll.u32 [#allocation5], 4
          %s156 = int_to_ptr.vmem [resolvable:$true] %s155
          %161 = dma.hbm_to_vmem [thread:$0]  %s154, 4096, %s156, [#allocation6], 256, 256, 16
        $region16: #{tpu_custom_call.1} parent=11 // pred_fallthru
          _
        // Predicated region
        $region17: #{tpu_custom_call.1} parent=11 // pred_check
          %p162 = pneg %p86
        $region18: #{tpu_custom_call.1} parent=11 // pred_check_branch
          %164 = sbr.rel (%p162) target = $region20
        $region19: #{tpu_custom_call.1} parent=11 // pred_region
          %166 = vsyncadd [#allocation6], 0
          %s167 = sshll.u32 %s2, 4
          %s168 = int_to_ptr.hbm [resolvable:$true] %s167
          %s169 = sshll.u32 [#allocation7], 4
          %s170 = int_to_ptr.vmem [resolvable:$true] %s169
          %175 = dma.hbm_to_vmem [thread:$0]  %s168, 1024, %s170, [#allocation6], 64, 64, 4
        $region20: #{tpu_custom_call.1} parent=11 // pred_fallthru
          _
        // Predicated region
        $region21: #{tpu_custom_call.1} parent=11 // pred_check
          %p176 = pneg %p107
        $region22: #{tpu_custom_call.1} parent=11 // pred_check_branch
          %178 = sbr.rel (%p176) target = $region24
        $region23: #{tpu_custom_call.1} parent=11 // pred_region
          %180 = vsyncadd [#allocation9], 0
          %s181 = sshll.u32 %s3, 4
          %s182 = int_to_ptr.hbm [resolvable:$true] %s181
          %s183 = sshll.u32 [#allocation8], 4
          %s184 = int_to_ptr.vmem [resolvable:$true] %s183
          %189 = dma.hbm_to_vmem [thread:$0]  %s182, 2048, %s184, [#allocation9], 64, 64, 4
        $region24: #{tpu_custom_call.1} parent=11 // pred_fallthru
          _
      $region12: #{tpu_custom_call.1} parent=5 // pred_fallthru
        _
      %p190 = scmp.lt.s32.totalorder %s18, 2
      // Predicated region
      $region25: #{tpu_custom_call.1} parent=5 // pred_check
        %p191 = pneg %p190
      $region26: #{tpu_custom_call.1} parent=5 // pred_check_branch
        %193 = sbr.rel (%p191) target = $region28
      $region27: #{tpu_custom_call.1} parent=5 // pred_region
        // Predicated region
        $region29: #{tpu_custom_call.1} parent=27 // pred_check
          %p194 = pneg %p38
        $region30: #{tpu_custom_call.1} parent=27 // pred_check_branch
          %196 = sbr.rel (%p194) target = $region32
        $region31: #{tpu_custom_call.1} parent=27 // pred_region
          %s197 = sand.u32 %s28, 1
          %s198 = scalar_lea.sflag [#allocation3], %s197
          %s199 = sand.u32 %s28, 1
          %s200 = smul.addr %s199, 128
          %s201 = scalar_lea.vmem [#allocation2], %s200
          %s202 = smul.u32 2, %s18
          %204 = vsyncadd %s198, 0
          %s205 = smul.addr %s202, 16
          %s206 = smul.addr %s205, 4
          %s207 = scalar_lea.hbm %s0, %s206
          %s208 = sshll.u32 %s207, 4
          %s209 = int_to_ptr.hbm [resolvable:$true] %s208
          %s210 = sshll.u32 %s201, 4
          %s211 = int_to_ptr.vmem [resolvable:$true] %s210
          %216 = dma.hbm_to_vmem [thread:$0]  %s209, 2048, %s211, %s198, 64, 64, 4
        $region32: #{tpu_custom_call.1} parent=27 // pred_fallthru
          _
      $region28: #{tpu_custom_call.1} parent=5 // pred_fallthru
        _
      %p217 = scmp.le.s32.totalorder 1, %s18
      %p218 = scmp.lt.s32.totalorder %s18, 3
      %p219 = pnand %p217, %p218
      %p220 = pneg %p219
      // Predicated region
      $region33: #{tpu_custom_call.1} parent=5 // pred_check
        _
      $region34: #{tpu_custom_call.1} parent=5 // pred_check_branch
        %222 = sbr.rel (%p219) target = $region36
      $region35: #{tpu_custom_call.1} parent=5 // pred_region
        %s223 = ssub.s32 %s18, 1
        %s224 = sand.u32 %s31, 1
        %s225 = scalar_lea.sflag [#allocation3], %s224
        %s226 = sand.u32 %s31, 1
        %s227 = smul.addr %s226, 128
        %s228 = scalar_lea.vmem [#allocation2], %s227
        // Predicated region
        $region37: #{tpu_custom_call.1} parent=35 // pred_check
          %p229 = pneg %p44
        $region38: #{tpu_custom_call.1} parent=35 // pred_check_branch
          %231 = sbr.rel (%p229) target = $region40
        $region39: #{tpu_custom_call.1} parent=35 // pred_region
          %233 = dma.done %s225, 2048
        $region40: #{tpu_custom_call.1} parent=35 // pred_fallthru
          _
        // Predicated region
        $region41: #{tpu_custom_call.1} parent=35 // pred_check
          %p234 = pneg %p65
        $region42: #{tpu_custom_call.1} parent=35 // pred_check_branch
          %236 = sbr.rel (%p234) target = $region44
        $region43: #{tpu_custom_call.1} parent=35 // pred_region
          %238 = dma.done [#allocation6], 4096
        $region44: #{tpu_custom_call.1} parent=35 // pred_fallthru
          _
        // Predicated region
        $region45: #{tpu_custom_call.1} parent=35 // pred_check
          %p239 = pneg %p86
        $region46: #{tpu_custom_call.1} parent=35 // pred_check_branch
          %241 = sbr.rel (%p239) target = $region48
        $region47: #{tpu_custom_call.1} parent=35 // pred_region
          %243 = dma.done [#allocation6], 1024
        $region48: #{tpu_custom_call.1} parent=35 // pred_fallthru
          _
        // Predicated region
        $region49: #{tpu_custom_call.1} parent=35 // pred_check
          %p244 = pneg %p107
        $region50: #{tpu_custom_call.1} parent=35 // pred_check_branch
          %246 = sbr.rel (%p244) target = $region52
        $region51: #{tpu_custom_call.1} parent=35 // pred_region
          %248 = dma.done [#allocation9], 2048
        $region52: #{tpu_custom_call.1} parent=35 // pred_fallthru
          _
        %s249 = sand.u32 %s31, 1
        %s250 = scalar_lea.sflag [#allocation3], %s249
        %s251 = sand.u32 %s31, 1
        %s252 = smul.addr %s251, 128
        %s253 = scalar_lea.vmem [#allocation2], %s252
        %p254 = pneg %p44
        %p255 = pneg %p41
        %p256 = pneg %p65
        %p257 = pneg %p62
        %p258 = pneg %p86
        %p259 = pneg %p83
        %p260 = pneg %p107
        %p261 = pneg %p104
        %p262 = pneg %p133
        %p263 = pneg %p130
        %s264 = sand.u32 %s120, 1
        %s265 = scalar_lea.sflag [#allocation4], %s264
        %s266 = sand.u32 %s120, 1
        %s267 = smul.addr %s266, 256
        %s268 = scalar_lea.vmem [#allocation10], %s267
        %s269 = smul.u32 2, %s23
        %s270 = smul.u32 2, %s23
        %v271 = vld [vmem:[%s228] sm:$0xf]
        %v272 = vld [vmem:[%s228 + $0x4] sm:$0xf]
        %v273 = vld [vmem:[%s228 + $0x8] sm:$0xf]
        %v274 = vld [vmem:[%s228 + $0xc] sm:$0xf]
        %v275 = vld [vmem:[%s228 + $0x10] sm:$0xf]
        %v276 = vld [vmem:[%s228 + $0x14] sm:$0xf]
        %v277 = vld [vmem:[%s228 + $0x18] sm:$0xf]
        %v278 = vld [vmem:[%s228 + $0x1c] sm:$0xf]
        %v279 = vld [vmem:[%s228 + $0x20] sm:$0xf]
        %v280 = vld [vmem:[%s228 + $0x24] sm:$0xf]
        %v281 = vld [vmem:[%s228 + $0x28] sm:$0xf]
        %v282 = vld [vmem:[%s228 + $0x2c] sm:$0xf]
        %v283 = vld [vmem:[%s228 + $0x30] sm:$0xf]
        %v284 = vld [vmem:[%s228 + $0x34] sm:$0xf]
        %v285 = vld [vmem:[%s228 + $0x38] sm:$0xf]
        %v286 = vld [vmem:[%s228 + $0x3c] sm:$0xf]
        %v287 = vld [vmem:[%s228 + $0x40] sm:$0xf]
        %v288 = vld [vmem:[%s228 + $0x44] sm:$0xf]
        %v289 = vld [vmem:[%s228 + $0x48] sm:$0xf]
        %v290 = vld [vmem:[%s228 + $0x4c] sm:$0xf]
        %v291 = vld [vmem:[%s228 + $0x50] sm:$0xf]
        %v292 = vld [vmem:[%s228 + $0x54] sm:$0xf]
        %v293 = vld [vmem:[%s228 + $0x58] sm:$0xf]
        %v294 = vld [vmem:[%s228 + $0x5c] sm:$0xf]
        %v295 = vld [vmem:[%s228 + $0x60] sm:$0xf]
        %v296 = vld [vmem:[%s228 + $0x64] sm:$0xf]
        %v297 = vld [vmem:[%s228 + $0x68] sm:$0xf]
        %v298 = vld [vmem:[%s228 + $0x6c] sm:$0xf]
        %v299 = vld [vmem:[%s228 + $0x70] sm:$0xf]
        %v300 = vld [vmem:[%s228 + $0x74] sm:$0xf]
        %v301 = vld [vmem:[%s228 + $0x78] sm:$0xf]
        %v302 = vld [vmem:[%s228 + $0x7c] sm:$0xf]
        %v303 = vld [vmem:[#allocation5] sm:$0xf]
        %v304 = vld [vmem:[#allocation5 + $0x10] sm:$0xf]
        %v305 = vld [vmem:[#allocation5 + $0x20] sm:$0xf]
        %v306 = vld [vmem:[#allocation5 + $0x30] sm:$0xf]
        %v307 = vld [vmem:[#allocation5 + $0x40] sm:$0xf]
        %v308 = vld [vmem:[#allocation5 + $0x50] sm:$0xf]
        %v309 = vld [vmem:[#allocation5 + $0x60] sm:$0xf]
        %v310 = vld [vmem:[#allocation5 + $0x70] sm:$0xf]
        %v311 = vld [vmem:[#allocation5 + $0x80] sm:$0xf]
        %v312 = vld [vmem:[#allocation5 + $0x90] sm:$0xf]
        %v313 = vld [vmem:[#allocation5 + $0xa0] sm:$0xf]
        %v314 = vld [vmem:[#allocation5 + $0xb0] sm:$0xf]
        %v315 = vld [vmem:[#allocation5 + $0xc0] sm:$0xf]
        %v316 = vld [vmem:[#allocation5 + $0xd0] sm:$0xf]
        %v317 = vld [vmem:[#allocation5 + $0xe0] sm:$0xf]
        %v318 = vld [vmem:[#allocation5 + $0xf0] sm:$0xf]
        %v351 = vunpack.c.l.b16 %v271
        %v352 = vunpack.c.l.b16 %v272
        %v353 = vunpack.c.l.b16 %v273
        %v354 = vunpack.c.l.b16 %v274
        %v355 = vunpack.c.l.b16 %v275
        %v356 = vunpack.c.l.b16 %v276
        %v357 = vunpack.c.l.b16 %v277
        %v358 = vunpack.c.l.b16 %v278
        %v359 = vunpack.c.l.b16 %v279
        %v360 = vunpack.c.l.b16 %v280
        %v361 = vunpack.c.l.b16 %v281
        %v362 = vunpack.c.l.b16 %v282
        %v363 = vunpack.c.l.b16 %v283
        %v364 = vunpack.c.l.b16 %v284
        %v365 = vunpack.c.l.b16 %v285
        %v366 = vunpack.c.l.b16 %v286
        %v367 = vunpack.c.l.b16 %v287
        %v368 = vunpack.c.l.b16 %v288
        %v369 = vunpack.c.l.b16 %v289
        %v370 = vunpack.c.l.b16 %v290
        %v371 = vunpack.c.l.b16 %v291
        %v372 = vunpack.c.l.b16 %v292
        %v373 = vunpack.c.l.b16 %v293
        %v374 = vunpack.c.l.b16 %v294
        %v375 = vunpack.c.l.b16 %v295
        %v376 = vunpack.c.l.b16 %v296
        %v377 = vunpack.c.l.b16 %v297
        %v378 = vunpack.c.l.b16 %v298
        %v379 = vunpack.c.l.b16 %v299
        %v380 = vunpack.c.l.b16 %v300
        %v381 = vunpack.c.l.b16 %v301
        %v382 = vunpack.c.l.b16 %v302
        %v383 = vpack.c.b16 %v352, %v351
        %v384 = vpack.c.b16 %v354, %v353
        %v385 = vpack.c.b16 %v356, %v355
        %v386 = vpack.c.b16 %v358, %v357
        %v387 = vpack.c.b16 %v360, %v359
        %v388 = vpack.c.b16 %v362, %v361
        %v389 = vpack.c.b16 %v364, %v363
        %v390 = vpack.c.b16 %v366, %v365
        %v391 = vpack.c.b16 %v368, %v367
        %v392 = vpack.c.b16 %v370, %v369
        %v393 = vpack.c.b16 %v372, %v371
        %v394 = vpack.c.b16 %v374, %v373
        %v395 = vpack.c.b16 %v376, %v375
        %v396 = vpack.c.b16 %v378, %v377
        %v397 = vpack.c.b16 %v380, %v379
        %v398 = vpack.c.b16 %v382, %v381
        %v431 = vunpack.c.l.b16 %v303
        %v432 = vunpack.c.l.b16 %v304
        %v433 = vunpack.c.l.b16 %v305
        %v434 = vunpack.c.l.b16 %v306
        %v435 = vunpack.c.l.b16 %v307
        %v436 = vunpack.c.l.b16 %v308
        %v437 = vunpack.c.l.b16 %v309
        %v438 = vunpack.c.l.b16 %v310
        %v439 = vunpack.c.l.b16 %v311
        %v440 = vunpack.c.l.b16 %v312
        %v441 = vunpack.c.l.b16 %v313
        %v442 = vunpack.c.l.b16 %v314
        %v443 = vunpack.c.l.b16 %v315
        %v444 = vunpack.c.l.b16 %v316
        %v445 = vunpack.c.l.b16 %v317
        %v446 = vunpack.c.l.b16 %v318
        %v447 = vpack.c.b16 %v432, %v431
        %v448 = vpack.c.b16 %v434, %v433
        %v449 = vpack.c.b16 %v436, %v435
        %v450 = vpack.c.b16 %v438, %v437
        %v451 = vpack.c.b16 %v440, %v439
        %v452 = vpack.c.b16 %v442, %v441
        %v453 = vpack.c.b16 %v444, %v443
        %v454 = vpack.c.b16 %v446, %v445
        %463 = vmatpush.bf16.msra.mxu0 %v454
        %464 = vmatpush.bf16.msra.mxu0 %v453
        %465 = vmatpush.bf16.msra.mxu0 %v452
        %466 = vmatpush.bf16.msra.mxu0 %v451
        %467 = vmatpush.bf16.msra.mxu0 %v450
        %468 = vmatpush.bf16.msra.mxu0 %v449
        %469 = vmatpush.bf16.msra.mxu0 %v448
        %470 = vmatpush.bf16.msra.mxu0 %v447
        %471 = vmatmul.bf16.gmra.mxu0 %v383
        %v472 = vpop.f32.mrf.mxu0
        %v473 = vadd.f32 0.0, %v472
        %v474 = vpop.f32.mrf.mxu0
        %v475 = vadd.f32 0.0, %v474
        %476 = vmatmul.bf16.gmra.mxu0 %v384
        %v477 = vpop.f32.mrf.mxu0
        %v478 = vadd.f32 0.0, %v477
        %v479 = vpop.f32.mrf.mxu0
        %v480 = vadd.f32 0.0, %v479
        %481 = vmatmul.bf16.gmra.mxu0 %v385
        %v482 = vpop.f32.mrf.mxu0
        %v483 = vadd.f32 0.0, %v482
        %v484 = vpop.f32.mrf.mxu0
        %v485 = vadd.f32 0.0, %v484
        %486 = vmatmul.bf16.gmra.mxu0 %v386
        %v487 = vpop.f32.mrf.mxu0
        %v488 = vadd.f32 0.0, %v487
        %v489 = vpop.f32.mrf.mxu0
        %v490 = vadd.f32 0.0, %v489
        %491 = vmatmul.bf16.gmra.mxu0 %v387
        %v492 = vpop.f32.mrf.mxu0
        %v493 = vadd.f32 0.0, %v492
        %v494 = vpop.f32.mrf.mxu0
        %v495 = vadd.f32 0.0, %v494
        %496 = vmatmul.bf16.gmra.mxu0 %v388
        %v497 = vpop.f32.mrf.mxu0
        %v498 = vadd.f32 0.0, %v497
        %v499 = vpop.f32.mrf.mxu0
        %v500 = vadd.f32 0.0, %v499
        %501 = vmatmul.bf16.gmra.mxu0 %v389
        %v502 = vpop.f32.mrf.mxu0
        %v503 = vadd.f32 0.0, %v502
        %v504 = vpop.f32.mrf.mxu0
        %v505 = vadd.f32 0.0, %v504
        %506 = vmatmul.bf16.gmra.mxu0 %v390
        %v507 = vpop.f32.mrf.mxu0
        %v508 = vadd.f32 0.0, %v507
        %v509 = vpop.f32.mrf.mxu0
        %v510 = vadd.f32 0.0, %v509
        %511 = vmatmul.bf16.gmra.mxu0 %v391
        %v512 = vpop.f32.mrf.mxu0
        %v513 = vadd.f32 0.0, %v512
        %v514 = vpop.f32.mrf.mxu0
        %v515 = vadd.f32 0.0, %v514
        %516 = vmatmul.bf16.gmra.mxu0 %v392
        %v517 = vpop.f32.mrf.mxu0
        %v518 = vadd.f32 0.0, %v517
        %v519 = vpop.f32.mrf.mxu0
        %v520 = vadd.f32 0.0, %v519
        %521 = vmatmul.bf16.gmra.mxu0 %v393
        %v522 = vpop.f32.mrf.mxu0
        %v523 = vadd.f32 0.0, %v522
        %v524 = vpop.f32.mrf.mxu0
        %v525 = vadd.f32 0.0, %v524
        %526 = vmatmul.bf16.gmra.mxu0 %v394
        %v527 = vpop.f32.mrf.mxu0
        %v528 = vadd.f32 0.0, %v527
        %v529 = vpop.f32.mrf.mxu0
        %v530 = vadd.f32 0.0, %v529
        %531 = vmatmul.bf16.gmra.mxu0 %v395
        %v532 = vpop.f32.mrf.mxu0
        %v533 = vadd.f32 0.0, %v532
        %v534 = vpop.f32.mrf.mxu0
        %v535 = vadd.f32 0.0, %v534
        %536 = vmatmul.bf16.gmra.mxu0 %v396
        %v537 = vpop.f32.mrf.mxu0
        %v538 = vadd.f32 0.0, %v537
        %v539 = vpop.f32.mrf.mxu0
        %v540 = vadd.f32 0.0, %v539
        %541 = vmatmul.bf16.gmra.mxu0 %v397
        %v542 = vpop.f32.mrf.mxu0
        %v543 = vadd.f32 0.0, %v542
        %v544 = vpop.f32.mrf.mxu0
        %v545 = vadd.f32 0.0, %v544
        %546 = vmatmul.bf16.gmra.mxu0 %v398
        %v547 = vpop.f32.mrf.mxu0
        %v548 = vadd.f32 0.0, %v547
        %v549 = vpop.f32.mrf.mxu0
        %v550 = vadd.f32 0.0, %v549
        %551 = vdwg.mxu0
        %v552 = vld [vmem:[#allocation5 + $0x4] sm:$0xf]
        %v553 = vld [vmem:[#allocation5 + $0x14] sm:$0xf]
        %v554 = vld [vmem:[#allocation5 + $0x24] sm:$0xf]
        %v555 = vld [vmem:[#allocation5 + $0x34] sm:$0xf]
        %v556 = vld [vmem:[#allocation5 + $0x44] sm:$0xf]
        %v557 = vld [vmem:[#allocation5 + $0x54] sm:$0xf]
        %v558 = vld [vmem:[#allocation5 + $0x64] sm:$0xf]
        %v559 = vld [vmem:[#allocation5 + $0x74] sm:$0xf]
        %v560 = vld [vmem:[#allocation5 + $0x84] sm:$0xf]
        %v561 = vld [vmem:[#allocation5 + $0x94] sm:$0xf]
        %v562 = vld [vmem:[#allocation5 + $0xa4] sm:$0xf]
        %v563 = vld [vmem:[#allocation5 + $0xb4] sm:$0xf]
        %v564 = vld [vmem:[#allocation5 + $0xc4] sm:$0xf]
        %v565 = vld [vmem:[#allocation5 + $0xd4] sm:$0xf]
        %v566 = vld [vmem:[#allocation5 + $0xe4] sm:$0xf]
        %v567 = vld [vmem:[#allocation5 + $0xf4] sm:$0xf]
        %v584 = vunpack.c.l.b16 %v552
        %v585 = vunpack.c.l.b16 %v553
        %v586 = vunpack.c.l.b16 %v554
        %v587 = vunpack.c.l.b16 %v555
        %v588 = vunpack.c.l.b16 %v556
        %v589 = vunpack.c.l.b16 %v557
        %v590 = vunpack.c.l.b16 %v558
        %v591 = vunpack.c.l.b16 %v559
        %v592 = vunpack.c.l.b16 %v560
        %v593 = vunpack.c.l.b16 %v561
        %v594 = vunpack.c.l.b16 %v562
        %v595 = vunpack.c.l.b16 %v563
        %v596 = vunpack.c.l.b16 %v564
        %v597 = vunpack.c.l.b16 %v565
        %v598 = vunpack.c.l.b16 %v566
        %v599 = vunpack.c.l.b16 %v567
        %v600 = vpack.c.b16 %v585, %v584
        %v601 = vpack.c.b16 %v587, %v586
        %v602 = vpack.c.b16 %v589, %v588
        %v603 = vpack.c.b16 %v591, %v590
        %v604 = vpack.c.b16 %v593, %v592
        %v605 = vpack.c.b16 %v595, %v594
        %v606 = vpack.c.b16 %v597, %v596
        %v607 = vpack.c.b16 %v599, %v598
        %616 = vmatpush.bf16.msra.mxu0 %v607
        %617 = vmatpush.bf16.msra.mxu0 %v606
        %618 = vmatpush.bf16.msra.mxu0 %v605
        %619 = vmatpush.bf16.msra.mxu0 %v604
        %620 = vmatpush.bf16.msra.mxu0 %v603
        %621 = vmatpush.bf16.msra.mxu0 %v602
        %622 = vmatpush.bf16.msra.mxu0 %v601
        %623 = vmatpush.bf16.msra.mxu0 %v600
        %624 = vmatmul.bf16.gmra.mxu0 %v383
        %v625 = vpop.f32.mrf.mxu0
        %v626 = vadd.f32 0.0, %v625
        %v627 = vpop.f32.mrf.mxu0
        %v628 = vadd.f32 0.0, %v627
        %629 = vmatmul.bf16.gmra.mxu0 %v384
        %v630 = vpop.f32.mrf.mxu0
        %v631 = vadd.f32 0.0, %v630
        %v632 = vpop.f32.mrf.mxu0
        %v633 = vadd.f32 0.0, %v632
        %634 = vmatmul.bf16.gmra.mxu0 %v385
        %v635 = vpop.f32.mrf.mxu0
        %v636 = vadd.f32 0.0, %v635
        %v637 = vpop.f32.mrf.mxu0
        %v638 = vadd.f32 0.0, %v637
        %639 = vmatmul.bf16.gmra.mxu0 %v386
        %v640 = vpop.f32.mrf.mxu0
        %v641 = vadd.f32 0.0, %v640
        %v642 = vpop.f32.mrf.mxu0
        %v643 = vadd.f32 0.0, %v642
        %644 = vmatmul.bf16.gmra.mxu0 %v387
        %v645 = vpop.f32.mrf.mxu0
        %v646 = vadd.f32 0.0, %v645
        %v647 = vpop.f32.mrf.mxu0
        %v648 = vadd.f32 0.0, %v647
        %649 = vmatmul.bf16.gmra.mxu0 %v388
        %v650 = vpop.f32.mrf.mxu0
        %v651 = vadd.f32 0.0, %v650
        %v652 = vpop.f32.mrf.mxu0
        %v653 = vadd.f32 0.0, %v652
        %654 = vmatmul.bf16.gmra.mxu0 %v389
        %v655 = vpop.f32.mrf.mxu0
        %v656 = vadd.f32 0.0, %v655
        %v657 = vpop.f32.mrf.mxu0
        %v658 = vadd.f32 0.0, %v657
        %659 = vmatmul.bf16.gmra.mxu0 %v390
        %v660 = vpop.f32.mrf.mxu0
        %v661 = vadd.f32 0.0, %v660
        %v662 = vpop.f32.mrf.mxu0
        %v663 = vadd.f32 0.0, %v662
        %664 = vmatmul.bf16.gmra.mxu0 %v391
        %v665 = vpop.f32.mrf.mxu0
        %v666 = vadd.f32 0.0, %v665
        %v667 = vpop.f32.mrf.mxu0
        %v668 = vadd.f32 0.0, %v667
        %669 = vmatmul.bf16.gmra.mxu0 %v392
        %v670 = vpop.f32.mrf.mxu0
        %v671 = vadd.f32 0.0, %v670
        %v672 = vpop.f32.mrf.mxu0
        %v673 = vadd.f32 0.0, %v672
        %674 = vmatmul.bf16.gmra.mxu0 %v393
        %v675 = vpop.f32.mrf.mxu0
        %v676 = vadd.f32 0.0, %v675
        %v677 = vpop.f32.mrf.mxu0
        %v678 = vadd.f32 0.0, %v677
        %679 = vmatmul.bf16.gmra.mxu0 %v394
        %v680 = vpop.f32.mrf.mxu0
        %v681 = vadd.f32 0.0, %v680
        %v682 = vpop.f32.mrf.mxu0
        %v683 = vadd.f32 0.0, %v682
        %684 = vmatmul.bf16.gmra.mxu0 %v395
        %v685 = vpop.f32.mrf.mxu0
        %v686 = vadd.f32 0.0, %v685
        %v687 = vpop.f32.mrf.mxu0
        %v688 = vadd.f32 0.0, %v687
        %689 = vmatmul.bf16.gmra.mxu0 %v396
        %v690 = vpop.f32.mrf.mxu0
        %v691 = vadd.f32 0.0, %v690
        %v692 = vpop.f32.mrf.mxu0
        %v693 = vadd.f32 0.0, %v692
        %694 = vmatmul.bf16.gmra.mxu0 %v397
        %v695 = vpop.f32.mrf.mxu0
        %v696 = vadd.f32 0.0, %v695
        %v697 = vpop.f32.mrf.mxu0
        %v698 = vadd.f32 0.0, %v697
        %699 = vmatmul.bf16.gmra.mxu0 %v398
        %v700 = vpop.f32.mrf.mxu0
        %v701 = vadd.f32 0.0, %v700
        %v702 = vpop.f32.mrf.mxu0
        %v703 = vadd.f32 0.0, %v702
        %704 = vdwg.mxu0
        %v705 = vpack.c.bf16 %v473, %v473
        %v706 = vpack.c.bf16 %v475, %v475
        %v707 = vpack.c.bf16 %v478, %v478
        %v708 = vpack.c.bf16 %v480, %v480
        %v709 = vpack.c.bf16 %v483, %v483
        %v710 = vpack.c.bf16 %v485, %v485
        %v711 = vpack.c.bf16 %v488, %v488
        %v712 = vpack.c.bf16 %v490, %v490
        %v713 = vpack.c.bf16 %v493, %v493
        %v714 = vpack.c.bf16 %v495, %v495
        %v715 = vpack.c.bf16 %v498, %v498
        %v716 = vpack.c.bf16 %v500, %v500
        %v717 = vpack.c.bf16 %v503, %v503
        %v718 = vpack.c.bf16 %v505, %v505
        %v719 = vpack.c.bf16 %v508, %v508
        %v720 = vpack.c.bf16 %v510, %v510
        %v721 = vpack.c.bf16 %v513, %v513
        %v722 = vpack.c.bf16 %v515, %v515
        %v723 = vpack.c.bf16 %v518, %v518
        %v724 = vpack.c.bf16 %v520, %v520
        %v725 = vpack.c.bf16 %v523, %v523
        %v726 = vpack.c.bf16 %v525, %v525
        %v727 = vpack.c.bf16 %v528, %v528
        %v728 = vpack.c.bf16 %v530, %v530
        %v729 = vpack.c.bf16 %v533, %v533
        %v730 = vpack.c.bf16 %v535, %v535
        %v731 = vpack.c.bf16 %v538, %v538
        %v732 = vpack.c.bf16 %v540, %v540
        %v733 = vpack.c.bf16 %v543, %v543
        %v734 = vpack.c.bf16 %v545, %v545
        %v735 = vpack.c.bf16 %v548, %v548
        %v736 = vpack.c.bf16 %v550, %v550
        %v737 = vpack.c.bf16 %v626, %v626
        %v738 = vpack.c.bf16 %v628, %v628
        %v739 = vpack.c.bf16 %v631, %v631
        %v740 = vpack.c.bf16 %v633, %v633
        %v741 = vpack.c.bf16 %v636, %v636
        %v742 = vpack.c.bf16 %v638, %v638
        %v743 = vpack.c.bf16 %v641, %v641
        %v744 = vpack.c.bf16 %v643, %v643
        %v745 = vpack.c.bf16 %v646, %v646
        %v746 = vpack.c.bf16 %v648, %v648
        %v747 = vpack.c.bf16 %v651, %v651
        %v748 = vpack.c.bf16 %v653, %v653
        %v749 = vpack.c.bf16 %v656, %v656
        %v750 = vpack.c.bf16 %v658, %v658
        %v751 = vpack.c.bf16 %v661, %v661
        %v752 = vpack.c.bf16 %v663, %v663
        %v753 = vpack.c.bf16 %v666, %v666
        %v754 = vpack.c.bf16 %v668, %v668
        %v755 = vpack.c.bf16 %v671, %v671
        %v756 = vpack.c.bf16 %v673, %v673
        %v757 = vpack.c.bf16 %v676, %v676
        %v758 = vpack.c.bf16 %v678, %v678
        %v759 = vpack.c.bf16 %v681, %v681
        %v760 = vpack.c.bf16 %v683, %v683
        %v761 = vpack.c.bf16 %v686, %v686
        %v762 = vpack.c.bf16 %v688, %v688
        %v763 = vpack.c.bf16 %v691, %v691
        %v764 = vpack.c.bf16 %v693, %v693
        %v765 = vpack.c.bf16 %v696, %v696
        %v766 = vpack.c.bf16 %v698, %v698
        %v767 = vpack.c.bf16 %v701, %v701
        %v768 = vpack.c.bf16 %v703, %v703
        %v785 = vunpack.c.l.b16 %v705
        %v786 = vunpack.c.l.b16 %v706
        %v787 = vunpack.c.l.b16 %v707
        %v788 = vunpack.c.l.b16 %v708
        %v789 = vunpack.c.l.b16 %v709
        %v790 = vunpack.c.l.b16 %v710
        %v791 = vunpack.c.l.b16 %v711
        %v792 = vunpack.c.l.b16 %v712
        %v793 = vunpack.c.l.b16 %v713
        %v794 = vunpack.c.l.b16 %v714
        %v795 = vunpack.c.l.b16 %v715
        %v796 = vunpack.c.l.b16 %v716
        %v797 = vunpack.c.l.b16 %v717
        %v798 = vunpack.c.l.b16 %v718
        %v799 = vunpack.c.l.b16 %v719
        %v800 = vunpack.c.l.b16 %v720
        %v801 = vpack.c.b16 %v786, %v785
        %v802 = vpack.c.b16 %v788, %v787
        %v803 = vpack.c.b16 %v790, %v789
        %v804 = vpack.c.b16 %v792, %v791
        %v805 = vpack.c.b16 %v794, %v793
        %v806 = vpack.c.b16 %v796, %v795
        %v807 = vpack.c.b16 %v798, %v797
        %v808 = vpack.c.b16 %v800, %v799
        %v833 = vunpack.c.l.b16 %v737
        %v834 = vunpack.c.l.b16 %v738
        %v835 = vunpack.c.l.b16 %v739
        %v836 = vunpack.c.l.b16 %v740
        %v837 = vunpack.c.l.b16 %v741
        %v838 = vunpack.c.l.b16 %v742
        %v839 = vunpack.c.l.b16 %v743
        %v840 = vunpack.c.l.b16 %v744
        %v841 = vunpack.c.l.b16 %v745
        %v842 = vunpack.c.l.b16 %v746
        %v843 = vunpack.c.l.b16 %v747
        %v844 = vunpack.c.l.b16 %v748
        %v845 = vunpack.c.l.b16 %v749
        %v846 = vunpack.c.l.b16 %v750
        %v847 = vunpack.c.l.b16 %v751
        %v848 = vunpack.c.l.b16 %v752
        %v849 = vpack.c.b16 %v834, %v833
        %v850 = vpack.c.b16 %v836, %v835
        %v851 = vpack.c.b16 %v838, %v837
        %v852 = vpack.c.b16 %v840, %v839
        %v853 = vpack.c.b16 %v842, %v841
        %v854 = vpack.c.b16 %v844, %v843
        %v855 = vpack.c.b16 %v846, %v845
        %v856 = vpack.c.b16 %v848, %v847
        %865 = vmatpush.bf16.xpose.msra.mxu0 %v856
        %866 = vmatpush.bf16.xpose.msra.mxu0 %v855
        %867 = vmatpush.bf16.xpose.msra.mxu0 %v854
        %868 = vmatpush.bf16.xpose.msra.mxu0 %v853
        %869 = vmatpush.bf16.xpose.msra.mxu0 %v852
        %870 = vmatpush.bf16.xpose.msra.mxu0 %v851
        %871 = vmatpush.bf16.xpose.msra.mxu0 %v850
        %872 = vmatpush.bf16.xpose.msra.mxu0 %v849
        %873 = vmatmul.bf16.gmra.mxu0 %v801
        %v874 = vpop.f32.mrf.mxu0
        %v875 = vadd.f32 0.0, %v874
        %v876 = vpop.f32.mrf.mxu0
        %v877 = vadd.f32 0.0, %v876
        %878 = vmatmul.bf16.gmra.mxu0 %v802
        %v879 = vpop.f32.mrf.mxu0
        %v880 = vadd.f32 0.0, %v879
        %v881 = vpop.f32.mrf.mxu0
        %v882 = vadd.f32 0.0, %v881
        %883 = vmatmul.bf16.gmra.mxu0 %v803
        %v884 = vpop.f32.mrf.mxu0
        %v885 = vadd.f32 0.0, %v884
        %v886 = vpop.f32.mrf.mxu0
        %v887 = vadd.f32 0.0, %v886
        %888 = vmatmul.bf16.gmra.mxu0 %v804
        %v889 = vpop.f32.mrf.mxu0
        %v890 = vadd.f32 0.0, %v889
        %v891 = vpop.f32.mrf.mxu0
        %v892 = vadd.f32 0.0, %v891
        %893 = vmatmul.bf16.gmra.mxu0 %v805
        %v894 = vpop.f32.mrf.mxu0
        %v895 = vadd.f32 0.0, %v894
        %v896 = vpop.f32.mrf.mxu0
        %v897 = vadd.f32 0.0, %v896
        %898 = vmatmul.bf16.gmra.mxu0 %v806
        %v899 = vpop.f32.mrf.mxu0
        %v900 = vadd.f32 0.0, %v899
        %v901 = vpop.f32.mrf.mxu0
        %v902 = vadd.f32 0.0, %v901
        %903 = vmatmul.bf16.gmra.mxu0 %v807
        %v904 = vpop.f32.mrf.mxu0
        %v905 = vadd.f32 0.0, %v904
        %v906 = vpop.f32.mrf.mxu0
        %v907 = vadd.f32 0.0, %v906
        %908 = vmatmul.bf16.gmra.mxu0 %v808
        %v909 = vpop.f32.mrf.mxu0
        %v910 = vadd.f32 0.0, %v909
        %v911 = vpop.f32.mrf.mxu0
        %v912 = vadd.f32 0.0, %v911
        %913 = vdwg.mxu0
        %v930 = vunpack.c.l.b16 %v721
        %v931 = vunpack.c.l.b16 %v722
        %v932 = vunpack.c.l.b16 %v723
        %v933 = vunpack.c.l.b16 %v724
        %v934 = vunpack.c.l.b16 %v725
        %v935 = vunpack.c.l.b16 %v726
        %v936 = vunpack.c.l.b16 %v727
        %v937 = vunpack.c.l.b16 %v728
        %v938 = vunpack.c.l.b16 %v729
        %v939 = vunpack.c.l.b16 %v730
        %v940 = vunpack.c.l.b16 %v731
        %v941 = vunpack.c.l.b16 %v732
        %v942 = vunpack.c.l.b16 %v733
        %v943 = vunpack.c.l.b16 %v734
        %v944 = vunpack.c.l.b16 %v735
        %v945 = vunpack.c.l.b16 %v736
        %v946 = vpack.c.b16 %v931, %v930
        %v947 = vpack.c.b16 %v933, %v932
        %v948 = vpack.c.b16 %v935, %v934
        %v949 = vpack.c.b16 %v937, %v936
        %v950 = vpack.c.b16 %v939, %v938
        %v951 = vpack.c.b16 %v941, %v940
        %v952 = vpack.c.b16 %v943, %v942
        %v953 = vpack.c.b16 %v945, %v944
        %v978 = vunpack.c.l.b16 %v753
        %v979 = vunpack.c.l.b16 %v754
        %v980 = vunpack.c.l.b16 %v755
        %v981 = vunpack.c.l.b16 %v756
        %v982 = vunpack.c.l.b16 %v757
        %v983 = vunpack.c.l.b16 %v758
        %v984 = vunpack.c.l.b16 %v759
        %v985 = vunpack.c.l.b16 %v760
        %v986 = vunpack.c.l.b16 %v761
        %v987 = vunpack.c.l.b16 %v762
        %v988 = vunpack.c.l.b16 %v763
        %v989 = vunpack.c.l.b16 %v764
        %v990 = vunpack.c.l.b16 %v765
        %v991 = vunpack.c.l.b16 %v766
        %v992 = vunpack.c.l.b16 %v767
        %v993 = vunpack.c.l.b16 %v768
        %v994 = vpack.c.b16 %v979, %v978
        %v995 = vpack.c.b16 %v981, %v980
        %v996 = vpack.c.b16 %v983, %v982
        %v997 = vpack.c.b16 %v985, %v984
        %v998 = vpack.c.b16 %v987, %v986
        %v999 = vpack.c.b16 %v989, %v988
        %v1000 = vpack.c.b16 %v991, %v990
        %v1001 = vpack.c.b16 %v993, %v992
        %1010 = vmatpush.bf16.xpose.msra.mxu0 %v1001
        %1011 = vmatpush.bf16.xpose.msra.mxu0 %v1000
        %1012 = vmatpush.bf16.xpose.msra.mxu0 %v999
        %1013 = vmatpush.bf16.xpose.msra.mxu0 %v998
        %1014 = vmatpush.bf16.xpose.msra.mxu0 %v997
        %1015 = vmatpush.bf16.xpose.msra.mxu0 %v996
        %1016 = vmatpush.bf16.xpose.msra.mxu0 %v995
        %1017 = vmatpush.bf16.xpose.msra.mxu0 %v994
        %1018 = vmatmul.bf16.gmra.mxu0 %v946
        %v1019 = vpop.f32.mrf.mxu0
        %v1020 = vadd.f32 0.0, %v1019
        %v1021 = vpop.f32.mrf.mxu0
        %v1022 = vadd.f32 0.0, %v1021
        %1023 = vmatmul.bf16.gmra.mxu0 %v947
        %v1024 = vpop.f32.mrf.mxu0
        %v1025 = vadd.f32 0.0, %v1024
        %v1026 = vpop.f32.mrf.mxu0
        %v1027 = vadd.f32 0.0, %v1026
        %1028 = vmatmul.bf16.gmra.mxu0 %v948
        %v1029 = vpop.f32.mrf.mxu0
        %v1030 = vadd.f32 0.0, %v1029
        %v1031 = vpop.f32.mrf.mxu0
        %v1032 = vadd.f32 0.0, %v1031
        %1033 = vmatmul.bf16.gmra.mxu0 %v949
        %v1034 = vpop.f32.mrf.mxu0
        %v1035 = vadd.f32 0.0, %v1034
        %v1036 = vpop.f32.mrf.mxu0
        %v1037 = vadd.f32 0.0, %v1036
        %1038 = vmatmul.bf16.gmra.mxu0 %v950
        %v1039 = vpop.f32.mrf.mxu0
        %v1040 = vadd.f32 0.0, %v1039
        %v1041 = vpop.f32.mrf.mxu0
        %v1042 = vadd.f32 0.0, %v1041
        %1043 = vmatmul.bf16.gmra.mxu0 %v951
        %v1044 = vpop.f32.mrf.mxu0
        %v1045 = vadd.f32 0.0, %v1044
        %v1046 = vpop.f32.mrf.mxu0
        %v1047 = vadd.f32 0.0, %v1046
        %1048 = vmatmul.bf16.gmra.mxu0 %v952
        %v1049 = vpop.f32.mrf.mxu0
        %v1050 = vadd.f32 0.0, %v1049
        %v1051 = vpop.f32.mrf.mxu0
        %v1052 = vadd.f32 0.0, %v1051
        %1053 = vmatmul.bf16.gmra.mxu0 %v953
        %v1054 = vpop.f32.mrf.mxu0
        %v1055 = vadd.f32 0.0, %v1054
        %v1056 = vpop.f32.mrf.mxu0
        %v1057 = vadd.f32 0.0, %v1056
        %1058 = vdwg.mxu0
        %1059 = vmax.xlane.f32.xlu0 %v875
        %v1060 = vpop.xlane.xlu0 %1059
        %1061 = vmax.xlane.f32.xlu0 %v877
        %v1062 = vpop.xlane.xlu0 %1061
        %1063 = vmax.xlane.f32.xlu0 %v880
        %v1064 = vpop.xlane.xlu0 %1063
        %1065 = vmax.xlane.f32.xlu0 %v882
        %v1066 = vpop.xlane.xlu0 %1065
        %1067 = vmax.xlane.f32.xlu0 %v885
        %v1068 = vpop.xlane.xlu0 %1067
        %1069 = vmax.xlane.f32.xlu0 %v887
        %v1070 = vpop.xlane.xlu0 %1069
        %1071 = vmax.xlane.f32.xlu0 %v890
        %v1072 = vpop.xlane.xlu0 %1071
        %1073 = vmax.xlane.f32.xlu0 %v892
        %v1074 = vpop.xlane.xlu0 %1073
        %1075 = vmax.xlane.f32.xlu0 %v895
        %v1076 = vpop.xlane.xlu0 %1075
        %1077 = vmax.xlane.f32.xlu0 %v897
        %v1078 = vpop.xlane.xlu0 %1077
        %1079 = vmax.xlane.f32.xlu0 %v900
        %v1080 = vpop.xlane.xlu0 %1079
        %1081 = vmax.xlane.f32.xlu0 %v902
        %v1082 = vpop.xlane.xlu0 %1081
        %1083 = vmax.xlane.f32.xlu0 %v905
        %v1084 = vpop.xlane.xlu0 %1083
        %1085 = vmax.xlane.f32.xlu0 %v907
        %v1086 = vpop.xlane.xlu0 %1085
        %1087 = vmax.xlane.f32.xlu0 %v910
        %v1088 = vpop.xlane.xlu0 %1087
        %1089 = vmax.xlane.f32.xlu0 %v912
        %v1090 = vpop.xlane.xlu0 %1089
        %1091 = vmax.xlane.f32.xlu0 %v1020
        %v1092 = vpop.xlane.xlu0 %1091
        %1093 = vmax.xlane.f32.xlu0 %v1022
        %v1094 = vpop.xlane.xlu0 %1093
        %1095 = vmax.xlane.f32.xlu0 %v1025
        %v1096 = vpop.xlane.xlu0 %1095
        %1097 = vmax.xlane.f32.xlu0 %v1027
        %v1098 = vpop.xlane.xlu0 %1097
        %1099 = vmax.xlane.f32.xlu0 %v1030
        %v1100 = vpop.xlane.xlu0 %1099
        %1101 = vmax.xlane.f32.xlu0 %v1032
        %v1102 = vpop.xlane.xlu0 %1101
        %1103 = vmax.xlane.f32.xlu0 %v1035
        %v1104 = vpop.xlane.xlu0 %1103
        %1105 = vmax.xlane.f32.xlu0 %v1037
        %v1106 = vpop.xlane.xlu0 %1105
        %1107 = vmax.xlane.f32.xlu0 %v1040
        %v1108 = vpop.xlane.xlu0 %1107
        %1109 = vmax.xlane.f32.xlu0 %v1042
        %v1110 = vpop.xlane.xlu0 %1109
        %1111 = vmax.xlane.f32.xlu0 %v1045
        %v1112 = vpop.xlane.xlu0 %1111
        %1113 = vmax.xlane.f32.xlu0 %v1047
        %v1114 = vpop.xlane.xlu0 %1113
        %1115 = vmax.xlane.f32.xlu0 %v1050
        %v1116 = vpop.xlane.xlu0 %1115
        %1117 = vmax.xlane.f32.xlu0 %v1052
        %v1118 = vpop.xlane.xlu0 %1117
        %1119 = vmax.xlane.f32.xlu0 %v1055
        %v1120 = vpop.xlane.xlu0 %1119
        %1121 = vmax.xlane.f32.xlu0 %v1057
        %v1122 = vpop.xlane.xlu0 %1121
        %v1123 = vsub.f32 %v875, %v1060
        %v1124 = vsub.f32 %v877, %v1062
        %v1125 = vsub.f32 %v880, %v1064
        %v1126 = vsub.f32 %v882, %v1066
        %v1127 = vsub.f32 %v885, %v1068
        %v1128 = vsub.f32 %v887, %v1070
        %v1129 = vsub.f32 %v890, %v1072
        %v1130 = vsub.f32 %v892, %v1074
        %v1131 = vsub.f32 %v895, %v1076
        %v1132 = vsub.f32 %v897, %v1078
        %v1133 = vsub.f32 %v900, %v1080
        %v1134 = vsub.f32 %v902, %v1082
        %v1135 = vsub.f32 %v905, %v1084
        %v1136 = vsub.f32 %v907, %v1086
        %v1137 = vsub.f32 %v910, %v1088
        %v1138 = vsub.f32 %v912, %v1090
        %v1139 = vsub.f32 %v1020, %v1092
        %v1140 = vsub.f32 %v1022, %v1094
        %v1141 = vsub.f32 %v1025, %v1096
        %v1142 = vsub.f32 %v1027, %v1098
        %v1143 = vsub.f32 %v1030, %v1100
        %v1144 = vsub.f32 %v1032, %v1102
        %v1145 = vsub.f32 %v1035, %v1104
        %v1146 = vsub.f32 %v1037, %v1106
        %v1147 = vsub.f32 %v1040, %v1108
        %v1148 = vsub.f32 %v1042, %v1110
        %v1149 = vsub.f32 %v1045, %v1112
        %v1150 = vsub.f32 %v1047, %v1114
        %v1151 = vsub.f32 %v1050, %v1116
        %v1152 = vsub.f32 %v1052, %v1118
        %v1153 = vsub.f32 %v1055, %v1120
        %v1154 = vsub.f32 %v1057, %v1122
        %v1155 = vmul.f32 %v1123, 1.442695
        %v1156 = vpow.pop %v1155
        %v1157 = vmul.f32 %v1124, 1.442695
        %v1158 = vpow.pop %v1157
        %v1159 = vmul.f32 %v1125, 1.442695
        %v1160 = vpow.pop %v1159
        %v1161 = vmul.f32 %v1126, 1.442695
        %v1162 = vpow.pop %v1161
        %v1163 = vmul.f32 %v1127, 1.442695
        %v1164 = vpow.pop %v1163
        %v1165 = vmul.f32 %v1128, 1.442695
        %v1166 = vpow.pop %v1165
        %v1167 = vmul.f32 %v1129, 1.442695
        %v1168 = vpow.pop %v1167
        %v1169 = vmul.f32 %v1130, 1.442695
        %v1170 = vpow.pop %v1169
        %v1171 = vmul.f32 %v1131, 1.442695
        %v1172 = vpow.pop %v1171
        %v1173 = vmul.f32 %v1132, 1.442695
        %v1174 = vpow.pop %v1173
        %v1175 = vmul.f32 %v1133, 1.442695
        %v1176 = vpow.pop %v1175
        %v1177 = vmul.f32 %v1134, 1.442695
        %v1178 = vpow.pop %v1177
        %v1179 = vmul.f32 %v1135, 1.442695
        %v1180 = vpow.pop %v1179
        %v1181 = vmul.f32 %v1136, 1.442695
        %v1182 = vpow.pop %v1181
        %v1183 = vmul.f32 %v1137, 1.442695
        %v1184 = vpow.pop %v1183
        %v1185 = vmul.f32 %v1138, 1.442695
        %v1186 = vpow.pop %v1185
        %v1187 = vmul.f32 %v1139, 1.442695
        %v1188 = vpow.pop %v1187
        %v1189 = vmul.f32 %v1140, 1.442695
        %v1190 = vpow.pop %v1189
        %v1191 = vmul.f32 %v1141, 1.442695
        %v1192 = vpow.pop %v1191
        %v1193 = vmul.f32 %v1142, 1.442695
        %v1194 = vpow.pop %v1193
        %v1195 = vmul.f32 %v1143, 1.442695
        %v1196 = vpow.pop %v1195
        %v1197 = vmul.f32 %v1144, 1.442695
        %v1198 = vpow.pop %v1197
        %v1199 = vmul.f32 %v1145, 1.442695
        %v1200 = vpow.pop %v1199
        %v1201 = vmul.f32 %v1146, 1.442695
        %v1202 = vpow.pop %v1201
        %v1203 = vmul.f32 %v1147, 1.442695
        %v1204 = vpow.pop %v1203
        %v1205 = vmul.f32 %v1148, 1.442695
        %v1206 = vpow.pop %v1205
        %v1207 = vmul.f32 %v1149, 1.442695
        %v1208 = vpow.pop %v1207
        %v1209 = vmul.f32 %v1150, 1.442695
        %v1210 = vpow.pop %v1209
        %v1211 = vmul.f32 %v1151, 1.442695
        %v1212 = vpow.pop %v1211
        %v1213 = vmul.f32 %v1152, 1.442695
        %v1214 = vpow.pop %v1213
        %v1215 = vmul.f32 %v1153, 1.442695
        %v1216 = vpow.pop %v1215
        %v1217 = vmul.f32 %v1154, 1.442695
        %v1218 = vpow.pop %v1217
        %1219 = vadd.xlane.f32.xlu0 %v1156
        %v1220 = vpop.xlane.xlu0 %1219
        %1221 = vadd.xlane.f32.xlu0 %v1158
        %v1222 = vpop.xlane.xlu0 %1221
        %1223 = vadd.xlane.f32.xlu0 %v1160
        %v1224 = vpop.xlane.xlu0 %1223
        %1225 = vadd.xlane.f32.xlu0 %v1162
        %v1226 = vpop.xlane.xlu0 %1225
        %1227 = vadd.xlane.f32.xlu0 %v1164
        %v1228 = vpop.xlane.xlu0 %1227
        %1229 = vadd.xlane.f32.xlu0 %v1166
        %v1230 = vpop.xlane.xlu0 %1229
        %1231 = vadd.xlane.f32.xlu0 %v1168
        %v1232 = vpop.xlane.xlu0 %1231
        %1233 = vadd.xlane.f32.xlu0 %v1170
        %v1234 = vpop.xlane.xlu0 %1233
        %1235 = vadd.xlane.f32.xlu0 %v1172
        %v1236 = vpop.xlane.xlu0 %1235
        %1237 = vadd.xlane.f32.xlu0 %v1174
        %v1238 = vpop.xlane.xlu0 %1237
        %1239 = vadd.xlane.f32.xlu0 %v1176
        %v1240 = vpop.xlane.xlu0 %1239
        %1241 = vadd.xlane.f32.xlu0 %v1178
        %v1242 = vpop.xlane.xlu0 %1241
        %1243 = vadd.xlane.f32.xlu0 %v1180
        %v1244 = vpop.xlane.xlu0 %1243
        %1245 = vadd.xlane.f32.xlu0 %v1182
        %v1246 = vpop.xlane.xlu0 %1245
        %1247 = vadd.xlane.f32.xlu0 %v1184
        %v1248 = vpop.xlane.xlu0 %1247
        %1249 = vadd.xlane.f32.xlu0 %v1186
        %v1250 = vpop.xlane.xlu0 %1249
        %1251 = vadd.xlane.f32.xlu0 %v1188
        %v1252 = vpop.xlane.xlu0 %1251
        %1253 = vadd.xlane.f32.xlu0 %v1190
        %v1254 = vpop.xlane.xlu0 %1253
        %1255 = vadd.xlane.f32.xlu0 %v1192
        %v1256 = vpop.xlane.xlu0 %1255
        %1257 = vadd.xlane.f32.xlu0 %v1194
        %v1258 = vpop.xlane.xlu0 %1257
        %1259 = vadd.xlane.f32.xlu0 %v1196
        %v1260 = vpop.xlane.xlu0 %1259
        %1261 = vadd.xlane.f32.xlu0 %v1198
        %v1262 = vpop.xlane.xlu0 %1261
        %1263 = vadd.xlane.f32.xlu0 %v1200
        %v1264 = vpop.xlane.xlu0 %1263
        %1265 = vadd.xlane.f32.xlu0 %v1202
        %v1266 = vpop.xlane.xlu0 %1265
        %1267 = vadd.xlane.f32.xlu0 %v1204
        %v1268 = vpop.xlane.xlu0 %1267
        %1269 = vadd.xlane.f32.xlu0 %v1206
        %v1270 = vpop.xlane.xlu0 %1269
        %1271 = vadd.xlane.f32.xlu0 %v1208
        %v1272 = vpop.xlane.xlu0 %1271
        %1273 = vadd.xlane.f32.xlu0 %v1210
        %v1274 = vpop.xlane.xlu0 %1273
        %1275 = vadd.xlane.f32.xlu0 %v1212
        %v1276 = vpop.xlane.xlu0 %1275
        %1277 = vadd.xlane.f32.xlu0 %v1214
        %v1278 = vpop.xlane.xlu0 %1277
        %1279 = vadd.xlane.f32.xlu0 %v1216
        %v1280 = vpop.xlane.xlu0 %1279
        %1281 = vadd.xlane.f32.xlu0 %v1218
        %v1282 = vpop.xlane.xlu0 %1281
        %v1283 = vrcp.pop %v1220
        %v1284 = vrcp.pop %v1222
        %v1285 = vrcp.pop %v1224
        %v1286 = vrcp.pop %v1226
        %v1287 = vrcp.pop %v1228
        %v1288 = vrcp.pop %v1230
        %v1289 = vrcp.pop %v1232
        %v1290 = vrcp.pop %v1234
        %v1291 = vrcp.pop %v1236
        %v1292 = vrcp.pop %v1238
        %v1293 = vrcp.pop %v1240
        %v1294 = vrcp.pop %v1242
        %v1295 = vrcp.pop %v1244
        %v1296 = vrcp.pop %v1246
        %v1297 = vrcp.pop %v1248
        %v1298 = vrcp.pop %v1250
        %v1299 = vrcp.pop %v1252
        %v1300 = vrcp.pop %v1254
        %v1301 = vrcp.pop %v1256
        %v1302 = vrcp.pop %v1258
        %v1303 = vrcp.pop %v1260
        %v1304 = vrcp.pop %v1262
        %v1305 = vrcp.pop %v1264
        %v1306 = vrcp.pop %v1266
        %v1307 = vrcp.pop %v1268
        %v1308 = vrcp.pop %v1270
        %v1309 = vrcp.pop %v1272
        %v1310 = vrcp.pop %v1274
        %v1311 = vrcp.pop %v1276
        %v1312 = vrcp.pop %v1278
        %v1313 = vrcp.pop %v1280
        %v1314 = vrcp.pop %v1282
        %v1315 = vmul.f32 %v1156, %v1283
        %v1316 = vmul.f32 %v1158, %v1284
        %v1317 = vmul.f32 %v1160, %v1285
        %v1318 = vmul.f32 %v1162, %v1286
        %v1319 = vmul.f32 %v1164, %v1287
        %v1320 = vmul.f32 %v1166, %v1288
        %v1321 = vmul.f32 %v1168, %v1289
        %v1322 = vmul.f32 %v1170, %v1290
        %v1323 = vmul.f32 %v1172, %v1291
        %v1324 = vmul.f32 %v1174, %v1292
        %v1325 = vmul.f32 %v1176, %v1293
        %v1326 = vmul.f32 %v1178, %v1294
        %v1327 = vmul.f32 %v1180, %v1295
        %v1328 = vmul.f32 %v1182, %v1296
        %v1329 = vmul.f32 %v1184, %v1297
        %v1330 = vmul.f32 %v1186, %v1298
        %v1331 = vmul.f32 %v1188, %v1299
        %v1332 = vmul.f32 %v1190, %v1300
        %v1333 = vmul.f32 %v1192, %v1301
        %v1334 = vmul.f32 %v1194, %v1302
        %v1335 = vmul.f32 %v1196, %v1303
        %v1336 = vmul.f32 %v1198, %v1304
        %v1337 = vmul.f32 %v1200, %v1305
        %v1338 = vmul.f32 %v1202, %v1306
        %v1339 = vmul.f32 %v1204, %v1307
        %v1340 = vmul.f32 %v1206, %v1308
        %v1341 = vmul.f32 %v1208, %v1309
        %v1342 = vmul.f32 %v1210, %v1310
        %v1343 = vmul.f32 %v1212, %v1311
        %v1344 = vmul.f32 %v1214, %v1312
        %v1345 = vmul.f32 %v1216, %v1313
        %v1346 = vmul.f32 %v1218, %v1314
        %v1347 = vpack.c.bf16 %v1315, %v1315
        %v1348 = vpack.c.bf16 %v1316, %v1316
        %v1349 = vpack.c.bf16 %v1317, %v1317
        %v1350 = vpack.c.bf16 %v1318, %v1318
        %v1351 = vpack.c.bf16 %v1319, %v1319
        %v1352 = vpack.c.bf16 %v1320, %v1320
        %v1353 = vpack.c.bf16 %v1321, %v1321
        %v1354 = vpack.c.bf16 %v1322, %v1322
        %v1355 = vpack.c.bf16 %v1323, %v1323
        %v1356 = vpack.c.bf16 %v1324, %v1324
        %v1357 = vpack.c.bf16 %v1325, %v1325
        %v1358 = vpack.c.bf16 %v1326, %v1326
        %v1359 = vpack.c.bf16 %v1327, %v1327
        %v1360 = vpack.c.bf16 %v1328, %v1328
        %v1361 = vpack.c.bf16 %v1329, %v1329
        %v1362 = vpack.c.bf16 %v1330, %v1330
        %v1363 = vpack.c.bf16 %v1331, %v1331
        %v1364 = vpack.c.bf16 %v1332, %v1332
        %v1365 = vpack.c.bf16 %v1333, %v1333
        %v1366 = vpack.c.bf16 %v1334, %v1334
        %v1367 = vpack.c.bf16 %v1335, %v1335
        %v1368 = vpack.c.bf16 %v1336, %v1336
        %v1369 = vpack.c.bf16 %v1337, %v1337
        %v1370 = vpack.c.bf16 %v1338, %v1338
        %v1371 = vpack.c.bf16 %v1339, %v1339
        %v1372 = vpack.c.bf16 %v1340, %v1340
        %v1373 = vpack.c.bf16 %v1341, %v1341
        %v1374 = vpack.c.bf16 %v1342, %v1342
        %v1375 = vpack.c.bf16 %v1343, %v1343
        %v1376 = vpack.c.bf16 %v1344, %v1344
        %v1377 = vpack.c.bf16 %v1345, %v1345
        %v1378 = vpack.c.bf16 %v1346, %v1346
        %v1379 = vld [vmem:[#allocation5 + $0x8] sm:$0xf]
        %v1380 = vld [vmem:[#allocation5 + $0x18] sm:$0xf]
        %v1381 = vld [vmem:[#allocation5 + $0x28] sm:$0xf]
        %v1382 = vld [vmem:[#allocation5 + $0x38] sm:$0xf]
        %v1383 = vld [vmem:[#allocation5 + $0x48] sm:$0xf]
        %v1384 = vld [vmem:[#allocation5 + $0x58] sm:$0xf]
        %v1385 = vld [vmem:[#allocation5 + $0x68] sm:$0xf]
        %v1386 = vld [vmem:[#allocation5 + $0x78] sm:$0xf]
        %v1387 = vld [vmem:[#allocation5 + $0x88] sm:$0xf]
        %v1388 = vld [vmem:[#allocation5 + $0x98] sm:$0xf]
        %v1389 = vld [vmem:[#allocation5 + $0xa8] sm:$0xf]
        %v1390 = vld [vmem:[#allocation5 + $0xb8] sm:$0xf]
        %v1391 = vld [vmem:[#allocation5 + $0xc8] sm:$0xf]
        %v1392 = vld [vmem:[#allocation5 + $0xd8] sm:$0xf]
        %v1393 = vld [vmem:[#allocation5 + $0xe8] sm:$0xf]
        %v1394 = vld [vmem:[#allocation5 + $0xf8] sm:$0xf]
        %v1411 = vunpack.c.l.b16 %v1379
        %v1412 = vunpack.c.l.b16 %v1380
        %v1413 = vunpack.c.l.b16 %v1381
        %v1414 = vunpack.c.l.b16 %v1382
        %v1415 = vunpack.c.l.b16 %v1383
        %v1416 = vunpack.c.l.b16 %v1384
        %v1417 = vunpack.c.l.b16 %v1385
        %v1418 = vunpack.c.l.b16 %v1386
        %v1419 = vunpack.c.l.b16 %v1387
        %v1420 = vunpack.c.l.b16 %v1388
        %v1421 = vunpack.c.l.b16 %v1389
        %v1422 = vunpack.c.l.b16 %v1390
        %v1423 = vunpack.c.l.b16 %v1391
        %v1424 = vunpack.c.l.b16 %v1392
        %v1425 = vunpack.c.l.b16 %v1393
        %v1426 = vunpack.c.l.b16 %v1394
        %v1427 = vpack.c.b16 %v1412, %v1411
        %v1428 = vpack.c.b16 %v1414, %v1413
        %v1429 = vpack.c.b16 %v1416, %v1415
        %v1430 = vpack.c.b16 %v1418, %v1417
        %v1431 = vpack.c.b16 %v1420, %v1419
        %v1432 = vpack.c.b16 %v1422, %v1421
        %v1433 = vpack.c.b16 %v1424, %v1423
        %v1434 = vpack.c.b16 %v1426, %v1425
        %1443 = vmatpush.bf16.msra.mxu0 %v1434
        %1444 = vmatpush.bf16.msra.mxu0 %v1433
        %1445 = vmatpush.bf16.msra.mxu0 %v1432
        %1446 = vmatpush.bf16.msra.mxu0 %v1431
        %1447 = vmatpush.bf16.msra.mxu0 %v1430
        %1448 = vmatpush.bf16.msra.mxu0 %v1429
        %1449 = vmatpush.bf16.msra.mxu0 %v1428
        %1450 = vmatpush.bf16.msra.mxu0 %v1427
        %1451 = vmatmul.bf16.gmra.mxu0 %v383
        %v1452 = vpop.f32.mrf.mxu0
        %v1453 = vadd.f32 0.0, %v1452
        %v1454 = vpop.f32.mrf.mxu0
        %v1455 = vadd.f32 0.0, %v1454
        %1456 = vmatmul.bf16.gmra.mxu0 %v384
        %v1457 = vpop.f32.mrf.mxu0
        %v1458 = vadd.f32 0.0, %v1457
        %v1459 = vpop.f32.mrf.mxu0
        %v1460 = vadd.f32 0.0, %v1459
        %1461 = vmatmul.bf16.gmra.mxu0 %v385
        %v1462 = vpop.f32.mrf.mxu0
        %v1463 = vadd.f32 0.0, %v1462
        %v1464 = vpop.f32.mrf.mxu0
        %v1465 = vadd.f32 0.0, %v1464
        %1466 = vmatmul.bf16.gmra.mxu0 %v386
        %v1467 = vpop.f32.mrf.mxu0
        %v1468 = vadd.f32 0.0, %v1467
        %v1469 = vpop.f32.mrf.mxu0
        %v1470 = vadd.f32 0.0, %v1469
        %1471 = vmatmul.bf16.gmra.mxu0 %v387
        %v1472 = vpop.f32.mrf.mxu0
        %v1473 = vadd.f32 0.0, %v1472
        %v1474 = vpop.f32.mrf.mxu0
        %v1475 = vadd.f32 0.0, %v1474
        %1476 = vmatmul.bf16.gmra.mxu0 %v388
        %v1477 = vpop.f32.mrf.mxu0
        %v1478 = vadd.f32 0.0, %v1477
        %v1479 = vpop.f32.mrf.mxu0
        %v1480 = vadd.f32 0.0, %v1479
        %1481 = vmatmul.bf16.gmra.mxu0 %v389
        %v1482 = vpop.f32.mrf.mxu0
        %v1483 = vadd.f32 0.0, %v1482
        %v1484 = vpop.f32.mrf.mxu0
        %v1485 = vadd.f32 0.0, %v1484
        %1486 = vmatmul.bf16.gmra.mxu0 %v390
        %v1487 = vpop.f32.mrf.mxu0
        %v1488 = vadd.f32 0.0, %v1487
        %v1489 = vpop.f32.mrf.mxu0
        %v1490 = vadd.f32 0.0, %v1489
        %1491 = vmatmul.bf16.gmra.mxu0 %v391
        %v1492 = vpop.f32.mrf.mxu0
        %v1493 = vadd.f32 0.0, %v1492
        %v1494 = vpop.f32.mrf.mxu0
        %v1495 = vadd.f32 0.0, %v1494
        %1496 = vmatmul.bf16.gmra.mxu0 %v392
        %v1497 = vpop.f32.mrf.mxu0
        %v1498 = vadd.f32 0.0, %v1497
        %v1499 = vpop.f32.mrf.mxu0
        %v1500 = vadd.f32 0.0, %v1499
        %1501 = vmatmul.bf16.gmra.mxu0 %v393
        %v1502 = vpop.f32.mrf.mxu0
        %v1503 = vadd.f32 0.0, %v1502
        %v1504 = vpop.f32.mrf.mxu0
        %v1505 = vadd.f32 0.0, %v1504
        %1506 = vmatmul.bf16.gmra.mxu0 %v394
        %v1507 = vpop.f32.mrf.mxu0
        %v1508 = vadd.f32 0.0, %v1507
        %v1509 = vpop.f32.mrf.mxu0
        %v1510 = vadd.f32 0.0, %v1509
        %1511 = vmatmul.bf16.gmra.mxu0 %v395
        %v1512 = vpop.f32.mrf.mxu0
        %v1513 = vadd.f32 0.0, %v1512
        %v1514 = vpop.f32.mrf.mxu0
        %v1515 = vadd.f32 0.0, %v1514
        %1516 = vmatmul.bf16.gmra.mxu0 %v396
        %v1517 = vpop.f32.mrf.mxu0
        %v1518 = vadd.f32 0.0, %v1517
        %v1519 = vpop.f32.mrf.mxu0
        %v1520 = vadd.f32 0.0, %v1519
        %1521 = vmatmul.bf16.gmra.mxu0 %v397
        %v1522 = vpop.f32.mrf.mxu0
        %v1523 = vadd.f32 0.0, %v1522
        %v1524 = vpop.f32.mrf.mxu0
        %v1525 = vadd.f32 0.0, %v1524
        %1526 = vmatmul.bf16.gmra.mxu0 %v398
        %v1527 = vpop.f32.mrf.mxu0
        %v1528 = vadd.f32 0.0, %v1527
        %v1529 = vpop.f32.mrf.mxu0
        %v1530 = vadd.f32 0.0, %v1529
        %1531 = vdwg.mxu0
        %v1532 = vld [vmem:[#allocation5 + $0xc] sm:$0xf]
        %v1533 = vld [vmem:[#allocation5 + $0x1c] sm:$0xf]
        %v1534 = vld [vmem:[#allocation5 + $0x2c] sm:$0xf]
        %v1535 = vld [vmem:[#allocation5 + $0x3c] sm:$0xf]
        %v1536 = vld [vmem:[#allocation5 + $0x4c] sm:$0xf]
        %v1537 = vld [vmem:[#allocation5 + $0x5c] sm:$0xf]
        %v1538 = vld [vmem:[#allocation5 + $0x6c] sm:$0xf]
        %v1539 = vld [vmem:[#allocation5 + $0x7c] sm:$0xf]
        %v1540 = vld [vmem:[#allocation5 + $0x8c] sm:$0xf]
        %v1541 = vld [vmem:[#allocation5 + $0x9c] sm:$0xf]
        %v1542 = vld [vmem:[#allocation5 + $0xac] sm:$0xf]
        %v1543 = vld [vmem:[#allocation5 + $0xbc] sm:$0xf]
        %v1544 = vld [vmem:[#allocation5 + $0xcc] sm:$0xf]
        %v1545 = vld [vmem:[#allocation5 + $0xdc] sm:$0xf]
        %v1546 = vld [vmem:[#allocation5 + $0xec] sm:$0xf]
        %v1547 = vld [vmem:[#allocation5 + $0xfc] sm:$0xf]
        %v1564 = vunpack.c.l.b16 %v1532
        %v1565 = vunpack.c.l.b16 %v1533
        %v1566 = vunpack.c.l.b16 %v1534
        %v1567 = vunpack.c.l.b16 %v1535
        %v1568 = vunpack.c.l.b16 %v1536
        %v1569 = vunpack.c.l.b16 %v1537
        %v1570 = vunpack.c.l.b16 %v1538
        %v1571 = vunpack.c.l.b16 %v1539
        %v1572 = vunpack.c.l.b16 %v1540
        %v1573 = vunpack.c.l.b16 %v1541
        %v1574 = vunpack.c.l.b16 %v1542
        %v1575 = vunpack.c.l.b16 %v1543
        %v1576 = vunpack.c.l.b16 %v1544
        %v1577 = vunpack.c.l.b16 %v1545
        %v1578 = vunpack.c.l.b16 %v1546
        %v1579 = vunpack.c.l.b16 %v1547
        %v1580 = vpack.c.b16 %v1565, %v1564
        %v1581 = vpack.c.b16 %v1567, %v1566
        %v1582 = vpack.c.b16 %v1569, %v1568
        %v1583 = vpack.c.b16 %v1571, %v1570
        %v1584 = vpack.c.b16 %v1573, %v1572
        %v1585 = vpack.c.b16 %v1575, %v1574
        %v1586 = vpack.c.b16 %v1577, %v1576
        %v1587 = vpack.c.b16 %v1579, %v1578
        %1596 = vmatpush.bf16.msra.mxu0 %v1587
        %1597 = vmatpush.bf16.msra.mxu0 %v1586
        %1598 = vmatpush.bf16.msra.mxu0 %v1585
        %1599 = vmatpush.bf16.msra.mxu0 %v1584
        %1600 = vmatpush.bf16.msra.mxu0 %v1583
        %1601 = vmatpush.bf16.msra.mxu0 %v1582
        %1602 = vmatpush.bf16.msra.mxu0 %v1581
        %1603 = vmatpush.bf16.msra.mxu0 %v1580
        %1604 = vmatmul.bf16.gmra.mxu0 %v383
        %v1605 = vpop.f32.mrf.mxu0
        %v1606 = vadd.f32 0.0, %v1605
        %v1607 = vpop.f32.mrf.mxu0
        %v1608 = vadd.f32 0.0, %v1607
        %1609 = vmatmul.bf16.gmra.mxu0 %v384
        %v1610 = vpop.f32.mrf.mxu0
        %v1611 = vadd.f32 0.0, %v1610
        %v1612 = vpop.f32.mrf.mxu0
        %v1613 = vadd.f32 0.0, %v1612
        %1614 = vmatmul.bf16.gmra.mxu0 %v385
        %v1615 = vpop.f32.mrf.mxu0
        %v1616 = vadd.f32 0.0, %v1615
        %v1617 = vpop.f32.mrf.mxu0
        %v1618 = vadd.f32 0.0, %v1617
        %1619 = vmatmul.bf16.gmra.mxu0 %v386
        %v1620 = vpop.f32.mrf.mxu0
        %v1621 = vadd.f32 0.0, %v1620
        %v1622 = vpop.f32.mrf.mxu0
        %v1623 = vadd.f32 0.0, %v1622
        %1624 = vmatmul.bf16.gmra.mxu0 %v387
        %v1625 = vpop.f32.mrf.mxu0
        %v1626 = vadd.f32 0.0, %v1625
        %v1627 = vpop.f32.mrf.mxu0
        %v1628 = vadd.f32 0.0, %v1627
        %1629 = vmatmul.bf16.gmra.mxu0 %v388
        %v1630 = vpop.f32.mrf.mxu0
        %v1631 = vadd.f32 0.0, %v1630
        %v1632 = vpop.f32.mrf.mxu0
        %v1633 = vadd.f32 0.0, %v1632
        %1634 = vmatmul.bf16.gmra.mxu0 %v389
        %v1635 = vpop.f32.mrf.mxu0
        %v1636 = vadd.f32 0.0, %v1635
        %v1637 = vpop.f32.mrf.mxu0
        %v1638 = vadd.f32 0.0, %v1637
        %1639 = vmatmul.bf16.gmra.mxu0 %v390
        %v1640 = vpop.f32.mrf.mxu0
        %v1641 = vadd.f32 0.0, %v1640
        %v1642 = vpop.f32.mrf.mxu0
        %v1643 = vadd.f32 0.0, %v1642
        %1644 = vmatmul.bf16.gmra.mxu0 %v391
        %v1645 = vpop.f32.mrf.mxu0
        %v1646 = vadd.f32 0.0, %v1645
        %v1647 = vpop.f32.mrf.mxu0
        %v1648 = vadd.f32 0.0, %v1647
        %1649 = vmatmul.bf16.gmra.mxu0 %v392
        %v1650 = vpop.f32.mrf.mxu0
        %v1651 = vadd.f32 0.0, %v1650
        %v1652 = vpop.f32.mrf.mxu0
        %v1653 = vadd.f32 0.0, %v1652
        %1654 = vmatmul.bf16.gmra.mxu0 %v393
        %v1655 = vpop.f32.mrf.mxu0
        %v1656 = vadd.f32 0.0, %v1655
        %v1657 = vpop.f32.mrf.mxu0
        %v1658 = vadd.f32 0.0, %v1657
        %1659 = vmatmul.bf16.gmra.mxu0 %v394
        %v1660 = vpop.f32.mrf.mxu0
        %v1661 = vadd.f32 0.0, %v1660
        %v1662 = vpop.f32.mrf.mxu0
        %v1663 = vadd.f32 0.0, %v1662
        %1664 = vmatmul.bf16.gmra.mxu0 %v395
        %v1665 = vpop.f32.mrf.mxu0
        %v1666 = vadd.f32 0.0, %v1665
        %v1667 = vpop.f32.mrf.mxu0
        %v1668 = vadd.f32 0.0, %v1667
        %1669 = vmatmul.bf16.gmra.mxu0 %v396
        %v1670 = vpop.f32.mrf.mxu0
        %v1671 = vadd.f32 0.0, %v1670
        %v1672 = vpop.f32.mrf.mxu0
        %v1673 = vadd.f32 0.0, %v1672
        %1674 = vmatmul.bf16.gmra.mxu0 %v397
        %v1675 = vpop.f32.mrf.mxu0
        %v1676 = vadd.f32 0.0, %v1675
        %v1677 = vpop.f32.mrf.mxu0
        %v1678 = vadd.f32 0.0, %v1677
        %1679 = vmatmul.bf16.gmra.mxu0 %v398
        %v1680 = vpop.f32.mrf.mxu0
        %v1681 = vadd.f32 0.0, %v1680
        %v1682 = vpop.f32.mrf.mxu0
        %v1683 = vadd.f32 0.0, %v1682
        %1684 = vdwg.mxu0
        %v1685 = vpack.c.bf16 %v1453, %v1453
        %v1686 = vpack.c.bf16 %v1455, %v1455
        %v1687 = vpack.c.bf16 %v1458, %v1458
        %v1688 = vpack.c.bf16 %v1460, %v1460
        %v1689 = vpack.c.bf16 %v1463, %v1463
        %v1690 = vpack.c.bf16 %v1465, %v1465
        %v1691 = vpack.c.bf16 %v1468, %v1468
        %v1692 = vpack.c.bf16 %v1470, %v1470
        %v1693 = vpack.c.bf16 %v1473, %v1473
        %v1694 = vpack.c.bf16 %v1475, %v1475
        %v1695 = vpack.c.bf16 %v1478, %v1478
        %v1696 = vpack.c.bf16 %v1480, %v1480
        %v1697 = vpack.c.bf16 %v1483, %v1483
        %v1698 = vpack.c.bf16 %v1485, %v1485
        %v1699 = vpack.c.bf16 %v1488, %v1488
        %v1700 = vpack.c.bf16 %v1490, %v1490
        %v1701 = vpack.c.bf16 %v1493, %v1493
        %v1702 = vpack.c.bf16 %v1495, %v1495
        %v1703 = vpack.c.bf16 %v1498, %v1498
        %v1704 = vpack.c.bf16 %v1500, %v1500
        %v1705 = vpack.c.bf16 %v1503, %v1503
        %v1706 = vpack.c.bf16 %v1505, %v1505
        %v1707 = vpack.c.bf16 %v1508, %v1508
        %v1708 = vpack.c.bf16 %v1510, %v1510
        %v1709 = vpack.c.bf16 %v1513, %v1513
        %v1710 = vpack.c.bf16 %v1515, %v1515
        %v1711 = vpack.c.bf16 %v1518, %v1518
        %v1712 = vpack.c.bf16 %v1520, %v1520
        %v1713 = vpack.c.bf16 %v1523, %v1523
        %v1714 = vpack.c.bf16 %v1525, %v1525
        %v1715 = vpack.c.bf16 %v1528, %v1528
        %v1716 = vpack.c.bf16 %v1530, %v1530
        %v1717 = vpack.c.bf16 %v1606, %v1606
        %v1718 = vpack.c.bf16 %v1608, %v1608
        %v1719 = vpack.c.bf16 %v1611, %v1611
        %v1720 = vpack.c.bf16 %v1613, %v1613
        %v1721 = vpack.c.bf16 %v1616, %v1616
        %v1722 = vpack.c.bf16 %v1618, %v1618
        %v1723 = vpack.c.bf16 %v1621, %v1621
        %v1724 = vpack.c.bf16 %v1623, %v1623
        %v1725 = vpack.c.bf16 %v1626, %v1626
        %v1726 = vpack.c.bf16 %v1628, %v1628
        %v1727 = vpack.c.bf16 %v1631, %v1631
        %v1728 = vpack.c.bf16 %v1633, %v1633
        %v1729 = vpack.c.bf16 %v1636, %v1636
        %v1730 = vpack.c.bf16 %v1638, %v1638
        %v1731 = vpack.c.bf16 %v1641, %v1641
        %v1732 = vpack.c.bf16 %v1643, %v1643
        %v1733 = vpack.c.bf16 %v1646, %v1646
        %v1734 = vpack.c.bf16 %v1648, %v1648
        %v1735 = vpack.c.bf16 %v1651, %v1651
        %v1736 = vpack.c.bf16 %v1653, %v1653
        %v1737 = vpack.c.bf16 %v1656, %v1656
        %v1738 = vpack.c.bf16 %v1658, %v1658
        %v1739 = vpack.c.bf16 %v1661, %v1661
        %v1740 = vpack.c.bf16 %v1663, %v1663
        %v1741 = vpack.c.bf16 %v1666, %v1666
        %v1742 = vpack.c.bf16 %v1668, %v1668
        %v1743 = vpack.c.bf16 %v1671, %v1671
        %v1744 = vpack.c.bf16 %v1673, %v1673
        %v1745 = vpack.c.bf16 %v1676, %v1676
        %v1746 = vpack.c.bf16 %v1678, %v1678
        %v1747 = vpack.c.bf16 %v1681, %v1681
        %v1748 = vpack.c.bf16 %v1683, %v1683
        %v1765 = vunpack.c.l.b16 %v1685
        %v1766 = vunpack.c.l.b16 %v1686
        %v1767 = vunpack.c.l.b16 %v1687
        %v1768 = vunpack.c.l.b16 %v1688
        %v1769 = vunpack.c.l.b16 %v1689
        %v1770 = vunpack.c.l.b16 %v1690
        %v1771 = vunpack.c.l.b16 %v1691
        %v1772 = vunpack.c.l.b16 %v1692
        %v1773 = vunpack.c.l.b16 %v1693
        %v1774 = vunpack.c.l.b16 %v1694
        %v1775 = vunpack.c.l.b16 %v1695
        %v1776 = vunpack.c.l.b16 %v1696
        %v1777 = vunpack.c.l.b16 %v1697
        %v1778 = vunpack.c.l.b16 %v1698
        %v1779 = vunpack.c.l.b16 %v1699
        %v1780 = vunpack.c.l.b16 %v1700
        %v1781 = vpack.c.b16 %v1766, %v1765
        %v1782 = vpack.c.b16 %v1768, %v1767
        %v1783 = vpack.c.b16 %v1770, %v1769
        %v1784 = vpack.c.b16 %v1772, %v1771
        %v1785 = vpack.c.b16 %v1774, %v1773
        %v1786 = vpack.c.b16 %v1776, %v1775
        %v1787 = vpack.c.b16 %v1778, %v1777
        %v1788 = vpack.c.b16 %v1780, %v1779
        %v1813 = vunpack.c.l.b16 %v1717
        %v1814 = vunpack.c.l.b16 %v1718
        %v1815 = vunpack.c.l.b16 %v1719
        %v1816 = vunpack.c.l.b16 %v1720
        %v1817 = vunpack.c.l.b16 %v1721
        %v1818 = vunpack.c.l.b16 %v1722
        %v1819 = vunpack.c.l.b16 %v1723
        %v1820 = vunpack.c.l.b16 %v1724
        %v1821 = vunpack.c.l.b16 %v1725
        %v1822 = vunpack.c.l.b16 %v1726
        %v1823 = vunpack.c.l.b16 %v1727
        %v1824 = vunpack.c.l.b16 %v1728
        %v1825 = vunpack.c.l.b16 %v1729
        %v1826 = vunpack.c.l.b16 %v1730
        %v1827 = vunpack.c.l.b16 %v1731
        %v1828 = vunpack.c.l.b16 %v1732
        %v1829 = vpack.c.b16 %v1814, %v1813
        %v1830 = vpack.c.b16 %v1816, %v1815
        %v1831 = vpack.c.b16 %v1818, %v1817
        %v1832 = vpack.c.b16 %v1820, %v1819
        %v1833 = vpack.c.b16 %v1822, %v1821
        %v1834 = vpack.c.b16 %v1824, %v1823
        %v1835 = vpack.c.b16 %v1826, %v1825
        %v1836 = vpack.c.b16 %v1828, %v1827
        %1845 = vmatpush.bf16.xpose.msra.mxu0 %v1836
        %1846 = vmatpush.bf16.xpose.msra.mxu0 %v1835
        %1847 = vmatpush.bf16.xpose.msra.mxu0 %v1834
        %1848 = vmatpush.bf16.xpose.msra.mxu0 %v1833
        %1849 = vmatpush.bf16.xpose.msra.mxu0 %v1832
        %1850 = vmatpush.bf16.xpose.msra.mxu0 %v1831
        %1851 = vmatpush.bf16.xpose.msra.mxu0 %v1830
        %1852 = vmatpush.bf16.xpose.msra.mxu0 %v1829
        %1853 = vmatmul.bf16.gmra.mxu0 %v1781
        %v1854 = vpop.f32.mrf.mxu0
        %v1855 = vadd.f32 0.0, %v1854
        %v1856 = vpop.f32.mrf.mxu0
        %v1857 = vadd.f32 0.0, %v1856
        %1858 = vmatmul.bf16.gmra.mxu0 %v1782
        %v1859 = vpop.f32.mrf.mxu0
        %v1860 = vadd.f32 0.0, %v1859
        %v1861 = vpop.f32.mrf.mxu0
        %v1862 = vadd.f32 0.0, %v1861
        %1863 = vmatmul.bf16.gmra.mxu0 %v1783
        %v1864 = vpop.f32.mrf.mxu0
        %v1865 = vadd.f32 0.0, %v1864
        %v1866 = vpop.f32.mrf.mxu0
        %v1867 = vadd.f32 0.0, %v1866
        %1868 = vmatmul.bf16.gmra.mxu0 %v1784
        %v1869 = vpop.f32.mrf.mxu0
        %v1870 = vadd.f32 0.0, %v1869
        %v1871 = vpop.f32.mrf.mxu0
        %v1872 = vadd.f32 0.0, %v1871
        %1873 = vmatmul.bf16.gmra.mxu0 %v1785
        %v1874 = vpop.f32.mrf.mxu0
        %v1875 = vadd.f32 0.0, %v1874
        %v1876 = vpop.f32.mrf.mxu0
        %v1877 = vadd.f32 0.0, %v1876
        %1878 = vmatmul.bf16.gmra.mxu0 %v1786
        %v1879 = vpop.f32.mrf.mxu0
        %v1880 = vadd.f32 0.0, %v1879
        %v1881 = vpop.f32.mrf.mxu0
        %v1882 = vadd.f32 0.0, %v1881
        %1883 = vmatmul.bf16.gmra.mxu0 %v1787
        %v1884 = vpop.f32.mrf.mxu0
        %v1885 = vadd.f32 0.0, %v1884
        %v1886 = vpop.f32.mrf.mxu0
        %v1887 = vadd.f32 0.0, %v1886
        %1888 = vmatmul.bf16.gmra.mxu0 %v1788
        %v1889 = vpop.f32.mrf.mxu0
        %v1890 = vadd.f32 0.0, %v1889
        %v1891 = vpop.f32.mrf.mxu0
        %v1892 = vadd.f32 0.0, %v1891
        %1893 = vdwg.mxu0
        %v1910 = vunpack.c.l.b16 %v1701
        %v1911 = vunpack.c.l.b16 %v1702
        %v1912 = vunpack.c.l.b16 %v1703
        %v1913 = vunpack.c.l.b16 %v1704
        %v1914 = vunpack.c.l.b16 %v1705
        %v1915 = vunpack.c.l.b16 %v1706
        %v1916 = vunpack.c.l.b16 %v1707
        %v1917 = vunpack.c.l.b16 %v1708
        %v1918 = vunpack.c.l.b16 %v1709
        %v1919 = vunpack.c.l.b16 %v1710
        %v1920 = vunpack.c.l.b16 %v1711
        %v1921 = vunpack.c.l.b16 %v1712
        %v1922 = vunpack.c.l.b16 %v1713
        %v1923 = vunpack.c.l.b16 %v1714
        %v1924 = vunpack.c.l.b16 %v1715
        %v1925 = vunpack.c.l.b16 %v1716
        %v1926 = vpack.c.b16 %v1911, %v1910
        %v1927 = vpack.c.b16 %v1913, %v1912
        %v1928 = vpack.c.b16 %v1915, %v1914
        %v1929 = vpack.c.b16 %v1917, %v1916
        %v1930 = vpack.c.b16 %v1919, %v1918
        %v1931 = vpack.c.b16 %v1921, %v1920
        %v1932 = vpack.c.b16 %v1923, %v1922
        %v1933 = vpack.c.b16 %v1925, %v1924
        %v1958 = vunpack.c.l.b16 %v1733
        %v1959 = vunpack.c.l.b16 %v1734
        %v1960 = vunpack.c.l.b16 %v1735
        %v1961 = vunpack.c.l.b16 %v1736
        %v1962 = vunpack.c.l.b16 %v1737
        %v1963 = vunpack.c.l.b16 %v1738
        %v1964 = vunpack.c.l.b16 %v1739
        %v1965 = vunpack.c.l.b16 %v1740
        %v1966 = vunpack.c.l.b16 %v1741
        %v1967 = vunpack.c.l.b16 %v1742
        %v1968 = vunpack.c.l.b16 %v1743
        %v1969 = vunpack.c.l.b16 %v1744
        %v1970 = vunpack.c.l.b16 %v1745
        %v1971 = vunpack.c.l.b16 %v1746
        %v1972 = vunpack.c.l.b16 %v1747
        %v1973 = vunpack.c.l.b16 %v1748
        %v1974 = vpack.c.b16 %v1959, %v1958
        %v1975 = vpack.c.b16 %v1961, %v1960
        %v1976 = vpack.c.b16 %v1963, %v1962
        %v1977 = vpack.c.b16 %v1965, %v1964
        %v1978 = vpack.c.b16 %v1967, %v1966
        %v1979 = vpack.c.b16 %v1969, %v1968
        %v1980 = vpack.c.b16 %v1971, %v1970
        %v1981 = vpack.c.b16 %v1973, %v1972
        %1990 = vmatpush.bf16.xpose.msra.mxu0 %v1981
        %1991 = vmatpush.bf16.xpose.msra.mxu0 %v1980
        %1992 = vmatpush.bf16.xpose.msra.mxu0 %v1979
        %1993 = vmatpush.bf16.xpose.msra.mxu0 %v1978
        %1994 = vmatpush.bf16.xpose.msra.mxu0 %v1977
        %1995 = vmatpush.bf16.xpose.msra.mxu0 %v1976
        %1996 = vmatpush.bf16.xpose.msra.mxu0 %v1975
        %1997 = vmatpush.bf16.xpose.msra.mxu0 %v1974
        %1998 = vmatmul.bf16.gmra.mxu0 %v1926
        %v1999 = vpop.f32.mrf.mxu0
        %v2000 = vadd.f32 0.0, %v1999
        %v2001 = vpop.f32.mrf.mxu0
        %v2002 = vadd.f32 0.0, %v2001
        %2003 = vmatmul.bf16.gmra.mxu0 %v1927
        %v2004 = vpop.f32.mrf.mxu0
        %v2005 = vadd.f32 0.0, %v2004
        %v2006 = vpop.f32.mrf.mxu0
        %v2007 = vadd.f32 0.0, %v2006
        %2008 = vmatmul.bf16.gmra.mxu0 %v1928
        %v2009 = vpop.f32.mrf.mxu0
        %v2010 = vadd.f32 0.0, %v2009
        %v2011 = vpop.f32.mrf.mxu0
        %v2012 = vadd.f32 0.0, %v2011
        %2013 = vmatmul.bf16.gmra.mxu0 %v1929
        %v2014 = vpop.f32.mrf.mxu0
        %v2015 = vadd.f32 0.0, %v2014
        %v2016 = vpop.f32.mrf.mxu0
        %v2017 = vadd.f32 0.0, %v2016
        %2018 = vmatmul.bf16.gmra.mxu0 %v1930
        %v2019 = vpop.f32.mrf.mxu0
        %v2020 = vadd.f32 0.0, %v2019
        %v2021 = vpop.f32.mrf.mxu0
        %v2022 = vadd.f32 0.0, %v2021
        %2023 = vmatmul.bf16.gmra.mxu0 %v1931
        %v2024 = vpop.f32.mrf.mxu0
        %v2025 = vadd.f32 0.0, %v2024
        %v2026 = vpop.f32.mrf.mxu0
        %v2027 = vadd.f32 0.0, %v2026
        %2028 = vmatmul.bf16.gmra.mxu0 %v1932
        %v2029 = vpop.f32.mrf.mxu0
        %v2030 = vadd.f32 0.0, %v2029
        %v2031 = vpop.f32.mrf.mxu0
        %v2032 = vadd.f32 0.0, %v2031
        %2033 = vmatmul.bf16.gmra.mxu0 %v1933
        %v2034 = vpop.f32.mrf.mxu0
        %v2035 = vadd.f32 0.0, %v2034
        %v2036 = vpop.f32.mrf.mxu0
        %v2037 = vadd.f32 0.0, %v2036
        %2038 = vdwg.mxu0
        %2039 = vmax.xlane.f32.xlu0 %v1855
        %v2040 = vpop.xlane.xlu0 %2039
        %2041 = vmax.xlane.f32.xlu0 %v1857
        %v2042 = vpop.xlane.xlu0 %2041
        %2043 = vmax.xlane.f32.xlu0 %v1860
        %v2044 = vpop.xlane.xlu0 %2043
        %2045 = vmax.xlane.f32.xlu0 %v1862
        %v2046 = vpop.xlane.xlu0 %2045
        %2047 = vmax.xlane.f32.xlu0 %v1865
        %v2048 = vpop.xlane.xlu0 %2047
        %2049 = vmax.xlane.f32.xlu0 %v1867
        %v2050 = vpop.xlane.xlu0 %2049
        %2051 = vmax.xlane.f32.xlu0 %v1870
        %v2052 = vpop.xlane.xlu0 %2051
        %2053 = vmax.xlane.f32.xlu0 %v1872
        %v2054 = vpop.xlane.xlu0 %2053
        %2055 = vmax.xlane.f32.xlu0 %v1875
        %v2056 = vpop.xlane.xlu0 %2055
        %2057 = vmax.xlane.f32.xlu0 %v1877
        %v2058 = vpop.xlane.xlu0 %2057
        %2059 = vmax.xlane.f32.xlu0 %v1880
        %v2060 = vpop.xlane.xlu0 %2059
        %2061 = vmax.xlane.f32.xlu0 %v1882
        %v2062 = vpop.xlane.xlu0 %2061
        %2063 = vmax.xlane.f32.xlu0 %v1885
        %v2064 = vpop.xlane.xlu0 %2063
        %2065 = vmax.xlane.f32.xlu0 %v1887
        %v2066 = vpop.xlane.xlu0 %2065
        %2067 = vmax.xlane.f32.xlu0 %v1890
        %v2068 = vpop.xlane.xlu0 %2067
        %2069 = vmax.xlane.f32.xlu0 %v1892
        %v2070 = vpop.xlane.xlu0 %2069
        %2071 = vmax.xlane.f32.xlu0 %v2000
        %v2072 = vpop.xlane.xlu0 %2071
        %2073 = vmax.xlane.f32.xlu0 %v2002
        %v2074 = vpop.xlane.xlu0 %2073
        %2075 = vmax.xlane.f32.xlu0 %v2005
        %v2076 = vpop.xlane.xlu0 %2075
        %2077 = vmax.xlane.f32.xlu0 %v2007
        %v2078 = vpop.xlane.xlu0 %2077
        %2079 = vmax.xlane.f32.xlu0 %v2010
        %v2080 = vpop.xlane.xlu0 %2079
        %2081 = vmax.xlane.f32.xlu0 %v2012
        %v2082 = vpop.xlane.xlu0 %2081
        %2083 = vmax.xlane.f32.xlu0 %v2015
        %v2084 = vpop.xlane.xlu0 %2083
        %2085 = vmax.xlane.f32.xlu0 %v2017
        %v2086 = vpop.xlane.xlu0 %2085
        %2087 = vmax.xlane.f32.xlu0 %v2020
        %v2088 = vpop.xlane.xlu0 %2087
        %2089 = vmax.xlane.f32.xlu0 %v2022
        %v2090 = vpop.xlane.xlu0 %2089
        %2091 = vmax.xlane.f32.xlu0 %v2025
        %v2092 = vpop.xlane.xlu0 %2091
        %2093 = vmax.xlane.f32.xlu0 %v2027
        %v2094 = vpop.xlane.xlu0 %2093
        %2095 = vmax.xlane.f32.xlu0 %v2030
        %v2096 = vpop.xlane.xlu0 %2095
        %2097 = vmax.xlane.f32.xlu0 %v2032
        %v2098 = vpop.xlane.xlu0 %2097
        %2099 = vmax.xlane.f32.xlu0 %v2035
        %v2100 = vpop.xlane.xlu0 %2099
        %2101 = vmax.xlane.f32.xlu0 %v2037
        %v2102 = vpop.xlane.xlu0 %2101
        %v2103 = vsub.f32 %v1855, %v2040
        %v2104 = vsub.f32 %v1857, %v2042
        %v2105 = vsub.f32 %v1860, %v2044
        %v2106 = vsub.f32 %v1862, %v2046
        %v2107 = vsub.f32 %v1865, %v2048
        %v2108 = vsub.f32 %v1867, %v2050
        %v2109 = vsub.f32 %v1870, %v2052
        %v2110 = vsub.f32 %v1872, %v2054
        %v2111 = vsub.f32 %v1875, %v2056
        %v2112 = vsub.f32 %v1877, %v2058
        %v2113 = vsub.f32 %v1880, %v2060
        %v2114 = vsub.f32 %v1882, %v2062
        %v2115 = vsub.f32 %v1885, %v2064
        %v2116 = vsub.f32 %v1887, %v2066
        %v2117 = vsub.f32 %v1890, %v2068
        %v2118 = vsub.f32 %v1892, %v2070
        %v2119 = vsub.f32 %v2000, %v2072
        %v2120 = vsub.f32 %v2002, %v2074
        %v2121 = vsub.f32 %v2005, %v2076
        %v2122 = vsub.f32 %v2007, %v2078
        %v2123 = vsub.f32 %v2010, %v2080
        %v2124 = vsub.f32 %v2012, %v2082
        %v2125 = vsub.f32 %v2015, %v2084
        %v2126 = vsub.f32 %v2017, %v2086
        %v2127 = vsub.f32 %v2020, %v2088
        %v2128 = vsub.f32 %v2022, %v2090
        %v2129 = vsub.f32 %v2025, %v2092
        %v2130 = vsub.f32 %v2027, %v2094
        %v2131 = vsub.f32 %v2030, %v2096
        %v2132 = vsub.f32 %v2032, %v2098
        %v2133 = vsub.f32 %v2035, %v2100
        %v2134 = vsub.f32 %v2037, %v2102
        %v2135 = vmul.f32 %v2103, 1.442695
        %v2136 = vpow.pop %v2135
        %v2137 = vmul.f32 %v2104, 1.442695
        %v2138 = vpow.pop %v2137
        %v2139 = vmul.f32 %v2105, 1.442695
        %v2140 = vpow.pop %v2139
        %v2141 = vmul.f32 %v2106, 1.442695
        %v2142 = vpow.pop %v2141
        %v2143 = vmul.f32 %v2107, 1.442695
        %v2144 = vpow.pop %v2143
        %v2145 = vmul.f32 %v2108, 1.442695
        %v2146 = vpow.pop %v2145
        %v2147 = vmul.f32 %v2109, 1.442695
        %v2148 = vpow.pop %v2147
        %v2149 = vmul.f32 %v2110, 1.442695
        %v2150 = vpow.pop %v2149
        %v2151 = vmul.f32 %v2111, 1.442695
        %v2152 = vpow.pop %v2151
        %v2153 = vmul.f32 %v2112, 1.442695
        %v2154 = vpow.pop %v2153
        %v2155 = vmul.f32 %v2113, 1.442695
        %v2156 = vpow.pop %v2155
        %v2157 = vmul.f32 %v2114, 1.442695
        %v2158 = vpow.pop %v2157
        %v2159 = vmul.f32 %v2115, 1.442695
        %v2160 = vpow.pop %v2159
        %v2161 = vmul.f32 %v2116, 1.442695
        %v2162 = vpow.pop %v2161
        %v2163 = vmul.f32 %v2117, 1.442695
        %v2164 = vpow.pop %v2163
        %v2165 = vmul.f32 %v2118, 1.442695
        %v2166 = vpow.pop %v2165
        %v2167 = vmul.f32 %v2119, 1.442695
        %v2168 = vpow.pop %v2167
        %v2169 = vmul.f32 %v2120, 1.442695
        %v2170 = vpow.pop %v2169
        %v2171 = vmul.f32 %v2121, 1.442695
        %v2172 = vpow.pop %v2171
        %v2173 = vmul.f32 %v2122, 1.442695
        %v2174 = vpow.pop %v2173
        %v2175 = vmul.f32 %v2123, 1.442695
        %v2176 = vpow.pop %v2175
        %v2177 = vmul.f32 %v2124, 1.442695
        %v2178 = vpow.pop %v2177
        %v2179 = vmul.f32 %v2125, 1.442695
        %v2180 = vpow.pop %v2179
        %v2181 = vmul.f32 %v2126, 1.442695
        %v2182 = vpow.pop %v2181
        %v2183 = vmul.f32 %v2127, 1.442695
        %v2184 = vpow.pop %v2183
        %v2185 = vmul.f32 %v2128, 1.442695
        %v2186 = vpow.pop %v2185
        %v2187 = vmul.f32 %v2129, 1.442695
        %v2188 = vpow.pop %v2187
        %v2189 = vmul.f32 %v2130, 1.442695
        %v2190 = vpow.pop %v2189
        %v2191 = vmul.f32 %v2131, 1.442695
        %v2192 = vpow.pop %v2191
        %v2193 = vmul.f32 %v2132, 1.442695
        %v2194 = vpow.pop %v2193
        %v2195 = vmul.f32 %v2133, 1.442695
        %v2196 = vpow.pop %v2195
        %v2197 = vmul.f32 %v2134, 1.442695
        %v2198 = vpow.pop %v2197
        %2199 = vadd.xlane.f32.xlu0 %v2136
        %v2200 = vpop.xlane.xlu0 %2199
        %2201 = vadd.xlane.f32.xlu0 %v2138
        %v2202 = vpop.xlane.xlu0 %2201
        %2203 = vadd.xlane.f32.xlu0 %v2140
        %v2204 = vpop.xlane.xlu0 %2203
        %2205 = vadd.xlane.f32.xlu0 %v2142
        %v2206 = vpop.xlane.xlu0 %2205
        %2207 = vadd.xlane.f32.xlu0 %v2144
        %v2208 = vpop.xlane.xlu0 %2207
        %2209 = vadd.xlane.f32.xlu0 %v2146
        %v2210 = vpop.xlane.xlu0 %2209
        %2211 = vadd.xlane.f32.xlu0 %v2148
        %v2212 = vpop.xlane.xlu0 %2211
        %2213 = vadd.xlane.f32.xlu0 %v2150
        %v2214 = vpop.xlane.xlu0 %2213
        %2215 = vadd.xlane.f32.xlu0 %v2152
        %v2216 = vpop.xlane.xlu0 %2215
        %2217 = vadd.xlane.f32.xlu0 %v2154
        %v2218 = vpop.xlane.xlu0 %2217
        %2219 = vadd.xlane.f32.xlu0 %v2156
        %v2220 = vpop.xlane.xlu0 %2219
        %2221 = vadd.xlane.f32.xlu0 %v2158
        %v2222 = vpop.xlane.xlu0 %2221
        %2223 = vadd.xlane.f32.xlu0 %v2160
        %v2224 = vpop.xlane.xlu0 %2223
        %2225 = vadd.xlane.f32.xlu0 %v2162
        %v2226 = vpop.xlane.xlu0 %2225
        %2227 = vadd.xlane.f32.xlu0 %v2164
        %v2228 = vpop.xlane.xlu0 %2227
        %2229 = vadd.xlane.f32.xlu0 %v2166
        %v2230 = vpop.xlane.xlu0 %2229
        %2231 = vadd.xlane.f32.xlu0 %v2168
        %v2232 = vpop.xlane.xlu0 %2231
        %2233 = vadd.xlane.f32.xlu0 %v2170
        %v2234 = vpop.xlane.xlu0 %2233
        %2235 = vadd.xlane.f32.xlu0 %v2172
        %v2236 = vpop.xlane.xlu0 %2235
        %2237 = vadd.xlane.f32.xlu0 %v2174
        %v2238 = vpop.xlane.xlu0 %2237
        %2239 = vadd.xlane.f32.xlu0 %v2176
        %v2240 = vpop.xlane.xlu0 %2239
        %2241 = vadd.xlane.f32.xlu0 %v2178
        %v2242 = vpop.xlane.xlu0 %2241
        %2243 = vadd.xlane.f32.xlu0 %v2180
        %v2244 = vpop.xlane.xlu0 %2243
        %2245 = vadd.xlane.f32.xlu0 %v2182
        %v2246 = vpop.xlane.xlu0 %2245
        %2247 = vadd.xlane.f32.xlu0 %v2184
        %v2248 = vpop.xlane.xlu0 %2247
        %2249 = vadd.xlane.f32.xlu0 %v2186
        %v2250 = vpop.xlane.xlu0 %2249
        %2251 = vadd.xlane.f32.xlu0 %v2188
        %v2252 = vpop.xlane.xlu0 %2251
        %2253 = vadd.xlane.f32.xlu0 %v2190
        %v2254 = vpop.xlane.xlu0 %2253
        %2255 = vadd.xlane.f32.xlu0 %v2192
        %v2256 = vpop.xlane.xlu0 %2255
        %2257 = vadd.xlane.f32.xlu0 %v2194
        %v2258 = vpop.xlane.xlu0 %2257
        %2259 = vadd.xlane.f32.xlu0 %v2196
        %v2260 = vpop.xlane.xlu0 %2259
        %2261 = vadd.xlane.f32.xlu0 %v2198
        %v2262 = vpop.xlane.xlu0 %2261
        %v2263 = vrcp.pop %v2200
        %v2264 = vrcp.pop %v2202
        %v2265 = vrcp.pop %v2204
        %v2266 = vrcp.pop %v2206
        %v2267 = vrcp.pop %v2208
        %v2268 = vrcp.pop %v2210
        %v2269 = vrcp.pop %v2212
        %v2270 = vrcp.pop %v2214
        %v2271 = vrcp.pop %v2216
        %v2272 = vrcp.pop %v2218
        %v2273 = vrcp.pop %v2220
        %v2274 = vrcp.pop %v2222
        %v2275 = vrcp.pop %v2224
        %v2276 = vrcp.pop %v2226
        %v2277 = vrcp.pop %v2228
        %v2278 = vrcp.pop %v2230
        %v2279 = vrcp.pop %v2232
        %v2280 = vrcp.pop %v2234
        %v2281 = vrcp.pop %v2236
        %v2282 = vrcp.pop %v2238
        %v2283 = vrcp.pop %v2240
        %v2284 = vrcp.pop %v2242
        %v2285 = vrcp.pop %v2244
        %v2286 = vrcp.pop %v2246
        %v2287 = vrcp.pop %v2248
        %v2288 = vrcp.pop %v2250
        %v2289 = vrcp.pop %v2252
        %v2290 = vrcp.pop %v2254
        %v2291 = vrcp.pop %v2256
        %v2292 = vrcp.pop %v2258
        %v2293 = vrcp.pop %v2260
        %v2294 = vrcp.pop %v2262
        %v2295 = vmul.f32 %v2136, %v2263
        %v2296 = vmul.f32 %v2138, %v2264
        %v2297 = vmul.f32 %v2140, %v2265
        %v2298 = vmul.f32 %v2142, %v2266
        %v2299 = vmul.f32 %v2144, %v2267
        %v2300 = vmul.f32 %v2146, %v2268
        %v2301 = vmul.f32 %v2148, %v2269
        %v2302 = vmul.f32 %v2150, %v2270
        %v2303 = vmul.f32 %v2152, %v2271
        %v2304 = vmul.f32 %v2154, %v2272
        %v2305 = vmul.f32 %v2156, %v2273
        %v2306 = vmul.f32 %v2158, %v2274
        %v2307 = vmul.f32 %v2160, %v2275
        %v2308 = vmul.f32 %v2162, %v2276
        %v2309 = vmul.f32 %v2164, %v2277
        %v2310 = vmul.f32 %v2166, %v2278
        %v2311 = vmul.f32 %v2168, %v2279
        %v2312 = vmul.f32 %v2170, %v2280
        %v2313 = vmul.f32 %v2172, %v2281
        %v2314 = vmul.f32 %v2174, %v2282
        %v2315 = vmul.f32 %v2176, %v2283
        %v2316 = vmul.f32 %v2178, %v2284
        %v2317 = vmul.f32 %v2180, %v2285
        %v2318 = vmul.f32 %v2182, %v2286
        %v2319 = vmul.f32 %v2184, %v2287
        %v2320 = vmul.f32 %v2186, %v2288
        %v2321 = vmul.f32 %v2188, %v2289
        %v2322 = vmul.f32 %v2190, %v2290
        %v2323 = vmul.f32 %v2192, %v2291
        %v2324 = vmul.f32 %v2194, %v2292
        %v2325 = vmul.f32 %v2196, %v2293
        %v2326 = vmul.f32 %v2198, %v2294
        %v2327 = vpack.c.bf16 %v2295, %v2295
        %v2328 = vpack.c.bf16 %v2296, %v2296
        %v2329 = vpack.c.bf16 %v2297, %v2297
        %v2330 = vpack.c.bf16 %v2298, %v2298
        %v2331 = vpack.c.bf16 %v2299, %v2299
        %v2332 = vpack.c.bf16 %v2300, %v2300
        %v2333 = vpack.c.bf16 %v2301, %v2301
        %v2334 = vpack.c.bf16 %v2302, %v2302
        %v2335 = vpack.c.bf16 %v2303, %v2303
        %v2336 = vpack.c.bf16 %v2304, %v2304
        %v2337 = vpack.c.bf16 %v2305, %v2305
        %v2338 = vpack.c.bf16 %v2306, %v2306
        %v2339 = vpack.c.bf16 %v2307, %v2307
        %v2340 = vpack.c.bf16 %v2308, %v2308
        %v2341 = vpack.c.bf16 %v2309, %v2309
        %v2342 = vpack.c.bf16 %v2310, %v2310
        %v2343 = vpack.c.bf16 %v2311, %v2311
        %v2344 = vpack.c.bf16 %v2312, %v2312
        %v2345 = vpack.c.bf16 %v2313, %v2313
        %v2346 = vpack.c.bf16 %v2314, %v2314
        %v2347 = vpack.c.bf16 %v2315, %v2315
        %v2348 = vpack.c.bf16 %v2316, %v2316
        %v2349 = vpack.c.bf16 %v2317, %v2317
        %v2350 = vpack.c.bf16 %v2318, %v2318
        %v2351 = vpack.c.bf16 %v2319, %v2319
        %v2352 = vpack.c.bf16 %v2320, %v2320
        %v2353 = vpack.c.bf16 %v2321, %v2321
        %v2354 = vpack.c.bf16 %v2322, %v2322
        %v2355 = vpack.c.bf16 %v2323, %v2323
        %v2356 = vpack.c.bf16 %v2324, %v2324
        %v2357 = vpack.c.bf16 %v2325, %v2325
        %v2358 = vpack.c.bf16 %v2326, %v2326
        %v2391 = vunpack.c.l.b16 %v1347
        %v2392 = vunpack.c.l.b16 %v1348
        %v2393 = vunpack.c.l.b16 %v1349
        %v2394 = vunpack.c.l.b16 %v1350
        %v2395 = vunpack.c.l.b16 %v1351
        %v2396 = vunpack.c.l.b16 %v1352
        %v2397 = vunpack.c.l.b16 %v1353
        %v2398 = vunpack.c.l.b16 %v1354
        %v2399 = vunpack.c.l.b16 %v1355
        %v2400 = vunpack.c.l.b16 %v1356
        %v2401 = vunpack.c.l.b16 %v1357
        %v2402 = vunpack.c.l.b16 %v1358
        %v2403 = vunpack.c.l.b16 %v1359
        %v2404 = vunpack.c.l.b16 %v1360
        %v2405 = vunpack.c.l.b16 %v1361
        %v2406 = vunpack.c.l.b16 %v1362
        %v2407 = vunpack.c.l.b16 %v1363
        %v2408 = vunpack.c.l.b16 %v1364
        %v2409 = vunpack.c.l.b16 %v1365
        %v2410 = vunpack.c.l.b16 %v1366
        %v2411 = vunpack.c.l.b16 %v1367
        %v2412 = vunpack.c.l.b16 %v1368
        %v2413 = vunpack.c.l.b16 %v1369
        %v2414 = vunpack.c.l.b16 %v1370
        %v2415 = vunpack.c.l.b16 %v1371
        %v2416 = vunpack.c.l.b16 %v1372
        %v2417 = vunpack.c.l.b16 %v1373
        %v2418 = vunpack.c.l.b16 %v1374
        %v2419 = vunpack.c.l.b16 %v1375
        %v2420 = vunpack.c.l.b16 %v1376
        %v2421 = vunpack.c.l.b16 %v1377
        %v2422 = vunpack.c.l.b16 %v1378
        %v2423 = vpack.c.b16 %v2392, %v2391
        %v2424 = vpack.c.b16 %v2394, %v2393
        %v2425 = vpack.c.b16 %v2396, %v2395
        %v2426 = vpack.c.b16 %v2398, %v2397
        %v2427 = vpack.c.b16 %v2400, %v2399
        %v2428 = vpack.c.b16 %v2402, %v2401
        %v2429 = vpack.c.b16 %v2404, %v2403
        %v2430 = vpack.c.b16 %v2406, %v2405
        %v2431 = vpack.c.b16 %v2408, %v2407
        %v2432 = vpack.c.b16 %v2410, %v2409
        %v2433 = vpack.c.b16 %v2412, %v2411
        %v2434 = vpack.c.b16 %v2414, %v2413
        %v2435 = vpack.c.b16 %v2416, %v2415
        %v2436 = vpack.c.b16 %v2418, %v2417
        %v2437 = vpack.c.b16 %v2420, %v2419
        %v2438 = vpack.c.b16 %v2422, %v2421
        %v2487 = vunpack.c.l.b16 %v2327
        %v2488 = vunpack.c.l.b16 %v2328
        %v2489 = vunpack.c.l.b16 %v2329
        %v2490 = vunpack.c.l.b16 %v2330
        %v2491 = vunpack.c.l.b16 %v2331
        %v2492 = vunpack.c.l.b16 %v2332
        %v2493 = vunpack.c.l.b16 %v2333
        %v2494 = vunpack.c.l.b16 %v2334
        %v2495 = vunpack.c.l.b16 %v2335
        %v2496 = vunpack.c.l.b16 %v2336
        %v2497 = vunpack.c.l.b16 %v2337
        %v2498 = vunpack.c.l.b16 %v2338
        %v2499 = vunpack.c.l.b16 %v2339
        %v2500 = vunpack.c.l.b16 %v2340
        %v2501 = vunpack.c.l.b16 %v2341
        %v2502 = vunpack.c.l.b16 %v2342
        %v2503 = vunpack.c.l.b16 %v2343
        %v2504 = vunpack.c.l.b16 %v2344
        %v2505 = vunpack.c.l.b16 %v2345
        %v2506 = vunpack.c.l.b16 %v2346
        %v2507 = vunpack.c.l.b16 %v2347
        %v2508 = vunpack.c.l.b16 %v2348
        %v2509 = vunpack.c.l.b16 %v2349
        %v2510 = vunpack.c.l.b16 %v2350
        %v2511 = vunpack.c.l.b16 %v2351
        %v2512 = vunpack.c.l.b16 %v2352
        %v2513 = vunpack.c.l.b16 %v2353
        %v2514 = vunpack.c.l.b16 %v2354
        %v2515 = vunpack.c.l.b16 %v2355
        %v2516 = vunpack.c.l.b16 %v2356
        %v2517 = vunpack.c.l.b16 %v2357
        %v2518 = vunpack.c.l.b16 %v2358
        %v2519 = vpack.c.b16 %v2488, %v2487
        %v2520 = vpack.c.b16 %v2490, %v2489
        %v2521 = vpack.c.b16 %v2492, %v2491
        %v2522 = vpack.c.b16 %v2494, %v2493
        %v2523 = vpack.c.b16 %v2496, %v2495
        %v2524 = vpack.c.b16 %v2498, %v2497
        %v2525 = vpack.c.b16 %v2500, %v2499
        %v2526 = vpack.c.b16 %v2502, %v2501
        %v2527 = vpack.c.b16 %v2504, %v2503
        %v2528 = vpack.c.b16 %v2506, %v2505
        %v2529 = vpack.c.b16 %v2508, %v2507
        %v2530 = vpack.c.b16 %v2510, %v2509
        %v2531 = vpack.c.b16 %v2512, %v2511
        %v2532 = vpack.c.b16 %v2514, %v2513
        %v2533 = vpack.c.b16 %v2516, %v2515
        %v2534 = vpack.c.b16 %v2518, %v2517
        %v2551 = vld [vmem:[#allocation8] sm:$0xf]
        %v2552 = vld [vmem:[#allocation8 + $0x4] sm:$0xf]
        %v2553 = vld [vmem:[#allocation8 + $0x8] sm:$0xf]
        %v2554 = vld [vmem:[#allocation8 + $0xc] sm:$0xf]
        %v2555 = vld [vmem:[#allocation8 + $0x10] sm:$0xf]
        %v2556 = vld [vmem:[#allocation8 + $0x14] sm:$0xf]
        %v2557 = vld [vmem:[#allocation8 + $0x18] sm:$0xf]
        %v2558 = vld [vmem:[#allocation8 + $0x1c] sm:$0xf]
        %v2559 = vld [vmem:[#allocation8 + $0x20] sm:$0xf]
        %v2560 = vld [vmem:[#allocation8 + $0x24] sm:$0xf]
        %v2561 = vld [vmem:[#allocation8 + $0x28] sm:$0xf]
        %v2562 = vld [vmem:[#allocation8 + $0x2c] sm:$0xf]
        %v2563 = vld [vmem:[#allocation8 + $0x30] sm:$0xf]
        %v2564 = vld [vmem:[#allocation8 + $0x34] sm:$0xf]
        %v2565 = vld [vmem:[#allocation8 + $0x38] sm:$0xf]
        %v2566 = vld [vmem:[#allocation8 + $0x3c] sm:$0xf]
        %v2567 = vld [vmem:[#allocation8 + $0x40] sm:$0xf]
        %v2568 = vld [vmem:[#allocation8 + $0x44] sm:$0xf]
        %v2569 = vld [vmem:[#allocation8 + $0x48] sm:$0xf]
        %v2570 = vld [vmem:[#allocation8 + $0x4c] sm:$0xf]
        %v2571 = vld [vmem:[#allocation8 + $0x50] sm:$0xf]
        %v2572 = vld [vmem:[#allocation8 + $0x54] sm:$0xf]
        %v2573 = vld [vmem:[#allocation8 + $0x58] sm:$0xf]
        %v2574 = vld [vmem:[#allocation8 + $0x5c] sm:$0xf]
        %v2575 = vld [vmem:[#allocation8 + $0x60] sm:$0xf]
        %v2576 = vld [vmem:[#allocation8 + $0x64] sm:$0xf]
        %v2577 = vld [vmem:[#allocation8 + $0x68] sm:$0xf]
        %v2578 = vld [vmem:[#allocation8 + $0x6c] sm:$0xf]
        %v2579 = vld [vmem:[#allocation8 + $0x70] sm:$0xf]
        %v2580 = vld [vmem:[#allocation8 + $0x74] sm:$0xf]
        %v2581 = vld [vmem:[#allocation8 + $0x78] sm:$0xf]
        %v2582 = vld [vmem:[#allocation8 + $0x7c] sm:$0xf]
        %v2615 = vunpack.c.l.b16 %v2551
        %v2616 = vunpack.c.l.b16 %v2552
        %v2617 = vunpack.c.l.b16 %v2553
        %v2618 = vunpack.c.l.b16 %v2554
        %v2619 = vunpack.c.l.b16 %v2555
        %v2620 = vunpack.c.l.b16 %v2556
        %v2621 = vunpack.c.l.b16 %v2557
        %v2622 = vunpack.c.l.b16 %v2558
        %v2623 = vunpack.c.l.b16 %v2559
        %v2624 = vunpack.c.l.b16 %v2560
        %v2625 = vunpack.c.l.b16 %v2561
        %v2626 = vunpack.c.l.b16 %v2562
        %v2627 = vunpack.c.l.b16 %v2563
        %v2628 = vunpack.c.l.b16 %v2564
        %v2629 = vunpack.c.l.b16 %v2565
        %v2630 = vunpack.c.l.b16 %v2566
        %v2631 = vunpack.c.l.b16 %v2567
        %v2632 = vunpack.c.l.b16 %v2568
        %v2633 = vunpack.c.l.b16 %v2569
        %v2634 = vunpack.c.l.b16 %v2570
        %v2635 = vunpack.c.l.b16 %v2571
        %v2636 = vunpack.c.l.b16 %v2572
        %v2637 = vunpack.c.l.b16 %v2573
        %v2638 = vunpack.c.l.b16 %v2574
        %v2639 = vunpack.c.l.b16 %v2575
        %v2640 = vunpack.c.l.b16 %v2576
        %v2641 = vunpack.c.l.b16 %v2577
        %v2642 = vunpack.c.l.b16 %v2578
        %v2643 = vunpack.c.l.b16 %v2579
        %v2644 = vunpack.c.l.b16 %v2580
        %v2645 = vunpack.c.l.b16 %v2581
        %v2646 = vunpack.c.l.b16 %v2582
        %v2647 = vpack.c.b16 %v2616, %v2615
        %v2648 = vpack.c.b16 %v2618, %v2617
        %v2649 = vpack.c.b16 %v2620, %v2619
        %v2650 = vpack.c.b16 %v2622, %v2621
        %v2651 = vpack.c.b16 %v2624, %v2623
        %v2652 = vpack.c.b16 %v2626, %v2625
        %v2653 = vpack.c.b16 %v2628, %v2627
        %v2654 = vpack.c.b16 %v2630, %v2629
        %v2655 = vpack.c.b16 %v2632, %v2631
        %v2656 = vpack.c.b16 %v2634, %v2633
        %v2657 = vpack.c.b16 %v2636, %v2635
        %v2658 = vpack.c.b16 %v2638, %v2637
        %v2659 = vpack.c.b16 %v2640, %v2639
        %v2660 = vpack.c.b16 %v2642, %v2641
        %v2661 = vpack.c.b16 %v2644, %v2643
        %v2662 = vpack.c.b16 %v2646, %v2645
        %2679 = vmatpush.bf16.msra.mxu0 %v2654
        %2680 = vmatpush.bf16.msra.mxu0 %v2653
        %2681 = vmatpush.bf16.msra.mxu0 %v2652
        %2682 = vmatpush.bf16.msra.mxu0 %v2651
        %2683 = vmatpush.bf16.msra.mxu0 %v2650
        %2684 = vmatpush.bf16.msra.mxu0 %v2649
        %2685 = vmatpush.bf16.msra.mxu0 %v2648
        %2686 = vmatpush.bf16.msra.mxu0 %v2647
        %2687 = vmatmul.bf16.gmra.mxu0 %v2423
        %v2688 = vpop.f32.mrf.mxu0
        %v2689 = vadd.f32 0.0, %v2688
        %v2690 = vpop.f32.mrf.mxu0
        %v2691 = vadd.f32 0.0, %v2690
        %2692 = vmatmul.bf16.gmra.mxu0 %v2424
        %v2693 = vpop.f32.mrf.mxu0
        %v2694 = vadd.f32 0.0, %v2693
        %v2695 = vpop.f32.mrf.mxu0
        %v2696 = vadd.f32 0.0, %v2695
        %2697 = vmatmul.bf16.gmra.mxu0 %v2425
        %v2698 = vpop.f32.mrf.mxu0
        %v2699 = vadd.f32 0.0, %v2698
        %v2700 = vpop.f32.mrf.mxu0
        %v2701 = vadd.f32 0.0, %v2700
        %2702 = vmatmul.bf16.gmra.mxu0 %v2426
        %v2703 = vpop.f32.mrf.mxu0
        %v2704 = vadd.f32 0.0, %v2703
        %v2705 = vpop.f32.mrf.mxu0
        %v2706 = vadd.f32 0.0, %v2705
        %2707 = vmatmul.bf16.gmra.mxu0 %v2427
        %v2708 = vpop.f32.mrf.mxu0
        %v2709 = vadd.f32 0.0, %v2708
        %v2710 = vpop.f32.mrf.mxu0
        %v2711 = vadd.f32 0.0, %v2710
        %2712 = vmatmul.bf16.gmra.mxu0 %v2428
        %v2713 = vpop.f32.mrf.mxu0
        %v2714 = vadd.f32 0.0, %v2713
        %v2715 = vpop.f32.mrf.mxu0
        %v2716 = vadd.f32 0.0, %v2715
        %2717 = vmatmul.bf16.gmra.mxu0 %v2429
        %v2718 = vpop.f32.mrf.mxu0
        %v2719 = vadd.f32 0.0, %v2718
        %v2720 = vpop.f32.mrf.mxu0
        %v2721 = vadd.f32 0.0, %v2720
        %2722 = vmatmul.bf16.gmra.mxu0 %v2430
        %v2723 = vpop.f32.mrf.mxu0
        %v2724 = vadd.f32 0.0, %v2723
        %v2725 = vpop.f32.mrf.mxu0
        %v2726 = vadd.f32 0.0, %v2725
        %2727 = vmatmul.bf16.gmra.mxu0 %v2431
        %v2728 = vpop.f32.mrf.mxu0
        %v2729 = vadd.f32 0.0, %v2728
        %v2730 = vpop.f32.mrf.mxu0
        %v2731 = vadd.f32 0.0, %v2730
        %2732 = vmatmul.bf16.gmra.mxu0 %v2432
        %v2733 = vpop.f32.mrf.mxu0
        %v2734 = vadd.f32 0.0, %v2733
        %v2735 = vpop.f32.mrf.mxu0
        %v2736 = vadd.f32 0.0, %v2735
        %2737 = vmatmul.bf16.gmra.mxu0 %v2433
        %v2738 = vpop.f32.mrf.mxu0
        %v2739 = vadd.f32 0.0, %v2738
        %v2740 = vpop.f32.mrf.mxu0
        %v2741 = vadd.f32 0.0, %v2740
        %2742 = vmatmul.bf16.gmra.mxu0 %v2434
        %v2743 = vpop.f32.mrf.mxu0
        %v2744 = vadd.f32 0.0, %v2743
        %v2745 = vpop.f32.mrf.mxu0
        %v2746 = vadd.f32 0.0, %v2745
        %2747 = vmatmul.bf16.gmra.mxu0 %v2435
        %v2748 = vpop.f32.mrf.mxu0
        %v2749 = vadd.f32 0.0, %v2748
        %v2750 = vpop.f32.mrf.mxu0
        %v2751 = vadd.f32 0.0, %v2750
        %2752 = vmatmul.bf16.gmra.mxu0 %v2436
        %v2753 = vpop.f32.mrf.mxu0
        %v2754 = vadd.f32 0.0, %v2753
        %v2755 = vpop.f32.mrf.mxu0
        %v2756 = vadd.f32 0.0, %v2755
        %2757 = vmatmul.bf16.gmra.mxu0 %v2437
        %v2758 = vpop.f32.mrf.mxu0
        %v2759 = vadd.f32 0.0, %v2758
        %v2760 = vpop.f32.mrf.mxu0
        %v2761 = vadd.f32 0.0, %v2760
        %2762 = vmatmul.bf16.gmra.mxu0 %v2438
        %v2763 = vpop.f32.mrf.mxu0
        %v2764 = vadd.f32 0.0, %v2763
        %v2765 = vpop.f32.mrf.mxu0
        %v2766 = vadd.f32 0.0, %v2765
        %2767 = vdwg.mxu0
        %2768 = vmatpush.bf16.msra.mxu0 %v2662
        %2769 = vmatpush.bf16.msra.mxu0 %v2661
        %2770 = vmatpush.bf16.msra.mxu0 %v2660
        %2771 = vmatpush.bf16.msra.mxu0 %v2659
        %2772 = vmatpush.bf16.msra.mxu0 %v2658
        %2773 = vmatpush.bf16.msra.mxu0 %v2657
        %2774 = vmatpush.bf16.msra.mxu0 %v2656
        %2775 = vmatpush.bf16.msra.mxu0 %v2655
        %2776 = vmatmul.bf16.gmra.mxu0 %v2519
        %v2777 = vpop.f32.mrf.mxu0
        %v2778 = vadd.f32 %v2689, %v2777
        %v2779 = vpop.f32.mrf.mxu0
        %v2780 = vadd.f32 %v2691, %v2779
        %2781 = vmatmul.bf16.gmra.mxu0 %v2520
        %v2782 = vpop.f32.mrf.mxu0
        %v2783 = vadd.f32 %v2694, %v2782
        %v2784 = vpop.f32.mrf.mxu0
        %v2785 = vadd.f32 %v2696, %v2784
        %2786 = vmatmul.bf16.gmra.mxu0 %v2521
        %v2787 = vpop.f32.mrf.mxu0
        %v2788 = vadd.f32 %v2699, %v2787
        %v2789 = vpop.f32.mrf.mxu0
        %v2790 = vadd.f32 %v2701, %v2789
        %2791 = vmatmul.bf16.gmra.mxu0 %v2522
        %v2792 = vpop.f32.mrf.mxu0
        %v2793 = vadd.f32 %v2704, %v2792
        %v2794 = vpop.f32.mrf.mxu0
        %v2795 = vadd.f32 %v2706, %v2794
        %2796 = vmatmul.bf16.gmra.mxu0 %v2523
        %v2797 = vpop.f32.mrf.mxu0
        %v2798 = vadd.f32 %v2709, %v2797
        %v2799 = vpop.f32.mrf.mxu0
        %v2800 = vadd.f32 %v2711, %v2799
        %2801 = vmatmul.bf16.gmra.mxu0 %v2524
        %v2802 = vpop.f32.mrf.mxu0
        %v2803 = vadd.f32 %v2714, %v2802
        %v2804 = vpop.f32.mrf.mxu0
        %v2805 = vadd.f32 %v2716, %v2804
        %2806 = vmatmul.bf16.gmra.mxu0 %v2525
        %v2807 = vpop.f32.mrf.mxu0
        %v2808 = vadd.f32 %v2719, %v2807
        %v2809 = vpop.f32.mrf.mxu0
        %v2810 = vadd.f32 %v2721, %v2809
        %2811 = vmatmul.bf16.gmra.mxu0 %v2526
        %v2812 = vpop.f32.mrf.mxu0
        %v2813 = vadd.f32 %v2724, %v2812
        %v2814 = vpop.f32.mrf.mxu0
        %v2815 = vadd.f32 %v2726, %v2814
        %2816 = vmatmul.bf16.gmra.mxu0 %v2527
        %v2817 = vpop.f32.mrf.mxu0
        %v2818 = vadd.f32 %v2729, %v2817
        %v2819 = vpop.f32.mrf.mxu0
        %v2820 = vadd.f32 %v2731, %v2819
        %2821 = vmatmul.bf16.gmra.mxu0 %v2528
        %v2822 = vpop.f32.mrf.mxu0
        %v2823 = vadd.f32 %v2734, %v2822
        %v2824 = vpop.f32.mrf.mxu0
        %v2825 = vadd.f32 %v2736, %v2824
        %2826 = vmatmul.bf16.gmra.mxu0 %v2529
        %v2827 = vpop.f32.mrf.mxu0
        %v2828 = vadd.f32 %v2739, %v2827
        %v2829 = vpop.f32.mrf.mxu0
        %v2830 = vadd.f32 %v2741, %v2829
        %2831 = vmatmul.bf16.gmra.mxu0 %v2530
        %v2832 = vpop.f32.mrf.mxu0
        %v2833 = vadd.f32 %v2744, %v2832
        %v2834 = vpop.f32.mrf.mxu0
        %v2835 = vadd.f32 %v2746, %v2834
        %2836 = vmatmul.bf16.gmra.mxu0 %v2531
        %v2837 = vpop.f32.mrf.mxu0
        %v2838 = vadd.f32 %v2749, %v2837
        %v2839 = vpop.f32.mrf.mxu0
        %v2840 = vadd.f32 %v2751, %v2839
        %2841 = vmatmul.bf16.gmra.mxu0 %v2532
        %v2842 = vpop.f32.mrf.mxu0
        %v2843 = vadd.f32 %v2754, %v2842
        %v2844 = vpop.f32.mrf.mxu0
        %v2845 = vadd.f32 %v2756, %v2844
        %2846 = vmatmul.bf16.gmra.mxu0 %v2533
        %v2847 = vpop.f32.mrf.mxu0
        %v2848 = vadd.f32 %v2759, %v2847
        %v2849 = vpop.f32.mrf.mxu0
        %v2850 = vadd.f32 %v2761, %v2849
        %2851 = vmatmul.bf16.gmra.mxu0 %v2534
        %v2852 = vpop.f32.mrf.mxu0
        %v2853 = vadd.f32 %v2764, %v2852
        %v2854 = vpop.f32.mrf.mxu0
        %v2855 = vadd.f32 %v2766, %v2854
        %2856 = vdwg.mxu0
        %v2857 = vmul.f32 %v2778, %v2778
        %v2858 = vmul.f32 %v2780, %v2780
        %v2859 = vmul.f32 %v2783, %v2783
        %v2860 = vmul.f32 %v2785, %v2785
        %v2861 = vmul.f32 %v2788, %v2788
        %v2862 = vmul.f32 %v2790, %v2790
        %v2863 = vmul.f32 %v2793, %v2793
        %v2864 = vmul.f32 %v2795, %v2795
        %v2865 = vmul.f32 %v2798, %v2798
        %v2866 = vmul.f32 %v2800, %v2800
        %v2867 = vmul.f32 %v2803, %v2803
        %v2868 = vmul.f32 %v2805, %v2805
        %v2869 = vmul.f32 %v2808, %v2808
        %v2870 = vmul.f32 %v2810, %v2810
        %v2871 = vmul.f32 %v2813, %v2813
        %v2872 = vmul.f32 %v2815, %v2815
        %v2873 = vmul.f32 %v2818, %v2818
        %v2874 = vmul.f32 %v2820, %v2820
        %v2875 = vmul.f32 %v2823, %v2823
        %v2876 = vmul.f32 %v2825, %v2825
        %v2877 = vmul.f32 %v2828, %v2828
        %v2878 = vmul.f32 %v2830, %v2830
        %v2879 = vmul.f32 %v2833, %v2833
        %v2880 = vmul.f32 %v2835, %v2835
        %v2881 = vmul.f32 %v2838, %v2838
        %v2882 = vmul.f32 %v2840, %v2840
        %v2883 = vmul.f32 %v2843, %v2843
        %v2884 = vmul.f32 %v2845, %v2845
        %v2885 = vmul.f32 %v2848, %v2848
        %v2886 = vmul.f32 %v2850, %v2850
        %v2887 = vmul.f32 %v2853, %v2853
        %v2888 = vmul.f32 %v2855, %v2855
        %v2889 = vpack.c.bf16 %v2857, %v2857
        %v2890 = vpack.c.bf16 %v2858, %v2858
        %v2891 = vpack.c.bf16 %v2859, %v2859
        %v2892 = vpack.c.bf16 %v2860, %v2860
        %v2893 = vpack.c.bf16 %v2861, %v2861
        %v2894 = vpack.c.bf16 %v2862, %v2862
        %v2895 = vpack.c.bf16 %v2863, %v2863
        %v2896 = vpack.c.bf16 %v2864, %v2864
        %v2897 = vpack.c.bf16 %v2865, %v2865
        %v2898 = vpack.c.bf16 %v2866, %v2866
        %v2899 = vpack.c.bf16 %v2867, %v2867
        %v2900 = vpack.c.bf16 %v2868, %v2868
        %v2901 = vpack.c.bf16 %v2869, %v2869
        %v2902 = vpack.c.bf16 %v2870, %v2870
        %v2903 = vpack.c.bf16 %v2871, %v2871
        %v2904 = vpack.c.bf16 %v2872, %v2872
        %v2905 = vpack.c.bf16 %v2873, %v2873
        %v2906 = vpack.c.bf16 %v2874, %v2874
        %v2907 = vpack.c.bf16 %v2875, %v2875
        %v2908 = vpack.c.bf16 %v2876, %v2876
        %v2909 = vpack.c.bf16 %v2877, %v2877
        %v2910 = vpack.c.bf16 %v2878, %v2878
        %v2911 = vpack.c.bf16 %v2879, %v2879
        %v2912 = vpack.c.bf16 %v2880, %v2880
        %v2913 = vpack.c.bf16 %v2881, %v2881
        %v2914 = vpack.c.bf16 %v2882, %v2882
        %v2915 = vpack.c.bf16 %v2883, %v2883
        %v2916 = vpack.c.bf16 %v2884, %v2884
        %v2917 = vpack.c.bf16 %v2885, %v2885
        %v2918 = vpack.c.bf16 %v2886, %v2886
        %v2919 = vpack.c.bf16 %v2887, %v2887
        %v2920 = vpack.c.bf16 %v2888, %v2888
        %v2921 = vld [vmem:[#allocation7] sm:$0xf]
        %v2922 = vld [vmem:[#allocation7 + $0x4] sm:$0xf]
        %v2923 = vld [vmem:[#allocation7 + $0x8] sm:$0xf]
        %v2924 = vld [vmem:[#allocation7 + $0xc] sm:$0xf]
        %v2925 = vld [vmem:[#allocation7 + $0x10] sm:$0xf]
        %v2926 = vld [vmem:[#allocation7 + $0x14] sm:$0xf]
        %v2927 = vld [vmem:[#allocation7 + $0x18] sm:$0xf]
        %v2928 = vld [vmem:[#allocation7 + $0x1c] sm:$0xf]
        %v2929 = vld [vmem:[#allocation7 + $0x20] sm:$0xf]
        %v2930 = vld [vmem:[#allocation7 + $0x24] sm:$0xf]
        %v2931 = vld [vmem:[#allocation7 + $0x28] sm:$0xf]
        %v2932 = vld [vmem:[#allocation7 + $0x2c] sm:$0xf]
        %v2933 = vld [vmem:[#allocation7 + $0x30] sm:$0xf]
        %v2934 = vld [vmem:[#allocation7 + $0x34] sm:$0xf]
        %v2935 = vld [vmem:[#allocation7 + $0x38] sm:$0xf]
        %v2936 = vld [vmem:[#allocation7 + $0x3c] sm:$0xf]
        %v2953 = vunpack.c.l.b16 %v2921
        %v2954 = vunpack.c.l.b16 %v2922
        %v2955 = vunpack.c.l.b16 %v2923
        %v2956 = vunpack.c.l.b16 %v2924
        %v2957 = vunpack.c.l.b16 %v2925
        %v2958 = vunpack.c.l.b16 %v2926
        %v2959 = vunpack.c.l.b16 %v2927
        %v2960 = vunpack.c.l.b16 %v2928
        %v2961 = vunpack.c.l.b16 %v2929
        %v2962 = vunpack.c.l.b16 %v2930
        %v2963 = vunpack.c.l.b16 %v2931
        %v2964 = vunpack.c.l.b16 %v2932
        %v2965 = vunpack.c.l.b16 %v2933
        %v2966 = vunpack.c.l.b16 %v2934
        %v2967 = vunpack.c.l.b16 %v2935
        %v2968 = vunpack.c.l.b16 %v2936
        %v2969 = vpack.c.b16 %v2954, %v2953
        %v2970 = vpack.c.b16 %v2956, %v2955
        %v2971 = vpack.c.b16 %v2958, %v2957
        %v2972 = vpack.c.b16 %v2960, %v2959
        %v2973 = vpack.c.b16 %v2962, %v2961
        %v2974 = vpack.c.b16 %v2964, %v2963
        %v2975 = vpack.c.b16 %v2966, %v2965
        %v2976 = vpack.c.b16 %v2968, %v2967
        %2985 = vmatpush.bf16.msra.mxu0 %v2976
        %2986 = vmatpush.bf16.msra.mxu0 %v2975
        %2987 = vmatpush.bf16.msra.mxu0 %v2974
        %2988 = vmatpush.bf16.msra.mxu0 %v2973
        %2989 = vmatpush.bf16.msra.mxu0 %v2972
        %2990 = vmatpush.bf16.msra.mxu0 %v2971
        %2991 = vmatpush.bf16.msra.mxu0 %v2970
        %2992 = vmatpush.bf16.msra.mxu0 %v2969
        %2993 = vmatmul.bf16.gmra.mxu0 %v383
        %v2994 = vpop.f32.mrf.mxu0
        %v2995 = vadd.f32 0.0, %v2994
        %v2996 = vpop.f32.mrf.mxu0
        %v2997 = vadd.f32 0.0, %v2996
        %2998 = vmatmul.bf16.gmra.mxu0 %v384
        %v2999 = vpop.f32.mrf.mxu0
        %v3000 = vadd.f32 0.0, %v2999
        %v3001 = vpop.f32.mrf.mxu0
        %v3002 = vadd.f32 0.0, %v3001
        %3003 = vmatmul.bf16.gmra.mxu0 %v385
        %v3004 = vpop.f32.mrf.mxu0
        %v3005 = vadd.f32 0.0, %v3004
        %v3006 = vpop.f32.mrf.mxu0
        %v3007 = vadd.f32 0.0, %v3006
        %3008 = vmatmul.bf16.gmra.mxu0 %v386
        %v3009 = vpop.f32.mrf.mxu0
        %v3010 = vadd.f32 0.0, %v3009
        %v3011 = vpop.f32.mrf.mxu0
        %v3012 = vadd.f32 0.0, %v3011
        %3013 = vmatmul.bf16.gmra.mxu0 %v387
        %v3014 = vpop.f32.mrf.mxu0
        %v3015 = vadd.f32 0.0, %v3014
        %v3016 = vpop.f32.mrf.mxu0
        %v3017 = vadd.f32 0.0, %v3016
        %3018 = vmatmul.bf16.gmra.mxu0 %v388
        %v3019 = vpop.f32.mrf.mxu0
        %v3020 = vadd.f32 0.0, %v3019
        %v3021 = vpop.f32.mrf.mxu0
        %v3022 = vadd.f32 0.0, %v3021
        %3023 = vmatmul.bf16.gmra.mxu0 %v389
        %v3024 = vpop.f32.mrf.mxu0
        %v3025 = vadd.f32 0.0, %v3024
        %v3026 = vpop.f32.mrf.mxu0
        %v3027 = vadd.f32 0.0, %v3026
        %3028 = vmatmul.bf16.gmra.mxu0 %v390
        %v3029 = vpop.f32.mrf.mxu0
        %v3030 = vadd.f32 0.0, %v3029
        %v3031 = vpop.f32.mrf.mxu0
        %v3032 = vadd.f32 0.0, %v3031
        %3033 = vmatmul.bf16.gmra.mxu0 %v391
        %v3034 = vpop.f32.mrf.mxu0
        %v3035 = vadd.f32 0.0, %v3034
        %v3036 = vpop.f32.mrf.mxu0
        %v3037 = vadd.f32 0.0, %v3036
        %3038 = vmatmul.bf16.gmra.mxu0 %v392
        %v3039 = vpop.f32.mrf.mxu0
        %v3040 = vadd.f32 0.0, %v3039
        %v3041 = vpop.f32.mrf.mxu0
        %v3042 = vadd.f32 0.0, %v3041
        %3043 = vmatmul.bf16.gmra.mxu0 %v393
        %v3044 = vpop.f32.mrf.mxu0
        %v3045 = vadd.f32 0.0, %v3044
        %v3046 = vpop.f32.mrf.mxu0
        %v3047 = vadd.f32 0.0, %v3046
        %3048 = vmatmul.bf16.gmra.mxu0 %v394
        %v3049 = vpop.f32.mrf.mxu0
        %v3050 = vadd.f32 0.0, %v3049
        %v3051 = vpop.f32.mrf.mxu0
        %v3052 = vadd.f32 0.0, %v3051
        %3053 = vmatmul.bf16.gmra.mxu0 %v395
        %v3054 = vpop.f32.mrf.mxu0
        %v3055 = vadd.f32 0.0, %v3054
        %v3056 = vpop.f32.mrf.mxu0
        %v3057 = vadd.f32 0.0, %v3056
        %3058 = vmatmul.bf16.gmra.mxu0 %v396
        %v3059 = vpop.f32.mrf.mxu0
        %v3060 = vadd.f32 0.0, %v3059
        %v3061 = vpop.f32.mrf.mxu0
        %v3062 = vadd.f32 0.0, %v3061
        %3063 = vmatmul.bf16.gmra.mxu0 %v397
        %v3064 = vpop.f32.mrf.mxu0
        %v3065 = vadd.f32 0.0, %v3064
        %v3066 = vpop.f32.mrf.mxu0
        %v3067 = vadd.f32 0.0, %v3066
        %3068 = vmatmul.bf16.gmra.mxu0 %v398
        %v3069 = vpop.f32.mrf.mxu0
        %v3070 = vadd.f32 0.0, %v3069
        %v3071 = vpop.f32.mrf.mxu0
        %v3072 = vadd.f32 0.0, %v3071
        %3073 = vdwg.mxu0
        %v3074 = vpack.c.bf16 %v2995, %v2995
        %v3075 = vpack.c.bf16 %v2997, %v2997
        %v3076 = vpack.c.bf16 %v3000, %v3000
        %v3077 = vpack.c.bf16 %v3002, %v3002
        %v3078 = vpack.c.bf16 %v3005, %v3005
        %v3079 = vpack.c.bf16 %v3007, %v3007
        %v3080 = vpack.c.bf16 %v3010, %v3010
        %v3081 = vpack.c.bf16 %v3012, %v3012
        %v3082 = vpack.c.bf16 %v3015, %v3015
        %v3083 = vpack.c.bf16 %v3017, %v3017
        %v3084 = vpack.c.bf16 %v3020, %v3020
        %v3085 = vpack.c.bf16 %v3022, %v3022
        %v3086 = vpack.c.bf16 %v3025, %v3025
        %v3087 = vpack.c.bf16 %v3027, %v3027
        %v3088 = vpack.c.bf16 %v3030, %v3030
        %v3089 = vpack.c.bf16 %v3032, %v3032
        %v3090 = vpack.c.bf16 %v3035, %v3035
        %v3091 = vpack.c.bf16 %v3037, %v3037
        %v3092 = vpack.c.bf16 %v3040, %v3040
        %v3093 = vpack.c.bf16 %v3042, %v3042
        %v3094 = vpack.c.bf16 %v3045, %v3045
        %v3095 = vpack.c.bf16 %v3047, %v3047
        %v3096 = vpack.c.bf16 %v3050, %v3050
        %v3097 = vpack.c.bf16 %v3052, %v3052
        %v3098 = vpack.c.bf16 %v3055, %v3055
        %v3099 = vpack.c.bf16 %v3057, %v3057
        %v3100 = vpack.c.bf16 %v3060, %v3060
        %v3101 = vpack.c.bf16 %v3062, %v3062
        %v3102 = vpack.c.bf16 %v3065, %v3065
        %v3103 = vpack.c.bf16 %v3067, %v3067
        %v3104 = vpack.c.bf16 %v3070, %v3070
        %v3105 = vpack.c.bf16 %v3072, %v3072
        %v3122 = vunpack.c.l.b16 %v2889
        %v3123 = vunpack.c.l.b16 %v2890
        %v3124 = vunpack.c.l.b16 %v2891
        %v3125 = vunpack.c.l.b16 %v2892
        %v3126 = vunpack.c.l.b16 %v2893
        %v3127 = vunpack.c.l.b16 %v2894
        %v3128 = vunpack.c.l.b16 %v2895
        %v3129 = vunpack.c.l.b16 %v2896
        %v3130 = vunpack.c.l.b16 %v2897
        %v3131 = vunpack.c.l.b16 %v2898
        %v3132 = vunpack.c.l.b16 %v2899
        %v3133 = vunpack.c.l.b16 %v2900
        %v3134 = vunpack.c.l.b16 %v2901
        %v3135 = vunpack.c.l.b16 %v2902
        %v3136 = vunpack.c.l.b16 %v2903
        %v3137 = vunpack.c.l.b16 %v2904
        %v3138 = vpack.c.b16 %v3123, %v3122
        %v3139 = vpack.c.b16 %v3125, %v3124
        %v3140 = vpack.c.b16 %v3127, %v3126
        %v3141 = vpack.c.b16 %v3129, %v3128
        %v3142 = vpack.c.b16 %v3131, %v3130
        %v3143 = vpack.c.b16 %v3133, %v3132
        %v3144 = vpack.c.b16 %v3135, %v3134
        %v3145 = vpack.c.b16 %v3137, %v3136
        %v3170 = vunpack.c.l.b16 %v3074
        %v3171 = vunpack.c.l.b16 %v3075
        %v3172 = vunpack.c.l.b16 %v3076
        %v3173 = vunpack.c.l.b16 %v3077
        %v3174 = vunpack.c.l.b16 %v3078
        %v3175 = vunpack.c.l.b16 %v3079
        %v3176 = vunpack.c.l.b16 %v3080
        %v3177 = vunpack.c.l.b16 %v3081
        %v3178 = vunpack.c.l.b16 %v3082
        %v3179 = vunpack.c.l.b16 %v3083
        %v3180 = vunpack.c.l.b16 %v3084
        %v3181 = vunpack.c.l.b16 %v3085
        %v3182 = vunpack.c.l.b16 %v3086
        %v3183 = vunpack.c.l.b16 %v3087
        %v3184 = vunpack.c.l.b16 %v3088
        %v3185 = vunpack.c.l.b16 %v3089
        %v3186 = vpack.c.b16 %v3171, %v3170
        %v3187 = vpack.c.b16 %v3173, %v3172
        %v3188 = vpack.c.b16 %v3175, %v3174
        %v3189 = vpack.c.b16 %v3177, %v3176
        %v3190 = vpack.c.b16 %v3179, %v3178
        %v3191 = vpack.c.b16 %v3181, %v3180
        %v3192 = vpack.c.b16 %v3183, %v3182
        %v3193 = vpack.c.b16 %v3185, %v3184
        %3202 = vmatpush.bf16.msra.mxu0 %v3193
        %3203 = vmatpush.bf16.msra.mxu0 %v3192
        %3204 = vmatpush.bf16.msra.mxu0 %v3191
        %3205 = vmatpush.bf16.msra.mxu0 %v3190
        %3206 = vmatpush.bf16.msra.mxu0 %v3189
        %3207 = vmatpush.bf16.msra.mxu0 %v3188
        %3208 = vmatpush.bf16.msra.mxu0 %v3187
        %3209 = vmatpush.bf16.msra.mxu0 %v3186
        %3210 = vmatmul.bf16.gmra.mxu0 %v3138
        %v3211 = vpop.f32.mrf.mxu0
        %v3212 = vadd.f32 0.0, %v3211
        %v3213 = vpop.f32.mrf.mxu0
        %v3214 = vadd.f32 0.0, %v3213
        %3215 = vmatmul.bf16.gmra.mxu0 %v3139
        %v3216 = vpop.f32.mrf.mxu0
        %v3217 = vadd.f32 0.0, %v3216
        %v3218 = vpop.f32.mrf.mxu0
        %v3219 = vadd.f32 0.0, %v3218
        %3220 = vmatmul.bf16.gmra.mxu0 %v3140
        %v3221 = vpop.f32.mrf.mxu0
        %v3222 = vadd.f32 0.0, %v3221
        %v3223 = vpop.f32.mrf.mxu0
        %v3224 = vadd.f32 0.0, %v3223
        %3225 = vmatmul.bf16.gmra.mxu0 %v3141
        %v3226 = vpop.f32.mrf.mxu0
        %v3227 = vadd.f32 0.0, %v3226
        %v3228 = vpop.f32.mrf.mxu0
        %v3229 = vadd.f32 0.0, %v3228
        %3230 = vmatmul.bf16.gmra.mxu0 %v3142
        %v3231 = vpop.f32.mrf.mxu0
        %v3232 = vadd.f32 0.0, %v3231
        %v3233 = vpop.f32.mrf.mxu0
        %v3234 = vadd.f32 0.0, %v3233
        %3235 = vmatmul.bf16.gmra.mxu0 %v3143
        %v3236 = vpop.f32.mrf.mxu0
        %v3237 = vadd.f32 0.0, %v3236
        %v3238 = vpop.f32.mrf.mxu0
        %v3239 = vadd.f32 0.0, %v3238
        %3240 = vmatmul.bf16.gmra.mxu0 %v3144
        %v3241 = vpop.f32.mrf.mxu0
        %v3242 = vadd.f32 0.0, %v3241
        %v3243 = vpop.f32.mrf.mxu0
        %v3244 = vadd.f32 0.0, %v3243
        %3245 = vmatmul.bf16.gmra.mxu0 %v3145
        %v3246 = vpop.f32.mrf.mxu0
        %v3247 = vadd.f32 0.0, %v3246
        %v3248 = vpop.f32.mrf.mxu0
        %v3249 = vadd.f32 0.0, %v3248
        %3250 = vdwg.mxu0
        %v3267 = vunpack.c.l.b16 %v2905
        %v3268 = vunpack.c.l.b16 %v2906
        %v3269 = vunpack.c.l.b16 %v2907
        %v3270 = vunpack.c.l.b16 %v2908
        %v3271 = vunpack.c.l.b16 %v2909
        %v3272 = vunpack.c.l.b16 %v2910
        %v3273 = vunpack.c.l.b16 %v2911
        %v3274 = vunpack.c.l.b16 %v2912
        %v3275 = vunpack.c.l.b16 %v2913
        %v3276 = vunpack.c.l.b16 %v2914
        %v3277 = vunpack.c.l.b16 %v2915
        %v3278 = vunpack.c.l.b16 %v2916
        %v3279 = vunpack.c.l.b16 %v2917
        %v3280 = vunpack.c.l.b16 %v2918
        %v3281 = vunpack.c.l.b16 %v2919
        %v3282 = vunpack.c.l.b16 %v2920
        %v3283 = vpack.c.b16 %v3268, %v3267
        %v3284 = vpack.c.b16 %v3270, %v3269
        %v3285 = vpack.c.b16 %v3272, %v3271
        %v3286 = vpack.c.b16 %v3274, %v3273
        %v3287 = vpack.c.b16 %v3276, %v3275
        %v3288 = vpack.c.b16 %v3278, %v3277
        %v3289 = vpack.c.b16 %v3280, %v3279
        %v3290 = vpack.c.b16 %v3282, %v3281
        %v3315 = vunpack.c.l.b16 %v3090
        %v3316 = vunpack.c.l.b16 %v3091
        %v3317 = vunpack.c.l.b16 %v3092
        %v3318 = vunpack.c.l.b16 %v3093
        %v3319 = vunpack.c.l.b16 %v3094
        %v3320 = vunpack.c.l.b16 %v3095
        %v3321 = vunpack.c.l.b16 %v3096
        %v3322 = vunpack.c.l.b16 %v3097
        %v3323 = vunpack.c.l.b16 %v3098
        %v3324 = vunpack.c.l.b16 %v3099
        %v3325 = vunpack.c.l.b16 %v3100
        %v3326 = vunpack.c.l.b16 %v3101
        %v3327 = vunpack.c.l.b16 %v3102
        %v3328 = vunpack.c.l.b16 %v3103
        %v3329 = vunpack.c.l.b16 %v3104
        %v3330 = vunpack.c.l.b16 %v3105
        %v3331 = vpack.c.b16 %v3316, %v3315
        %v3332 = vpack.c.b16 %v3318, %v3317
        %v3333 = vpack.c.b16 %v3320, %v3319
        %v3334 = vpack.c.b16 %v3322, %v3321
        %v3335 = vpack.c.b16 %v3324, %v3323
        %v3336 = vpack.c.b16 %v3326, %v3325
        %v3337 = vpack.c.b16 %v3328, %v3327
        %v3338 = vpack.c.b16 %v3330, %v3329
        %3347 = vmatpush.bf16.msra.mxu0 %v3338
        %3348 = vmatpush.bf16.msra.mxu0 %v3337
        %3349 = vmatpush.bf16.msra.mxu0 %v3336
        %3350 = vmatpush.bf16.msra.mxu0 %v3335
        %3351 = vmatpush.bf16.msra.mxu0 %v3334
        %3352 = vmatpush.bf16.msra.mxu0 %v3333
        %3353 = vmatpush.bf16.msra.mxu0 %v3332
        %3354 = vmatpush.bf16.msra.mxu0 %v3331
        %3355 = vmatmul.bf16.gmra.mxu0 %v3283
        %v3356 = vpop.f32.mrf.mxu0
        %v3357 = vadd.f32 0.0, %v3356
        %v3358 = vpop.f32.mrf.mxu0
        %v3359 = vadd.f32 0.0, %v3358
        %3360 = vmatmul.bf16.gmra.mxu0 %v3284
        %v3361 = vpop.f32.mrf.mxu0
        %v3362 = vadd.f32 0.0, %v3361
        %v3363 = vpop.f32.mrf.mxu0
        %v3364 = vadd.f32 0.0, %v3363
        %3365 = vmatmul.bf16.gmra.mxu0 %v3285
        %v3366 = vpop.f32.mrf.mxu0
        %v3367 = vadd.f32 0.0, %v3366
        %v3368 = vpop.f32.mrf.mxu0
        %v3369 = vadd.f32 0.0, %v3368
        %3370 = vmatmul.bf16.gmra.mxu0 %v3286
        %v3371 = vpop.f32.mrf.mxu0
        %v3372 = vadd.f32 0.0, %v3371
        %v3373 = vpop.f32.mrf.mxu0
        %v3374 = vadd.f32 0.0, %v3373
        %3375 = vmatmul.bf16.gmra.mxu0 %v3287
        %v3376 = vpop.f32.mrf.mxu0
        %v3377 = vadd.f32 0.0, %v3376
        %v3378 = vpop.f32.mrf.mxu0
        %v3379 = vadd.f32 0.0, %v3378
        %3380 = vmatmul.bf16.gmra.mxu0 %v3288
        %v3381 = vpop.f32.mrf.mxu0
        %v3382 = vadd.f32 0.0, %v3381
        %v3383 = vpop.f32.mrf.mxu0
        %v3384 = vadd.f32 0.0, %v3383
        %3385 = vmatmul.bf16.gmra.mxu0 %v3289
        %v3386 = vpop.f32.mrf.mxu0
        %v3387 = vadd.f32 0.0, %v3386
        %v3388 = vpop.f32.mrf.mxu0
        %v3389 = vadd.f32 0.0, %v3388
        %3390 = vmatmul.bf16.gmra.mxu0 %v3290
        %v3391 = vpop.f32.mrf.mxu0
        %v3392 = vadd.f32 0.0, %v3391
        %v3393 = vpop.f32.mrf.mxu0
        %v3394 = vadd.f32 0.0, %v3393
        %3395 = vdwg.mxu0
        %3396 = vst [vmem:[%s268] sm:$0xff] %v3212
        %3397 = vst [vmem:[%s268 + $0x8] sm:$0xff] %v3214
        %3398 = vst [vmem:[%s268 + $0x10] sm:$0xff] %v3217
        %3399 = vst [vmem:[%s268 + $0x18] sm:$0xff] %v3219
        %3400 = vst [vmem:[%s268 + $0x20] sm:$0xff] %v3222
        %3401 = vst [vmem:[%s268 + $0x28] sm:$0xff] %v3224
        %3402 = vst [vmem:[%s268 + $0x30] sm:$0xff] %v3227
        %3403 = vst [vmem:[%s268 + $0x38] sm:$0xff] %v3229
        %3404 = vst [vmem:[%s268 + $0x40] sm:$0xff] %v3232
        %3405 = vst [vmem:[%s268 + $0x48] sm:$0xff] %v3234
        %3406 = vst [vmem:[%s268 + $0x50] sm:$0xff] %v3237
        %3407 = vst [vmem:[%s268 + $0x58] sm:$0xff] %v3239
        %3408 = vst [vmem:[%s268 + $0x60] sm:$0xff] %v3242
        %3409 = vst [vmem:[%s268 + $0x68] sm:$0xff] %v3244
        %3410 = vst [vmem:[%s268 + $0x70] sm:$0xff] %v3247
        %3411 = vst [vmem:[%s268 + $0x78] sm:$0xff] %v3249
        %3412 = vst [vmem:[%s268 + $0x80] sm:$0xff] %v3357
        %3413 = vst [vmem:[%s268 + $0x88] sm:$0xff] %v3359
        %3414 = vst [vmem:[%s268 + $0x90] sm:$0xff] %v3362
        %3415 = vst [vmem:[%s268 + $0x98] sm:$0xff] %v3364
        %3416 = vst [vmem:[%s268 + $0xa0] sm:$0xff] %v3367
        %3417 = vst [vmem:[%s268 + $0xa8] sm:$0xff] %v3369
        %3418 = vst [vmem:[%s268 + $0xb0] sm:$0xff] %v3372
        %3419 = vst [vmem:[%s268 + $0xb8] sm:$0xff] %v3374
        %3420 = vst [vmem:[%s268 + $0xc0] sm:$0xff] %v3377
        %3421 = vst [vmem:[%s268 + $0xc8] sm:$0xff] %v3379
        %3422 = vst [vmem:[%s268 + $0xd0] sm:$0xff] %v3382
        %3423 = vst [vmem:[%s268 + $0xd8] sm:$0xff] %v3384
        %3424 = vst [vmem:[%s268 + $0xe0] sm:$0xff] %v3387
        %3425 = vst [vmem:[%s268 + $0xe8] sm:$0xff] %v3389
        %3426 = vst [vmem:[%s268 + $0xf0] sm:$0xff] %v3392
        %3427 = vst [vmem:[%s268 + $0xf8] sm:$0xff] %v3394
        %s3428 = sand.u32 %s120, 1
        %s3429 = scalar_lea.sflag [#allocation4], %s3428
        %s3430 = sand.u32 %s120, 1
        %s3431 = smul.addr %s3430, 256
        %s3432 = scalar_lea.vmem [#allocation10], %s3431
        // Predicated region
        $region53: #{tpu_custom_call.1} parent=35 // pred_check
          %p3433 = pneg %p130
        $region54: #{tpu_custom_call.1} parent=35 // pred_check_branch
          %3435 = sbr.rel (%p3433) target = $region56
        $region55: #{tpu_custom_call.1} parent=35 // pred_region
          %s3436 = smul.u32 2, %s23
          %3438 = vsyncadd %s3429, 0
          %s3439 = smul.addr %s3436, 16
          %s3440 = smul.addr %s3439, 8
          %s3441 = scalar_lea.hbm %s4, %s3440
          %s3442 = sshll.u32 %s3432, 4
          %s3443 = int_to_ptr.vmem [resolvable:$true] %s3442
          %s3444 = sshll.u32 %s3441, 4
          %s3445 = int_to_ptr.hbm [resolvable:$true] %s3444
          %3450 = dma.vmem_to_hbm [thread:$0]  %s3443, 4096, %s3445, %s3429, 128, 128, 8
        $region56: #{tpu_custom_call.1} parent=35 // pred_fallthru
          _
      $region36: #{tpu_custom_call.1} parent=5 // pred_fallthru
        _
      %p3451 = scmp.le.s32.totalorder 2, %s18
      // Predicated region
      $region57: #{tpu_custom_call.1} parent=5 // pred_check
        %p3452 = pneg %p3451
      $region58: #{tpu_custom_call.1} parent=5 // pred_check_branch
        %3454 = sbr.rel (%p3452) target = $region60
      $region59: #{tpu_custom_call.1} parent=5 // pred_region
        %s3455 = ssub.s32 %s18, 2
        // Predicated region
        $region61: #{tpu_custom_call.1} parent=59 // pred_check
          %p3456 = pneg %p136
        $region62: #{tpu_custom_call.1} parent=59 // pred_check_branch
          %3458 = sbr.rel (%p3456) target = $region64
        $region63: #{tpu_custom_call.1} parent=59 // pred_region
          %s3459 = sand.u32 %s121, 1
          %s3460 = scalar_lea.sflag [#allocation4], %s3459
          %s3461 = sand.u32 %s121, 1
          %s3462 = smul.addr %s3461, 256
          %s3463 = scalar_lea.vmem [#allocation10], %s3462
          %3465 = dma.done %s3460, 4096
        $region64: #{tpu_custom_call.1} parent=59 // pred_fallthru
          _
      $region60: #{tpu_custom_call.1} parent=5 // pred_fallthru
        _
    $region6: #{tpu_custom_call.1} parent=1 // loop_footer
      %s22 = sadd.s32 1, %s18
    $region7: #{tpu_custom_call.1} parent=1 // loop_footer_branch
      %17 = sbr.rel target = $region3
    $region8: #{tpu_custom_call.1} parent=1 // loop_exit
      _
    %3466 = vsyncpa [#allocation3], 1
    %s3467 = scalar_lea.sflag [#allocation3], 1
    %3468 = vsyncpa %s3467, 1
    %3469 = vsyncpa [#allocation6], 1
    %3470 = vsyncpa [#allocation9], 1
    %3471 = vsyncpa [#allocation4], 1
    %s3472 = scalar_lea.sflag [#allocation4], 1
    %3473 = vsyncpa %s3472, 1

// kernel: tpu_custom_call.1
$region0: #{tpu_custom_call.1}
  #allocation0 [shape = 'u32[]', space=smem, size = 0x4, offset = 0x4, fixed_abs, tag = 'smem constant byte address 0x4 - core index']
  #allocation1 [shape = 'u32[72,128]{1,0:T(1,128)}', space=vmem, size = 0x9000, scoped, tag = 'internal scratch']
  %s0 = inlined_call_operand.hbm [shape: bf16[4,128,128], index: 0, kind: input, shape index: {}]
  %s1 = inlined_call_operand.hbm [shape: bf16[128,512], index: 1, kind: input, shape index: {}]
  %s2 = inlined_call_operand.hbm [shape: bf16[128,128], index: 2, kind: input, shape index: {}]
  %s3 = inlined_call_operand.hbm [shape: bf16[256,128], index: 3, kind: input, shape index: {}]
  %s4 = inlined_call_operand.hbm [shape: f32[4,128,128], index: 4, kind: output, shape index: {}]
  %s5 = sld [smem:[#allocation0]]
  $region65: #{tpu_custom_call.1} parent=0
    _
  %s7 = ssub.s32 1, %s5
  %s8 = scalar_select 0, %s7, %s5
  $region1: #{tpu_custom_call.1} parent=0
    #allocation2 [shape = 'u8[131072]{0}', space=vmem, size = 0x20000, scoped, tag = 'input window, operand 0']
    #allocation3 [shape = 's32[2]{0}', space=sflag, size = 0x8, scoped, tag = 'scoped memory for tpu_custom_call.1']
    #allocation4 [shape = 's32[2]{0}', space=sflag, size = 0x8, scoped, tag = 'scoped memory for tpu_custom_call.1']
    #allocation5 [shape = 'u8[131072]{0}', space=vmem, size = 0x20000, scoped, tag = 'input window, operand 1, single buffered']
    #allocation6 [shape = 's32[1]{0}', space=sflag, size = 0x4, scoped, tag = 'scoped memory for tpu_custom_call.1']
    #allocation7 [shape = 'u8[32768]{0}', space=vmem, size = 0x8000, scoped, tag = 'input window, operand 2, single buffered']
    #allocation8 [shape = 'u8[65536]{0}', space=vmem, size = 0x10000, scoped, tag = 'input window, operand 3, single buffered']
    #allocation9 [shape = 's32[1]{0}', space=sflag, size = 0x4, scoped, tag = 'scoped memory for tpu_custom_call.1']
    #allocation10 [shape = 'u8[262144]{0}', space=vmem, size = 0x40000, scoped, tag = 'output window, operand 0']
    %9 = vsyncpa [#allocation3], 0
    %s10 = scalar_lea.sflag [#allocation3], 1
    %11 = vsyncpa %s10, 0
    %12 = vsyncpa [#allocation6], 0
    %13 = vsyncpa [#allocation9], 0
    %14 = vsyncpa [#allocation4], 0
    %s15 = scalar_lea.sflag [#allocation4], 1
    %16 = vsyncpa %s15, 0
    loop: start=0, step=1, limit=4
    $region2: #{tpu_custom_call.1} parent=1 // loop_pre_header
      _
    $region3: #{tpu_custom_call.1} parent=1 // loop_header
      %s18 = sphi 0, %s22
      %p19 = scmp.ge.s32.totalorder %s18, 4
      %s28 = sphi 0, %s30
      %s31 = sphi 0, %s28
      %s32 = sphi 0, %s31
      %s48 = sphi 0, %s32
      %s52 = sphi 0, %s52
      %s54 = sphi 0, %s52
      %s55 = sphi 0, %s54
      %s69 = sphi 0, %s55
      %s73 = sphi 0, %s73
      %s75 = sphi 0, %s73
      %s76 = sphi 0, %s75
      %s90 = sphi 0, %s76
      %s94 = sphi 0, %s94
      %s96 = sphi 0, %s94
      %s97 = sphi 0, %s96
      %s111 = sphi 0, %s97
      %s117 = sphi 0, %s119
      %s120 = sphi 0, %s117
      %s121 = sphi 0, %s120
      %s137 = sphi 0, %s121
    $region4: #{tpu_custom_call.1} parent=1 // loop_header_branch
      %21 = sbr.rel (%p19) target = $region8
    $region5: #{tpu_custom_call.1} parent=1 // loop_body
      %s23 = ssub.s32 %s18, 1
      %s24 = ssub.s32 %s18, 2
      %s25 = sadd.s32 %s18, 1
      %s26 = ssub.s32 %s18, %s25
      %p27 = scmp.eq.s32.totalorder %s26, 0
      %s29 = sadd.s32 %s28, 1
      %s30 = scalar_select %p27, %s28, %s29
      %p33 = pneg %p27
      %p34 = scmp.eq.s32.totalorder %s18, 1
      %p35 = por %p33, %p34
      %p36 = scmp.ne.s32.totalorder %s28, %s31
      %p37 = scmp.eq.s32.totalorder %s18, 0
      %p38 = por %p36, %p37
      %p39 = scmp.ne.s32.totalorder %s28, %s31
      %p40 = scmp.eq.s32.totalorder %s23, 1
      %p41 = por %p39, %p40
      %p42 = scmp.ne.s32.totalorder %s31, %s32
      %p43 = scmp.eq.s32.totalorder %s23, 0
      %p44 = por %p42, %p43
      %p45 = scmp.ne.s32.totalorder %s31, %s32
      %p46 = scmp.eq.s32.totalorder %s24, 1
      %p47 = por %p45, %p46
      %p49 = scmp.ne.s32.totalorder %s32, %s48
      %p50 = scmp.eq.s32.totalorder %s24, 0
      %p51 = por %p49, %p50
      %s53 = sadd.s32 %s52, 1
      %p56 = scmp.eq.s32.totalorder %s18, 1
      %p57 = scmp.ne.s32.totalorder %s52, %s54
      %p58 = scmp.eq.s32.totalorder %s18, 0
      %p59 = por %p57, %p58
      %p60 = scmp.ne.s32.totalorder %s52, %s54
      %p61 = scmp.eq.s32.totalorder %s23, 1
      %p62 = por %p60, %p61
      %p63 = scmp.ne.s32.totalorder %s54, %s55
      %p64 = scmp.eq.s32.totalorder %s23, 0
      %p65 = por %p63, %p64
      %p66 = scmp.ne.s32.totalorder %s54, %s55
      %p67 = scmp.eq.s32.totalorder %s24, 1
      %p68 = por %p66, %p67
      %p70 = scmp.ne.s32.totalorder %s55, %s69
      %p71 = scmp.eq.s32.totalorder %s24, 0
      %p72 = por %p70, %p71
      %s74 = sadd.s32 %s73, 1
      %p77 = scmp.eq.s32.totalorder %s18, 1
      %p78 = scmp.ne.s32.totalorder %s73, %s75
      %p79 = scmp.eq.s32.totalorder %s18, 0
      %p80 = por %p78, %p79
      %p81 = scmp.ne.s32.totalorder %s73, %s75
      %p82 = scmp.eq.s32.totalorder %s23, 1
      %p83 = por %p81, %p82
      %p84 = scmp.ne.s32.totalorder %s75, %s76
      %p85 = scmp.eq.s32.totalorder %s23, 0
      %p86 = por %p84, %p85
      %p87 = scmp.ne.s32.totalorder %s75, %s76
      %p88 = scmp.eq.s32.totalorder %s24, 1
      %p89 = por %p87, %p88
      %p91 = scmp.ne.s32.totalorder %s76, %s90
      %p92 = scmp.eq.s32.totalorder %s24, 0
      %p93 = por %p91, %p92
      %s95 = sadd.s32 %s94, 1
      %p98 = scmp.eq.s32.totalorder %s18, 1
      %p99 = scmp.ne.s32.totalorder %s94, %s96
      %p100 = scmp.eq.s32.totalorder %s18, 0
      %p101 = por %p99, %p100
      %p102 = scmp.ne.s32.totalorder %s94, %s96
      %p103 = scmp.eq.s32.totalorder %s23, 1
      %p104 = por %p102, %p103
      %p105 = scmp.ne.s32.totalorder %s96, %s97
      %p106 = scmp.eq.s32.totalorder %s23, 0
      %p107 = por %p105, %p106
      %p108 = scmp.ne.s32.totalorder %s96, %s97
      %p109 = scmp.eq.s32.totalorder %s24, 1
      %p110 = por %p108, %p109
      %p112 = scmp.ne.s32.totalorder %s97, %s111
      %p113 = scmp.eq.s32.totalorder %s24, 0
      %p114 = por %p112, %p113
      %s115 = ssub.s32 %s18, %s25
      %p116 = scmp.eq.s32.totalorder %s115, 0
      %s118 = sadd.s32 %s117, 1
      %s119 = scalar_select %p116, %s117, %s118
      %p122 = pneg %p116
      %p123 = scmp.eq.s32.totalorder %s18, 1
      %p124 = por %p122, %p123
      %p125 = scmp.ne.s32.totalorder %s117, %s120
      %p126 = scmp.eq.s32.totalorder %s18, 0
      %p127 = por %p125, %p126
      %p128 = scmp.ne.s32.totalorder %s117, %s120
      %p129 = scmp.eq.s32.totalorder %s23, 1
      %p130 = por %p128, %p129
      %p131 = scmp.ne.s32.totalorder %s120, %s121
      %p132 = scmp.eq.s32.totalorder %s23, 0
      %p133 = por %p131, %p132
      %p134 = scmp.ne.s32.totalorder %s120, %s121
      %p135 = scmp.eq.s32.totalorder %s24, 1
      %p136 = por %p134, %p135
      %p138 = scmp.ne.s32.totalorder %s121, %s137
      %p139 = scmp.eq.s32.totalorder %s24, 0
      %p140 = por %p138, %p139
      %p141 = scmp.le.s32.totalorder 1, %s18
      %p142 = scmp.lt.s32.totalorder %s18, 3
      %p143 = pnand %p141, %p142
      %p144 = pneg %p143
      // Predicated region
      $region9: #{tpu_custom_call.1} parent=5 // pred_check
        _
      $region10: #{tpu_custom_call.1} parent=5 // pred_check_branch
        %146 = sbr.rel (%p143) target = $region12
      $region11: #{tpu_custom_call.1} parent=5 // pred_region
        %s147 = ssub.s32 %s18, 1
        // Predicated region
        $region13: #{tpu_custom_call.1} parent=11 // pred_check
          %p148 = pneg %p65
        $region14: #{tpu_custom_call.1} parent=11 // pred_check_branch
          %150 = sbr.rel (%p148) target = $region16
        $region15: #{tpu_custom_call.1} parent=11 // pred_region
          %152 = vsyncadd [#allocation6], 0
          %s153 = sshll.u32 %s1, 4
          %s154 = int_to_ptr.hbm [resolvable:$true] %s153
          %s155 = sshll.u32 [#allocation5], 4
          %s156 = int_to_ptr.vmem [resolvable:$true] %s155
          %161 = dma.hbm_to_vmem [thread:$0]  %s154, 4096, %s156, [#allocation6], 256, 256, 16
        $region16: #{tpu_custom_call.1} parent=11 // pred_fallthru
          _
        // Predicated region
        $region17: #{tpu_custom_call.1} parent=11 // pred_check
          %p162 = pneg %p86
        $region18: #{tpu_custom_call.1} parent=11 // pred_check_branch
          %164 = sbr.rel (%p162) target = $region20
        $region19: #{tpu_custom_call.1} parent=11 // pred_region
          %166 = vsyncadd [#allocation6], 0
          %s167 = sshll.u32 %s2, 4
          %s168 = int_to_ptr.hbm [resolvable:$true] %s167
          %s169 = sshll.u32 [#allocation7], 4
          %s170 = int_to_ptr.vmem [resolvable:$true] %s169
          %175 = dma.hbm_to_vmem [thread:$0]  %s168, 1024, %s170, [#allocation6], 64, 64, 4
        $region20: #{tpu_custom_call.1} parent=11 // pred_fallthru
          _
        // Predicated region
        $region21: #{tpu_custom_call.1} parent=11 // pred_check
          %p176 = pneg %p107
        $region22: #{tpu_custom_call.1} parent=11 // pred_check_branch
          %178 = sbr.rel (%p176) target = $region24
        $region23: #{tpu_custom_call.1} parent=11 // pred_region
          %180 = vsyncadd [#allocation9], 0
          %s181 = sshll.u32 %s3, 4
          %s182 = int_to_ptr.hbm [resolvable:$true] %s181
          %s183 = sshll.u32 [#allocation8], 4
          %s184 = int_to_ptr.vmem [resolvable:$true] %s183
          %189 = dma.hbm_to_vmem [thread:$0]  %s182, 2048, %s184, [#allocation9], 64, 64, 4
        $region24: #{tpu_custom_call.1} parent=11 // pred_fallthru
          _
      $region12: #{tpu_custom_call.1} parent=5 // pred_fallthru
        _
      %p190 = scmp.lt.s32.totalorder %s18, 2
      // Predicated region
      $region25: #{tpu_custom_call.1} parent=5 // pred_check
        %p191 = pneg %p190
      $region26: #{tpu_custom_call.1} parent=5 // pred_check_branch
        %193 = sbr.rel (%p191) target = $region28
      $region27: #{tpu_custom_call.1} parent=5 // pred_region
        // Predicated region
        $region29: #{tpu_custom_call.1} parent=27 // pred_check
          %p194 = pneg %p38
        $region30: #{tpu_custom_call.1} parent=27 // pred_check_branch
          %196 = sbr.rel (%p194) target = $region32
        $region31: #{tpu_custom_call.1} parent=27 // pred_region
          %s197 = sand.u32 %s28, 1
          %s198 = scalar_lea.sflag [#allocation3], %s197
          %s199 = sand.u32 %s28, 1
          %s200 = smul.addr %s199, 128
          %s201 = scalar_lea.vmem [#allocation2], %s200
          %s202 = smul.u32 2, %s18
          %204 = vsyncadd %s198, 0
          %s205 = smul.addr %s202, 16
          %s206 = smul.addr %s205, 4
          %s207 = scalar_lea.hbm %s0, %s206
          %s208 = sshll.u32 %s207, 4
          %s209 = int_to_ptr.hbm [resolvable:$true] %s208
          %s210 = sshll.u32 %s201, 4
          %s211 = int_to_ptr.vmem [resolvable:$true] %s210
          %216 = dma.hbm_to_vmem [thread:$0]  %s209, 2048, %s211, %s198, 64, 64, 4
        $region32: #{tpu_custom_call.1} parent=27 // pred_fallthru
          _
      $region28: #{tpu_custom_call.1} parent=5 // pred_fallthru
        _
      %p217 = scmp.le.s32.totalorder 1, %s18
      %p218 = scmp.lt.s32.totalorder %s18, 3
      %p219 = pnand %p217, %p218
      %p220 = pneg %p219
      // Predicated region
      $region33: #{tpu_custom_call.1} parent=5 // pred_check
        _
      $region34: #{tpu_custom_call.1} parent=5 // pred_check_branch
        %222 = sbr.rel (%p219) target = $region36
      $region35: #{tpu_custom_call.1} parent=5 // pred_region
        %s223 = ssub.s32 %s18, 1
        %s224 = sand.u32 %s31, 1
        %s225 = scalar_lea.sflag [#allocation3], %s224
        %s226 = sand.u32 %s31, 1
        %s227 = smul.addr %s226, 128
        %s228 = scalar_lea.vmem [#allocation2], %s227
        // Predicated region
        $region37: #{tpu_custom_call.1} parent=35 // pred_check
          %p229 = pneg %p44
        $region38: #{tpu_custom_call.1} parent=35 // pred_check_branch
          %231 = sbr.rel (%p229) target = $region40
        $region39: #{tpu_custom_call.1} parent=35 // pred_region
          %233 = dma.done %s225, 2048
        $region40: #{tpu_custom_call.1} parent=35 // pred_fallthru
          _
        // Predicated region
        $region41: #{tpu_custom_call.1} parent=35 // pred_check
          %p234 = pneg %p65
        $region42: #{tpu_custom_call.1} parent=35 // pred_check_branch
          %236 = sbr.rel (%p234) target = $region44
        $region43: #{tpu_custom_call.1} parent=35 // pred_region
          %238 = dma.done [#allocation6], 4096
        $region44: #{tpu_custom_call.1} parent=35 // pred_fallthru
          _
        // Predicated region
        $region45: #{tpu_custom_call.1} parent=35 // pred_check
          %p239 = pneg %p86
        $region46: #{tpu_custom_call.1} parent=35 // pred_check_branch
          %241 = sbr.rel (%p239) target = $region48
        $region47: #{tpu_custom_call.1} parent=35 // pred_region
          %243 = dma.done [#allocation6], 1024
        $region48: #{tpu_custom_call.1} parent=35 // pred_fallthru
          _
        // Predicated region
        $region49: #{tpu_custom_call.1} parent=35 // pred_check
          %p244 = pneg %p107
        $region50: #{tpu_custom_call.1} parent=35 // pred_check_branch
          %246 = sbr.rel (%p244) target = $region52
        $region51: #{tpu_custom_call.1} parent=35 // pred_region
          %248 = dma.done [#allocation9], 2048
        $region52: #{tpu_custom_call.1} parent=35 // pred_fallthru
          _
        %s249 = sand.u32 %s31, 1
        %s250 = scalar_lea.sflag [#allocation3], %s249
        %s251 = sand.u32 %s31, 1
        %s252 = smul.addr %s251, 128
        %s253 = scalar_lea.vmem [#allocation2], %s252
        %p254 = pneg %p44
        %p255 = pneg %p41
        %p256 = pneg %p65
        %p257 = pneg %p62
        %p258 = pneg %p86
        %p259 = pneg %p83
        %p260 = pneg %p107
        %p261 = pneg %p104
        %p262 = pneg %p133
        %p263 = pneg %p130
        %s264 = sand.u32 %s120, 1
        %s265 = scalar_lea.sflag [#allocation4], %s264
        %s266 = sand.u32 %s120, 1
        %s267 = smul.addr %s266, 256
        %s268 = scalar_lea.vmem [#allocation10], %s267
        %s269 = smul.u32 2, %s23
        %s270 = smul.u32 2, %s23
        %v271 = vld [vmem:[%s228] sm:$0xf]
        %v272 = vld [vmem:[%s228 + $0x4] sm:$0xf]
        %v273 = vld [vmem:[%s228 + $0x8] sm:$0xf]
        %v274 = vld [vmem:[%s228 + $0xc] sm:$0xf]
        %v275 = vld [vmem:[%s228 + $0x10] sm:$0xf]
        %v276 = vld [vmem:[%s228 + $0x14] sm:$0xf]
        %v277 = vld [vmem:[%s228 + $0x18] sm:$0xf]
        %v278 = vld [vmem:[%s228 + $0x1c] sm:$0xf]
        %v279 = vld [vmem:[%s228 + $0x20] sm:$0xf]
        %v280 = vld [vmem:[%s228 + $0x24] sm:$0xf]
        %v281 = vld [vmem:[%s228 + $0x28] sm:$0xf]
        %v282 = vld [vmem:[%s228 + $0x2c] sm:$0xf]
        %v283 = vld [vmem:[%s228 + $0x30] sm:$0xf]
        %v284 = vld [vmem:[%s228 + $0x34] sm:$0xf]
        %v285 = vld [vmem:[%s228 + $0x38] sm:$0xf]
        %v286 = vld [vmem:[%s228 + $0x3c] sm:$0xf]
        %v287 = vld [vmem:[%s228 + $0x40] sm:$0xf]
        %v288 = vld [vmem:[%s228 + $0x44] sm:$0xf]
        %v289 = vld [vmem:[%s228 + $0x48] sm:$0xf]
        %v290 = vld [vmem:[%s228 + $0x4c] sm:$0xf]
        %v291 = vld [vmem:[%s228 + $0x50] sm:$0xf]
        %v292 = vld [vmem:[%s228 + $0x54] sm:$0xf]
        %v293 = vld [vmem:[%s228 + $0x58] sm:$0xf]
        %v294 = vld [vmem:[%s228 + $0x5c] sm:$0xf]
        %v295 = vld [vmem:[%s228 + $0x60] sm:$0xf]
        %v296 = vld [vmem:[%s228 + $0x64] sm:$0xf]
        %v297 = vld [vmem:[%s228 + $0x68] sm:$0xf]
        %v298 = vld [vmem:[%s228 + $0x6c] sm:$0xf]
        %v299 = vld [vmem:[%s228 + $0x70] sm:$0xf]
        %v300 = vld [vmem:[%s228 + $0x74] sm:$0xf]
        %v301 = vld [vmem:[%s228 + $0x78] sm:$0xf]
        %v302 = vld [vmem:[%s228 + $0x7c] sm:$0xf]
        %v303 = vld [vmem:[#allocation5] sm:$0xf]
        %v304 = vld [vmem:[#allocation5 + $0x10] sm:$0xf]
        %v305 = vld [vmem:[#allocation5 + $0x20] sm:$0xf]
        %v306 = vld [vmem:[#allocation5 + $0x30] sm:$0xf]
        %v307 = vld [vmem:[#allocation5 + $0x40] sm:$0xf]
        %v308 = vld [vmem:[#allocation5 + $0x50] sm:$0xf]
        %v309 = vld [vmem:[#allocation5 + $0x60] sm:$0xf]
        %v310 = vld [vmem:[#allocation5 + $0x70] sm:$0xf]
        %v311 = vld [vmem:[#allocation5 + $0x80] sm:$0xf]
        %v312 = vld [vmem:[#allocation5 + $0x90] sm:$0xf]
        %v313 = vld [vmem:[#allocation5 + $0xa0] sm:$0xf]
        %v314 = vld [vmem:[#allocation5 + $0xb0] sm:$0xf]
        %v315 = vld [vmem:[#allocation5 + $0xc0] sm:$0xf]
        %v316 = vld [vmem:[#allocation5 + $0xd0] sm:$0xf]
        %v317 = vld [vmem:[#allocation5 + $0xe0] sm:$0xf]
        %v318 = vld [vmem:[#allocation5 + $0xf0] sm:$0xf]
        %v351 = vunpack.c.l.b16 %v271
        %v352 = vunpack.c.l.b16 %v272
        %v353 = vunpack.c.l.b16 %v273
        %v354 = vunpack.c.l.b16 %v274
        %v355 = vunpack.c.l.b16 %v275
        %v356 = vunpack.c.l.b16 %v276
        %v357 = vunpack.c.l.b16 %v277
        %v358 = vunpack.c.l.b16 %v278
        %v359 = vunpack.c.l.b16 %v279
        %v360 = vunpack.c.l.b16 %v280
        %v361 = vunpack.c.l.b16 %v281
        %v362 = vunpack.c.l.b16 %v282
        %v363 = vunpack.c.l.b16 %v283
        %v364 = vunpack.c.l.b16 %v284
        %v365 = vunpack.c.l.b16 %v285
        %v366 = vunpack.c.l.b16 %v286
        %v367 = vunpack.c.l.b16 %v287
        %v368 = vunpack.c.l.b16 %v288
        %v369 = vunpack.c.l.b16 %v289
        %v370 = vunpack.c.l.b16 %v290
        %v371 = vunpack.c.l.b16 %v291
        %v372 = vunpack.c.l.b16 %v292
        %v373 = vunpack.c.l.b16 %v293
        %v374 = vunpack.c.l.b16 %v294
        %v375 = vunpack.c.l.b16 %v295
        %v376 = vunpack.c.l.b16 %v296
        %v377 = vunpack.c.l.b16 %v297
        %v378 = vunpack.c.l.b16 %v298
        %v379 = vunpack.c.l.b16 %v299
        %v380 = vunpack.c.l.b16 %v300
        %v381 = vunpack.c.l.b16 %v301
        %v382 = vunpack.c.l.b16 %v302
        %v383 = vpack.c.b16 %v352, %v351
        %v384 = vpack.c.b16 %v354, %v353
        %v385 = vpack.c.b16 %v356, %v355
        %v386 = vpack.c.b16 %v358, %v357
        %v387 = vpack.c.b16 %v360, %v359
        %v388 = vpack.c.b16 %v362, %v361
        %v389 = vpack.c.b16 %v364, %v363
        %v390 = vpack.c.b16 %v366, %v365
        %v391 = vpack.c.b16 %v368, %v367
        %v392 = vpack.c.b16 %v370, %v369
        %v393 = vpack.c.b16 %v372, %v371
        %v394 = vpack.c.b16 %v374, %v373
        %v395 = vpack.c.b16 %v376, %v375
        %v396 = vpack.c.b16 %v378, %v377
        %v397 = vpack.c.b16 %v380, %v379
        %v398 = vpack.c.b16 %v382, %v381
        %v431 = vunpack.c.l.b16 %v303
        %v432 = vunpack.c.l.b16 %v304
        %v433 = vunpack.c.l.b16 %v305
        %v434 = vunpack.c.l.b16 %v306
        %v435 = vunpack.c.l.b16 %v307
        %v436 = vunpack.c.l.b16 %v308
        %v437 = vunpack.c.l.b16 %v309
        %v438 = vunpack.c.l.b16 %v310
        %v439 = vunpack.c.l.b16 %v311
        %v440 = vunpack.c.l.b16 %v312
        %v441 = vunpack.c.l.b16 %v313
        %v442 = vunpack.c.l.b16 %v314
        %v443 = vunpack.c.l.b16 %v315
        %v444 = vunpack.c.l.b16 %v316
        %v445 = vunpack.c.l.b16 %v317
        %v446 = vunpack.c.l.b16 %v318
        %v447 = vpack.c.b16 %v432, %v431
        %v448 = vpack.c.b16 %v434, %v433
        %v449 = vpack.c.b16 %v436, %v435
        %v450 = vpack.c.b16 %v438, %v437
        %v451 = vpack.c.b16 %v440, %v439
        %v452 = vpack.c.b16 %v442, %v441
        %v453 = vpack.c.b16 %v444, %v443
        %v454 = vpack.c.b16 %v446, %v445
        %463 = vmatpush.bf16.msra.mxu0 %v454
        %464 = vmatpush.bf16.msra.mxu0 %v453
        %465 = vmatpush.bf16.msra.mxu0 %v452
        %466 = vmatpush.bf16.msra.mxu0 %v451
        %467 = vmatpush.bf16.msra.mxu0 %v450
        %468 = vmatpush.bf16.msra.mxu0 %v449
        %469 = vmatpush.bf16.msra.mxu0 %v448
        %470 = vmatpush.bf16.msra.mxu0 %v447
        %471 = vmatmul.bf16.gmra.mxu0 %v383
        %v472 = vpop.f32.mrf.mxu0
        %v473 = vadd.f32 0.0, %v472
        %v474 = vpop.f32.mrf.mxu0
        %v475 = vadd.f32 0.0, %v474
        %476 = vmatmul.bf16.gmra.mxu0 %v384
        %v477 = vpop.f32.mrf.mxu0
        %v478 = vadd.f32 0.0, %v477
        %v479 = vpop.f32.mrf.mxu0
        %v480 = vadd.f32 0.0, %v479
        %481 = vmatmul.bf16.gmra.mxu0 %v385
        %v482 = vpop.f32.mrf.mxu0
        %v483 = vadd.f32 0.0, %v482
        %v484 = vpop.f32.mrf.mxu0
        %v485 = vadd.f32 0.0, %v484
        %486 = vmatmul.bf16.gmra.mxu0 %v386
        %v487 = vpop.f32.mrf.mxu0
        %v488 = vadd.f32 0.0, %v487
        %v489 = vpop.f32.mrf.mxu0
        %v490 = vadd.f32 0.0, %v489
        %491 = vmatmul.bf16.gmra.mxu0 %v387
        %v492 = vpop.f32.mrf.mxu0
        %v493 = vadd.f32 0.0, %v492
        %v494 = vpop.f32.mrf.mxu0
        %v495 = vadd.f32 0.0, %v494
        %496 = vmatmul.bf16.gmra.mxu0 %v388
        %v497 = vpop.f32.mrf.mxu0
        %v498 = vadd.f32 0.0, %v497
        %v499 = vpop.f32.mrf.mxu0
        %v500 = vadd.f32 0.0, %v499
        %501 = vmatmul.bf16.gmra.mxu0 %v389
        %v502 = vpop.f32.mrf.mxu0
        %v503 = vadd.f32 0.0, %v502
        %v504 = vpop.f32.mrf.mxu0
        %v505 = vadd.f32 0.0, %v504
        %506 = vmatmul.bf16.gmra.mxu0 %v390
        %v507 = vpop.f32.mrf.mxu0
        %v508 = vadd.f32 0.0, %v507
        %v509 = vpop.f32.mrf.mxu0
        %v510 = vadd.f32 0.0, %v509
        %511 = vmatmul.bf16.gmra.mxu0 %v391
        %v512 = vpop.f32.mrf.mxu0
        %v513 = vadd.f32 0.0, %v512
        %v514 = vpop.f32.mrf.mxu0
        %v515 = vadd.f32 0.0, %v514
        %516 = vmatmul.bf16.gmra.mxu0 %v392
        %v517 = vpop.f32.mrf.mxu0
        %v518 = vadd.f32 0.0, %v517
        %v519 = vpop.f32.mrf.mxu0
        %v520 = vadd.f32 0.0, %v519
        %521 = vmatmul.bf16.gmra.mxu0 %v393
        %v522 = vpop.f32.mrf.mxu0
        %v523 = vadd.f32 0.0, %v522
        %v524 = vpop.f32.mrf.mxu0
        %v525 = vadd.f32 0.0, %v524
        %526 = vmatmul.bf16.gmra.mxu0 %v394
        %v527 = vpop.f32.mrf.mxu0
        %v528 = vadd.f32 0.0, %v527
        %v529 = vpop.f32.mrf.mxu0
        %v530 = vadd.f32 0.0, %v529
        %531 = vmatmul.bf16.gmra.mxu0 %v395
        %v532 = vpop.f32.mrf.mxu0
        %v533 = vadd.f32 0.0, %v532
        %v534 = vpop.f32.mrf.mxu0
        %v535 = vadd.f32 0.0, %v534
        %536 = vmatmul.bf16.gmra.mxu0 %v396
        %v537 = vpop.f32.mrf.mxu0
        %v538 = vadd.f32 0.0, %v537
        %v539 = vpop.f32.mrf.mxu0
        %v540 = vadd.f32 0.0, %v539
        %541 = vmatmul.bf16.gmra.mxu0 %v397
        %v542 = vpop.f32.mrf.mxu0
        %v543 = vadd.f32 0.0, %v542
        %v544 = vpop.f32.mrf.mxu0
        %v545 = vadd.f32 0.0, %v544
        %546 = vmatmul.bf16.gmra.mxu0 %v398
        %v547 = vpop.f32.mrf.mxu0
        %v548 = vadd.f32 0.0, %v547
        %v549 = vpop.f32.mrf.mxu0
        %v550 = vadd.f32 0.0, %v549
        %551 = vdwg.mxu0
        %v552 = vld [vmem:[#allocation5 + $0x4] sm:$0xf]
        %v553 = vld [vmem:[#allocation5 + $0x14] sm:$0xf]
        %v554 = vld [vmem:[#allocation5 + $0x24] sm:$0xf]
        %v555 = vld [vmem:[#allocation5 + $0x34] sm:$0xf]
        %v556 = vld [vmem:[#allocation5 + $0x44] sm:$0xf]
        %v557 = vld [vmem:[#allocation5 + $0x54] sm:$0xf]
        %v558 = vld [vmem:[#allocation5 + $0x64] sm:$0xf]
        %v559 = vld [vmem:[#allocation5 + $0x74] sm:$0xf]
        %v560 = vld [vmem:[#allocation5 + $0x84] sm:$0xf]
        %v561 = vld [vmem:[#allocation5 + $0x94] sm:$0xf]
        %v562 = vld [vmem:[#allocation5 + $0xa4] sm:$0xf]
        %v563 = vld [vmem:[#allocation5 + $0xb4] sm:$0xf]
        %v564 = vld [vmem:[#allocation5 + $0xc4] sm:$0xf]
        %v565 = vld [vmem:[#allocation5 + $0xd4] sm:$0xf]
        %v566 = vld [vmem:[#allocation5 + $0xe4] sm:$0xf]
        %v567 = vld [vmem:[#allocation5 + $0xf4] sm:$0xf]
        %v584 = vunpack.c.l.b16 %v552
        %v585 = vunpack.c.l.b16 %v553
        %v586 = vunpack.c.l.b16 %v554
        %v587 = vunpack.c.l.b16 %v555
        %v588 = vunpack.c.l.b16 %v556
        %v589 = vunpack.c.l.b16 %v557
        %v590 = vunpack.c.l.b16 %v558
        %v591 = vunpack.c.l.b16 %v559
        %v592 = vunpack.c.l.b16 %v560
        %v593 = vunpack.c.l.b16 %v561
        %v594 = vunpack.c.l.b16 %v562
        %v595 = vunpack.c.l.b16 %v563
        %v596 = vunpack.c.l.b16 %v564
        %v597 = vunpack.c.l.b16 %v565
        %v598 = vunpack.c.l.b16 %v566
        %v599 = vunpack.c.l.b16 %v567
        %v600 = vpack.c.b16 %v585, %v584
        %v601 = vpack.c.b16 %v587, %v586
        %v602 = vpack.c.b16 %v589, %v588
        %v603 = vpack.c.b16 %v591, %v590
        %v604 = vpack.c.b16 %v593, %v592
        %v605 = vpack.c.b16 %v595, %v594
        %v606 = vpack.c.b16 %v597, %v596
        %v607 = vpack.c.b16 %v599, %v598
        %616 = vmatpush.bf16.msra.mxu0 %v607
        %617 = vmatpush.bf16.msra.mxu0 %v606
        %618 = vmatpush.bf16.msra.mxu0 %v605
        %619 = vmatpush.bf16.msra.mxu0 %v604
        %620 = vmatpush.bf16.msra.mxu0 %v603
        %621 = vmatpush.bf16.msra.mxu0 %v602
        %622 = vmatpush.bf16.msra.mxu0 %v601
        %623 = vmatpush.bf16.msra.mxu0 %v600
        %624 = vmatmul.bf16.gmra.mxu0 %v383
        %v625 = vpop.f32.mrf.mxu0
        %v626 = vadd.f32 0.0, %v625
        %v627 = vpop.f32.mrf.mxu0
        %v628 = vadd.f32 0.0, %v627
        %629 = vmatmul.bf16.gmra.mxu0 %v384
        %v630 = vpop.f32.mrf.mxu0
        %v631 = vadd.f32 0.0, %v630
        %v632 = vpop.f32.mrf.mxu0
        %v633 = vadd.f32 0.0, %v632
        %634 = vmatmul.bf16.gmra.mxu0 %v385
        %v635 = vpop.f32.mrf.mxu0
        %v636 = vadd.f32 0.0, %v635
        %v637 = vpop.f32.mrf.mxu0
        %v638 = vadd.f32 0.0, %v637
        %639 = vmatmul.bf16.gmra.mxu0 %v386
        %v640 = vpop.f32.mrf.mxu0
        %v641 = vadd.f32 0.0, %v640
        %v642 = vpop.f32.mrf.mxu0
        %v643 = vadd.f32 0.0, %v642
        %644 = vmatmul.bf16.gmra.mxu0 %v387
        %v645 = vpop.f32.mrf.mxu0
        %v646 = vadd.f32 0.0, %v645
        %v647 = vpop.f32.mrf.mxu0
        %v648 = vadd.f32 0.0, %v647
        %649 = vmatmul.bf16.gmra.mxu0 %v388
        %v650 = vpop.f32.mrf.mxu0
        %v651 = vadd.f32 0.0, %v650
        %v652 = vpop.f32.mrf.mxu0
        %v653 = vadd.f32 0.0, %v652
        %654 = vmatmul.bf16.gmra.mxu0 %v389
        %v655 = vpop.f32.mrf.mxu0
        %v656 = vadd.f32 0.0, %v655
        %v657 = vpop.f32.mrf.mxu0
        %v658 = vadd.f32 0.0, %v657
        %659 = vmatmul.bf16.gmra.mxu0 %v390
        %v660 = vpop.f32.mrf.mxu0
        %v661 = vadd.f32 0.0, %v660
        %v662 = vpop.f32.mrf.mxu0
        %v663 = vadd.f32 0.0, %v662
        %664 = vmatmul.bf16.gmra.mxu0 %v391
        %v665 = vpop.f32.mrf.mxu0
        %v666 = vadd.f32 0.0, %v665
        %v667 = vpop.f32.mrf.mxu0
        %v668 = vadd.f32 0.0, %v667
        %669 = vmatmul.bf16.gmra.mxu0 %v392
        %v670 = vpop.f32.mrf.mxu0
        %v671 = vadd.f32 0.0, %v670
        %v672 = vpop.f32.mrf.mxu0
        %v673 = vadd.f32 0.0, %v672
        %674 = vmatmul.bf16.gmra.mxu0 %v393
        %v675 = vpop.f32.mrf.mxu0
        %v676 = vadd.f32 0.0, %v675
        %v677 = vpop.f32.mrf.mxu0
        %v678 = vadd.f32 0.0, %v677
        %679 = vmatmul.bf16.gmra.mxu0 %v394
        %v680 = vpop.f32.mrf.mxu0
        %v681 = vadd.f32 0.0, %v680
        %v682 = vpop.f32.mrf.mxu0
        %v683 = vadd.f32 0.0, %v682
        %684 = vmatmul.bf16.gmra.mxu0 %v395
        %v685 = vpop.f32.mrf.mxu0
        %v686 = vadd.f32 0.0, %v685
        %v687 = vpop.f32.mrf.mxu0
        %v688 = vadd.f32 0.0, %v687
        %689 = vmatmul.bf16.gmra.mxu0 %v396
        %v690 = vpop.f32.mrf.mxu0
        %v691 = vadd.f32 0.0, %v690
        %v692 = vpop.f32.mrf.mxu0
        %v693 = vadd.f32 0.0, %v692
        %694 = vmatmul.bf16.gmra.mxu0 %v397
        %v695 = vpop.f32.mrf.mxu0
        %v696 = vadd.f32 0.0, %v695
        %v697 = vpop.f32.mrf.mxu0
        %v698 = vadd.f32 0.0, %v697
        %699 = vmatmul.bf16.gmra.mxu0 %v398
        %v700 = vpop.f32.mrf.mxu0
        %v701 = vadd.f32 0.0, %v700
        %v702 = vpop.f32.mrf.mxu0
        %v703 = vadd.f32 0.0, %v702
        %704 = vdwg.mxu0
        %v705 = vpack.c.bf16 %v473, %v473
        %v706 = vpack.c.bf16 %v475, %v475
        %v707 = vpack.c.bf16 %v478, %v478
        %v708 = vpack.c.bf16 %v480, %v480
        %v709 = vpack.c.bf16 %v483, %v483
        %v710 = vpack.c.bf16 %v485, %v485
        %v711 = vpack.c.bf16 %v488, %v488
        %v712 = vpack.c.bf16 %v490, %v490
        %v713 = vpack.c.bf16 %v493, %v493
        %v714 = vpack.c.bf16 %v495, %v495
        %v715 = vpack.c.bf16 %v498, %v498
        %v716 = vpack.c.bf16 %v500, %v500
        %v717 = vpack.c.bf16 %v503, %v503
        %v718 = vpack.c.bf16 %v505, %v505
        %v719 = vpack.c.bf16 %v508, %v508
        %v720 = vpack.c.bf16 %v510, %v510
        %v721 = vpack.c.bf16 %v513, %v513
        %v722 = vpack.c.bf16 %v515, %v515
        %v723 = vpack.c.bf16 %v518, %v518
        %v724 = vpack.c.bf16 %v520, %v520
        %v725 = vpack.c.bf16 %v523, %v523
        %v726 = vpack.c.bf16 %v525, %v525
        %v727 = vpack.c.bf16 %v528, %v528
        %v728 = vpack.c.bf16 %v530, %v530
        %v729 = vpack.c.bf16 %v533, %v533
        %v730 = vpack.c.bf16 %v535, %v535
        %v731 = vpack.c.bf16 %v538, %v538
        %v732 = vpack.c.bf16 %v540, %v540
        %v733 = vpack.c.bf16 %v543, %v543
        %v734 = vpack.c.bf16 %v545, %v545
        %v735 = vpack.c.bf16 %v548, %v548
        %v736 = vpack.c.bf16 %v550, %v550
        %v737 = vpack.c.bf16 %v626, %v626
        %v738 = vpack.c.bf16 %v628, %v628
        %v739 = vpack.c.bf16 %v631, %v631
        %v740 = vpack.c.bf16 %v633, %v633
        %v741 = vpack.c.bf16 %v636, %v636
        %v742 = vpack.c.bf16 %v638, %v638
        %v743 = vpack.c.bf16 %v641, %v641
        %v744 = vpack.c.bf16 %v643, %v643
        %v745 = vpack.c.bf16 %v646, %v646
        %v746 = vpack.c.bf16 %v648, %v648
        %v747 = vpack.c.bf16 %v651, %v651
        %v748 = vpack.c.bf16 %v653, %v653
        %v749 = vpack.c.bf16 %v656, %v656
        %v750 = vpack.c.bf16 %v658, %v658
        %v751 = vpack.c.bf16 %v661, %v661
        %v752 = vpack.c.bf16 %v663, %v663
        %v753 = vpack.c.bf16 %v666, %v666
        %v754 = vpack.c.bf16 %v668, %v668
        %v755 = vpack.c.bf16 %v671, %v671
        %v756 = vpack.c.bf16 %v673, %v673
        %v757 = vpack.c.bf16 %v676, %v676
        %v758 = vpack.c.bf16 %v678, %v678
        %v759 = vpack.c.bf16 %v681, %v681
        %v760 = vpack.c.bf16 %v683, %v683
        %v761 = vpack.c.bf16 %v686, %v686
        %v762 = vpack.c.bf16 %v688, %v688
        %v763 = vpack.c.bf16 %v691, %v691
        %v764 = vpack.c.bf16 %v693, %v693
        %v765 = vpack.c.bf16 %v696, %v696
        %v766 = vpack.c.bf16 %v698, %v698
        %v767 = vpack.c.bf16 %v701, %v701
        %v768 = vpack.c.bf16 %v703, %v703
        %v785 = vunpack.c.l.b16 %v705
        %v786 = vunpack.c.l.b16 %v706
        %v787 = vunpack.c.l.b16 %v707
        %v788 = vunpack.c.l.b16 %v708
        %v789 = vunpack.c.l.b16 %v709
        %v790 = vunpack.c.l.b16 %v710
        %v791 = vunpack.c.l.b16 %v711
        %v792 = vunpack.c.l.b16 %v712
        %v793 = vunpack.c.l.b16 %v713
        %v794 = vunpack.c.l.b16 %v714
        %v795 = vunpack.c.l.b16 %v715
        %v796 = vunpack.c.l.b16 %v716
        %v797 = vunpack.c.l.b16 %v717
        %v798 = vunpack.c.l.b16 %v718
        %v799 = vunpack.c.l.b16 %v719
        %v800 = vunpack.c.l.b16 %v720
        %v801 = vpack.c.b16 %v786, %v785
        %v802 = vpack.c.b16 %v788, %v787
        %v803 = vpack.c.b16 %v790, %v789
        %v804 = vpack.c.b16 %v792, %v791
        %v805 = vpack.c.b16 %v794, %v793
        %v806 = vpack.c.b16 %v796, %v795
        %v807 = vpack.c.b16 %v798, %v797
        %v808 = vpack.c.b16 %v800, %v799
        %v833 = vunpack.c.l.b16 %v737
        %v834 = vunpack.c.l.b16 %v738
        %v835 = vunpack.c.l.b16 %v739
        %v836 = vunpack.c.l.b16 %v740
        %v837 = vunpack.c.l.b16 %v741
        %v838 = vunpack.c.l.b16 %v742
        %v839 = vunpack.c.l.b16 %v743
        %v840 = vunpack.c.l.b16 %v744
        %v841 = vunpack.c.l.b16 %v745
        %v842 = vunpack.c.l.b16 %v746
        %v843 = vunpack.c.l.b16 %v747
        %v844 = vunpack.c.l.b16 %v748
        %v845 = vunpack.c.l.b16 %v749
        %v846 = vunpack.c.l.b16 %v750
        %v847 = vunpack.c.l.b16 %v751
        %v848 = vunpack.c.l.b16 %v752
        %v849 = vpack.c.b16 %v834, %v833
        %v850 = vpack.c.b16 %v836, %v835
        %v851 = vpack.c.b16 %v838, %v837
        %v852 = vpack.c.b16 %v840, %v839
        %v853 = vpack.c.b16 %v842, %v841
        %v854 = vpack.c.b16 %v844, %v843
        %v855 = vpack.c.b16 %v846, %v845
        %v856 = vpack.c.b16 %v848, %v847
        %865 = vmatpush.bf16.xpose.msra.mxu0 %v856
        %866 = vmatpush.bf16.xpose.msra.mxu0 %v855
        %867 = vmatpush.bf16.xpose.msra.mxu0 %v854
        %868 = vmatpush.bf16.xpose.msra.mxu0 %v853
        %869 = vmatpush.bf16.xpose.msra.mxu0 %v852
        %870 = vmatpush.bf16.xpose.msra.mxu0 %v851
        %871 = vmatpush.bf16.xpose.msra.mxu0 %v850
        %872 = vmatpush.bf16.xpose.msra.mxu0 %v849
        %873 = vmatmul.bf16.gmra.mxu0 %v801
        %v874 = vpop.f32.mrf.mxu0
        %v875 = vadd.f32 0.0, %v874
        %v876 = vpop.f32.mrf.mxu0
        %v877 = vadd.f32 0.0, %v876
        %878 = vmatmul.bf16.gmra.mxu0 %v802
        %v879 = vpop.f32.mrf.mxu0
        %v880 = vadd.f32 0.0, %v879
        %v881 = vpop.f32.mrf.mxu0
        %v882 = vadd.f32 0.0, %v881
        %883 = vmatmul.bf16.gmra.mxu0 %v803
        %v884 = vpop.f32.mrf.mxu0
        %v885 = vadd.f32 0.0, %v884
        %v886 = vpop.f32.mrf.mxu0
        %v887 = vadd.f32 0.0, %v886
        %888 = vmatmul.bf16.gmra.mxu0 %v804
        %v889 = vpop.f32.mrf.mxu0
        %v890 = vadd.f32 0.0, %v889
        %v891 = vpop.f32.mrf.mxu0
        %v892 = vadd.f32 0.0, %v891
        %893 = vmatmul.bf16.gmra.mxu0 %v805
        %v894 = vpop.f32.mrf.mxu0
        %v895 = vadd.f32 0.0, %v894
        %v896 = vpop.f32.mrf.mxu0
        %v897 = vadd.f32 0.0, %v896
        %898 = vmatmul.bf16.gmra.mxu0 %v806
        %v899 = vpop.f32.mrf.mxu0
        %v900 = vadd.f32 0.0, %v899
        %v901 = vpop.f32.mrf.mxu0
        %v902 = vadd.f32 0.0, %v901
        %903 = vmatmul.bf16.gmra.mxu0 %v807
        %v904 = vpop.f32.mrf.mxu0
        %v905 = vadd.f32 0.0, %v904
        %v906 = vpop.f32.mrf.mxu0
        %v907 = vadd.f32 0.0, %v906
        %908 = vmatmul.bf16.gmra.mxu0 %v808
        %v909 = vpop.f32.mrf.mxu0
        %v910 = vadd.f32 0.0, %v909
        %v911 = vpop.f32.mrf.mxu0
        %v912 = vadd.f32 0.0, %v911
        %913 = vdwg.mxu0
        %v930 = vunpack.c.l.b16 %v721
        %v931 = vunpack.c.l.b16 %v722
        %v932 = vunpack.c.l.b16 %v723
        %v933 = vunpack.c.l.b16 %v724
        %v934 = vunpack.c.l.b16 %v725
        %v935 = vunpack.c.l.b16 %v726
        %v936 = vunpack.c.l.b16 %v727
        %v937 = vunpack.c.l.b16 %v728
        %v938 = vunpack.c.l.b16 %v729
        %v939 = vunpack.c.l.b16 %v730
        %v940 = vunpack.c.l.b16 %v731
        %v941 = vunpack.c.l.b16 %v732
        %v942 = vunpack.c.l.b16 %v733
        %v943 = vunpack.c.l.b16 %v734
        %v944 = vunpack.c.l.b16 %v735
        %v945 = vunpack.c.l.b16 %v736
        %v946 = vpack.c.b16 %v931, %v930
        %v947 = vpack.c.b16 %v933, %v932
        %v948 = vpack.c.b16 %v935, %v934
        %v949 = vpack.c.b16 %v937, %v936
        %v950 = vpack.c.b16 %v939, %v938
        %v951 = vpack.c.b16 %v941, %v940
        %v952 = vpack.c.b16 %v943, %v942
        %v953 = vpack.c.b16 %v945, %v944
        %v978 = vunpack.c.l.b16 %v753
        %v979 = vunpack.c.l.b16 %v754
        %v980 = vunpack.c.l.b16 %v755
        %v981 = vunpack.c.l.b16 %v756
        %v982 = vunpack.c.l.b16 %v757
        %v983 = vunpack.c.l.b16 %v758
        %v984 = vunpack.c.l.b16 %v759
        %v985 = vunpack.c.l.b16 %v760
        %v986 = vunpack.c.l.b16 %v761
        %v987 = vunpack.c.l.b16 %v762
        %v988 = vunpack.c.l.b16 %v763
        %v989 = vunpack.c.l.b16 %v764
        %v990 = vunpack.c.l.b16 %v765
        %v991 = vunpack.c.l.b16 %v766
        %v992 = vunpack.c.l.b16 %v767
        %v993 = vunpack.c.l.b16 %v768
        %v994 = vpack.c.b16 %v979, %v978
        %v995 = vpack.c.b16 %v981, %v980
        %v996 = vpack.c.b16 %v983, %v982
        %v997 = vpack.c.b16 %v985, %v984
        %v998 = vpack.c.b16 %v987, %v986
        %v999 = vpack.c.b16 %v989, %v988
        %v1000 = vpack.c.b16 %v991, %v990
        %v1001 = vpack.c.b16 %v993, %v992
        %1010 = vmatpush.bf16.xpose.msra.mxu0 %v1001
        %1011 = vmatpush.bf16.xpose.msra.mxu0 %v1000
        %1012 = vmatpush.bf16.xpose.msra.mxu0 %v999
        %1013 = vmatpush.bf16.xpose.msra.mxu0 %v998
        %1014 = vmatpush.bf16.xpose.msra.mxu0 %v997
        %1015 = vmatpush.bf16.xpose.msra.mxu0 %v996
        %1016 = vmatpush.bf16.xpose.msra.mxu0 %v995
        %1017 = vmatpush.bf16.xpose.msra.mxu0 %v994
        %1018 = vmatmul.bf16.gmra.mxu0 %v946
        %v1019 = vpop.f32.mrf.mxu0
        %v1020 = vadd.f32 0.0, %v1019
        %v1021 = vpop.f32.mrf.mxu0
        %v1022 = vadd.f32 0.0, %v1021
        %1023 = vmatmul.bf16.gmra.mxu0 %v947
        %v1024 = vpop.f32.mrf.mxu0
        %v1025 = vadd.f32 0.0, %v1024
        %v1026 = vpop.f32.mrf.mxu0
        %v1027 = vadd.f32 0.0, %v1026
        %1028 = vmatmul.bf16.gmra.mxu0 %v948
        %v1029 = vpop.f32.mrf.mxu0
        %v1030 = vadd.f32 0.0, %v1029
        %v1031 = vpop.f32.mrf.mxu0
        %v1032 = vadd.f32 0.0, %v1031
        %1033 = vmatmul.bf16.gmra.mxu0 %v949
        %v1034 = vpop.f32.mrf.mxu0
        %v1035 = vadd.f32 0.0, %v1034
        %v1036 = vpop.f32.mrf.mxu0
        %v1037 = vadd.f32 0.0, %v1036
        %1038 = vmatmul.bf16.gmra.mxu0 %v950
        %v1039 = vpop.f32.mrf.mxu0
        %v1040 = vadd.f32 0.0, %v1039
        %v1041 = vpop.f32.mrf.mxu0
        %v1042 = vadd.f32 0.0, %v1041
        %1043 = vmatmul.bf16.gmra.mxu0 %v951
        %v1044 = vpop.f32.mrf.mxu0
        %v1045 = vadd.f32 0.0, %v1044
        %v1046 = vpop.f32.mrf.mxu0
        %v1047 = vadd.f32 0.0, %v1046
        %1048 = vmatmul.bf16.gmra.mxu0 %v952
        %v1049 = vpop.f32.mrf.mxu0
        %v1050 = vadd.f32 0.0, %v1049
        %v1051 = vpop.f32.mrf.mxu0
        %v1052 = vadd.f32 0.0, %v1051
        %1053 = vmatmul.bf16.gmra.mxu0 %v953
        %v1054 = vpop.f32.mrf.mxu0
        %v1055 = vadd.f32 0.0, %v1054
        %v1056 = vpop.f32.mrf.mxu0
        %v1057 = vadd.f32 0.0, %v1056
        %1058 = vdwg.mxu0
        %1059 = vmax.xlane.f32.xlu0 %v875
        %v1060 = vpop.xlane.xlu0 %1059
        %1061 = vmax.xlane.f32.xlu0 %v877
        %v1062 = vpop.xlane.xlu0 %1061
        %1063 = vmax.xlane.f32.xlu0 %v880
        %v1064 = vpop.xlane.xlu0 %1063
        %1065 = vmax.xlane.f32.xlu0 %v882
        %v1066 = vpop.xlane.xlu0 %1065
        %1067 = vmax.xlane.f32.xlu0 %v885
        %v1068 = vpop.xlane.xlu0 %1067
        %1069 = vmax.xlane.f32.xlu0 %v887
        %v1070 = vpop.xlane.xlu0 %1069
        %1071 = vmax.xlane.f32.xlu0 %v890
        %v1072 = vpop.xlane.xlu0 %1071
        %1073 = vmax.xlane.f32.xlu0 %v892
        %v1074 = vpop.xlane.xlu0 %1073
        %1075 = vmax.xlane.f32.xlu0 %v895
        %v1076 = vpop.xlane.xlu0 %1075
        %1077 = vmax.xlane.f32.xlu0 %v897
        %v1078 = vpop.xlane.xlu0 %1077
        %1079 = vmax.xlane.f32.xlu0 %v900
        %v1080 = vpop.xlane.xlu0 %1079
        %1081 = vmax.xlane.f32.xlu0 %v902
        %v1082 = vpop.xlane.xlu0 %1081
        %1083 = vmax.xlane.f32.xlu0 %v905
        %v1084 = vpop.xlane.xlu0 %1083
        %1085 = vmax.xlane.f32.xlu0 %v907
        %v1086 = vpop.xlane.xlu0 %1085
        %1087 = vmax.xlane.f32.xlu0 %v910
        %v1088 = vpop.xlane.xlu0 %1087
        %1089 = vmax.xlane.f32.xlu0 %v912
        %v1090 = vpop.xlane.xlu0 %1089
        %1091 = vmax.xlane.f32.xlu0 %v1020
        %v1092 = vpop.xlane.xlu0 %1091
        %1093 = vmax.xlane.f32.xlu0 %v1022
        %v1094 = vpop.xlane.xlu0 %1093
        %1095 = vmax.xlane.f32.xlu0 %v1025
        %v1096 = vpop.xlane.xlu0 %1095
        %1097 = vmax.xlane.f32.xlu0 %v1027
        %v1098 = vpop.xlane.xlu0 %1097
        %1099 = vmax.xlane.f32.xlu0 %v1030
        %v1100 = vpop.xlane.xlu0 %1099
        %1101 = vmax.xlane.f32.xlu0 %v1032
        %v1102 = vpop.xlane.xlu0 %1101
        %1103 = vmax.xlane.f32.xlu0 %v1035
        %v1104 = vpop.xlane.xlu0 %1103
        %1105 = vmax.xlane.f32.xlu0 %v1037
        %v1106 = vpop.xlane.xlu0 %1105
        %1107 = vmax.xlane.f32.xlu0 %v1040
        %v1108 = vpop.xlane.xlu0 %1107
        %1109 = vmax.xlane.f32.xlu0 %v1042
        %v1110 = vpop.xlane.xlu0 %1109
        %1111 = vmax.xlane.f32.xlu0 %v1045
        %v1112 = vpop.xlane.xlu0 %1111
        %1113 = vmax.xlane.f32.xlu0 %v1047
        %v1114 = vpop.xlane.xlu0 %1113
        %1115 = vmax.xlane.f32.xlu0 %v1050
        %v1116 = vpop.xlane.xlu0 %1115
        %1117 = vmax.xlane.f32.xlu0 %v1052
        %v1118 = vpop.xlane.xlu0 %1117
        %1119 = vmax.xlane.f32.xlu0 %v1055
        %v1120 = vpop.xlane.xlu0 %1119
        %1121 = vmax.xlane.f32.xlu0 %v1057
        %v1122 = vpop.xlane.xlu0 %1121
        %v1123 = vsub.f32 %v875, %v1060
        %v1124 = vsub.f32 %v877, %v1062
        %v1125 = vsub.f32 %v880, %v1064
        %v1126 = vsub.f32 %v882, %v1066
        %v1127 = vsub.f32 %v885, %v1068
        %v1128 = vsub.f32 %v887, %v1070
        %v1129 = vsub.f32 %v890, %v1072
        %v1130 = vsub.f32 %v892, %v1074
        %v1131 = vsub.f32 %v895, %v1076
        %v1132 = vsub.f32 %v897, %v1078
        %v1133 = vsub.f32 %v900, %v1080
        %v1134 = vsub.f32 %v902, %v1082
        %v1135 = vsub.f32 %v905, %v1084
        %v1136 = vsub.f32 %v907, %v1086
        %v1137 = vsub.f32 %v910, %v1088
        %v1138 = vsub.f32 %v912, %v1090
        %v1139 = vsub.f32 %v1020, %v1092
        %v1140 = vsub.f32 %v1022, %v1094
        %v1141 = vsub.f32 %v1025, %v1096
        %v1142 = vsub.f32 %v1027, %v1098
        %v1143 = vsub.f32 %v1030, %v1100
        %v1144 = vsub.f32 %v1032, %v1102
        %v1145 = vsub.f32 %v1035, %v1104
        %v1146 = vsub.f32 %v1037, %v1106
        %v1147 = vsub.f32 %v1040, %v1108
        %v1148 = vsub.f32 %v1042, %v1110
        %v1149 = vsub.f32 %v1045, %v1112
        %v1150 = vsub.f32 %v1047, %v1114
        %v1151 = vsub.f32 %v1050, %v1116
        %v1152 = vsub.f32 %v1052, %v1118
        %v1153 = vsub.f32 %v1055, %v1120
        %v1154 = vsub.f32 %v1057, %v1122
        %v1155 = vmul.f32 %v1123, 1.442695
        %v1156 = vpow.pop %v1155
        %v1157 = vmul.f32 %v1124, 1.442695
        %v1158 = vpow.pop %v1157
        %v1159 = vmul.f32 %v1125, 1.442695
        %v1160 = vpow.pop %v1159
        %v1161 = vmul.f32 %v1126, 1.442695
        %v1162 = vpow.pop %v1161
        %v1163 = vmul.f32 %v1127, 1.442695
        %v1164 = vpow.pop %v1163
        %v1165 = vmul.f32 %v1128, 1.442695
        %v1166 = vpow.pop %v1165
        %v1167 = vmul.f32 %v1129, 1.442695
        %v1168 = vpow.pop %v1167
        %v1169 = vmul.f32 %v1130, 1.442695
        %v1170 = vpow.pop %v1169
        %v1171 = vmul.f32 %v1131, 1.442695
        %v1172 = vpow.pop %v1171
        %v1173 = vmul.f32 %v1132, 1.442695
        %v1174 = vpow.pop %v1173
        %v1175 = vmul.f32 %v1133, 1.442695
        %v1176 = vpow.pop %v1175
        %v1177 = vmul.f32 %v1134, 1.442695
        %v1178 = vpow.pop %v1177
        %v1179 = vmul.f32 %v1135, 1.442695
        %v1180 = vpow.pop %v1179
        %v1181 = vmul.f32 %v1136, 1.442695
        %v1182 = vpow.pop %v1181
        %v1183 = vmul.f32 %v1137, 1.442695
        %v1184 = vpow.pop %v1183
        %v1185 = vmul.f32 %v1138, 1.442695
        %v1186 = vpow.pop %v1185
        %v1187 = vmul.f32 %v1139, 1.442695
        %v1188 = vpow.pop %v1187
        %v1189 = vmul.f32 %v1140, 1.442695
        %v1190 = vpow.pop %v1189
        %v1191 = vmul.f32 %v1141, 1.442695
        %v1192 = vpow.pop %v1191
        %v1193 = vmul.f32 %v1142, 1.442695
        %v1194 = vpow.pop %v1193
        %v1195 = vmul.f32 %v1143, 1.442695
        %v1196 = vpow.pop %v1195
        %v1197 = vmul.f32 %v1144, 1.442695
        %v1198 = vpow.pop %v1197
        %v1199 = vmul.f32 %v1145, 1.442695
        %v1200 = vpow.pop %v1199
        %v1201 = vmul.f32 %v1146, 1.442695
        %v1202 = vpow.pop %v1201
        %v1203 = vmul.f32 %v1147, 1.442695
        %v1204 = vpow.pop %v1203
        %v1205 = vmul.f32 %v1148, 1.442695
        %v1206 = vpow.pop %v1205
        %v1207 = vmul.f32 %v1149, 1.442695
        %v1208 = vpow.pop %v1207
        %v1209 = vmul.f32 %v1150, 1.442695
        %v1210 = vpow.pop %v1209
        %v1211 = vmul.f32 %v1151, 1.442695
        %v1212 = vpow.pop %v1211
        %v1213 = vmul.f32 %v1152, 1.442695
        %v1214 = vpow.pop %v1213
        %v1215 = vmul.f32 %v1153, 1.442695
        %v1216 = vpow.pop %v1215
        %v1217 = vmul.f32 %v1154, 1.442695
        %v1218 = vpow.pop %v1217
        %1219 = vadd.xlane.f32.xlu0 %v1156
        %v1220 = vpop.xlane.xlu0 %1219
        %1221 = vadd.xlane.f32.xlu0 %v1158
        %v1222 = vpop.xlane.xlu0 %1221
        %1223 = vadd.xlane.f32.xlu0 %v1160
        %v1224 = vpop.xlane.xlu0 %1223
        %1225 = vadd.xlane.f32.xlu0 %v1162
        %v1226 = vpop.xlane.xlu0 %1225
        %1227 = vadd.xlane.f32.xlu0 %v1164
        %v1228 = vpop.xlane.xlu0 %1227
        %1229 = vadd.xlane.f32.xlu0 %v1166
        %v1230 = vpop.xlane.xlu0 %1229
        %1231 = vadd.xlane.f32.xlu0 %v1168
        %v1232 = vpop.xlane.xlu0 %1231
        %1233 = vadd.xlane.f32.xlu0 %v1170
        %v1234 = vpop.xlane.xlu0 %1233
        %1235 = vadd.xlane.f32.xlu0 %v1172
        %v1236 = vpop.xlane.xlu0 %1235
        %1237 = vadd.xlane.f32.xlu0 %v1174
        %v1238 = vpop.xlane.xlu0 %1237
        %1239 = vadd.xlane.f32.xlu0 %v1176
        %v1240 = vpop.xlane.xlu0 %1239
        %1241 = vadd.xlane.f32.xlu0 %v1178
        %v1242 = vpop.xlane.xlu0 %1241
        %1243 = vadd.xlane.f32.xlu0 %v1180
        %v1244 = vpop.xlane.xlu0 %1243
        %1245 = vadd.xlane.f32.xlu0 %v1182
        %v1246 = vpop.xlane.xlu0 %1245
        %1247 = vadd.xlane.f32.xlu0 %v1184
        %v1248 = vpop.xlane.xlu0 %1247
        %1249 = vadd.xlane.f32.xlu0 %v1186
        %v1250 = vpop.xlane.xlu0 %1249
        %1251 = vadd.xlane.f32.xlu0 %v1188
        %v1252 = vpop.xlane.xlu0 %1251
        %1253 = vadd.xlane.f32.xlu0 %v1190
        %v1254 = vpop.xlane.xlu0 %1253
        %1255 = vadd.xlane.f32.xlu0 %v1192
        %v1256 = vpop.xlane.xlu0 %1255
        %1257 = vadd.xlane.f32.xlu0 %v1194
        %v1258 = vpop.xlane.xlu0 %1257
        %1259 = vadd.xlane.f32.xlu0 %v1196
        %v1260 = vpop.xlane.xlu0 %1259
        %1261 = vadd.xlane.f32.xlu0 %v1198
        %v1262 = vpop.xlane.xlu0 %1261
        %1263 = vadd.xlane.f32.xlu0 %v1200
        %v1264 = vpop.xlane.xlu0 %1263
        %1265 = vadd.xlane.f32.xlu0 %v1202
        %v1266 = vpop.xlane.xlu0 %1265
        %1267 = vadd.xlane.f32.xlu0 %v1204
        %v1268 = vpop.xlane.xlu0 %1267
        %1269 = vadd.xlane.f32.xlu0 %v1206
        %v1270 = vpop.xlane.xlu0 %1269
        %1271 = vadd.xlane.f32.xlu0 %v1208
        %v1272 = vpop.xlane.xlu0 %1271
        %1273 = vadd.xlane.f32.xlu0 %v1210
        %v1274 = vpop.xlane.xlu0 %1273
        %1275 = vadd.xlane.f32.xlu0 %v1212
        %v1276 = vpop.xlane.xlu0 %1275
        %1277 = vadd.xlane.f32.xlu0 %v1214
        %v1278 = vpop.xlane.xlu0 %1277
        %1279 = vadd.xlane.f32.xlu0 %v1216
        %v1280 = vpop.xlane.xlu0 %1279
        %1281 = vadd.xlane.f32.xlu0 %v1218
        %v1282 = vpop.xlane.xlu0 %1281
        %v1283 = vrcp.pop %v1220
        %v1284 = vrcp.pop %v1222
        %v1285 = vrcp.pop %v1224
        %v1286 = vrcp.pop %v1226
        %v1287 = vrcp.pop %v1228
        %v1288 = vrcp.pop %v1230
        %v1289 = vrcp.pop %v1232
        %v1290 = vrcp.pop %v1234
        %v1291 = vrcp.pop %v1236
        %v1292 = vrcp.pop %v1238
        %v1293 = vrcp.pop %v1240
        %v1294 = vrcp.pop %v1242
        %v1295 = vrcp.pop %v1244
        %v1296 = vrcp.pop %v1246
        %v1297 = vrcp.pop %v1248
        %v1298 = vrcp.pop %v1250
        %v1299 = vrcp.pop %v1252
        %v1300 = vrcp.pop %v1254
        %v1301 = vrcp.pop %v1256
        %v1302 = vrcp.pop %v1258
        %v1303 = vrcp.pop %v1260
        %v1304 = vrcp.pop %v1262
        %v1305 = vrcp.pop %v1264
        %v1306 = vrcp.pop %v1266
        %v1307 = vrcp.pop %v1268
        %v1308 = vrcp.pop %v1270
        %v1309 = vrcp.pop %v1272
        %v1310 = vrcp.pop %v1274
        %v1311 = vrcp.pop %v1276
        %v1312 = vrcp.pop %v1278
        %v1313 = vrcp.pop %v1280
        %v1314 = vrcp.pop %v1282
        %v1315 = vmul.f32 %v1156, %v1283
        %v1316 = vmul.f32 %v1158, %v1284
        %v1317 = vmul.f32 %v1160, %v1285
        %v1318 = vmul.f32 %v1162, %v1286
        %v1319 = vmul.f32 %v1164, %v1287
        %v1320 = vmul.f32 %v1166, %v1288
        %v1321 = vmul.f32 %v1168, %v1289
        %v1322 = vmul.f32 %v1170, %v1290
        %v1323 = vmul.f32 %v1172, %v1291
        %v1324 = vmul.f32 %v1174, %v1292
        %v1325 = vmul.f32 %v1176, %v1293
        %v1326 = vmul.f32 %v1178, %v1294
        %v1327 = vmul.f32 %v1180, %v1295
        %v1328 = vmul.f32 %v1182, %v1296
        %v1329 = vmul.f32 %v1184, %v1297
        %v1330 = vmul.f32 %v1186, %v1298
        %v1331 = vmul.f32 %v1188, %v1299
        %v1332 = vmul.f32 %v1190, %v1300
        %v1333 = vmul.f32 %v1192, %v1301
        %v1334 = vmul.f32 %v1194, %v1302
        %v1335 = vmul.f32 %v1196, %v1303
        %v1336 = vmul.f32 %v1198, %v1304
        %v1337 = vmul.f32 %v1200, %v1305
        %v1338 = vmul.f32 %v1202, %v1306
        %v1339 = vmul.f32 %v1204, %v1307
        %v1340 = vmul.f32 %v1206, %v1308
        %v1341 = vmul.f32 %v1208, %v1309
        %v1342 = vmul.f32 %v1210, %v1310
        %v1343 = vmul.f32 %v1212, %v1311
        %v1344 = vmul.f32 %v1214, %v1312
        %v1345 = vmul.f32 %v1216, %v1313
        %v1346 = vmul.f32 %v1218, %v1314
        %v1347 = vpack.c.bf16 %v1315, %v1315
        %v1348 = vpack.c.bf16 %v1316, %v1316
        %v1349 = vpack.c.bf16 %v1317, %v1317
        %v1350 = vpack.c.bf16 %v1318, %v1318
        %v1351 = vpack.c.bf16 %v1319, %v1319
        %v1352 = vpack.c.bf16 %v1320, %v1320
        %v1353 = vpack.c.bf16 %v1321, %v1321
        %v1354 = vpack.c.bf16 %v1322, %v1322
        %v1355 = vpack.c.bf16 %v1323, %v1323
        %v1356 = vpack.c.bf16 %v1324, %v1324
        %v1357 = vpack.c.bf16 %v1325, %v1325
        %v1358 = vpack.c.bf16 %v1326, %v1326
        %v1359 = vpack.c.bf16 %v1327, %v1327
        %v1360 = vpack.c.bf16 %v1328, %v1328
        %v1361 = vpack.c.bf16 %v1329, %v1329
        %v1362 = vpack.c.bf16 %v1330, %v1330
        %v1363 = vpack.c.bf16 %v1331, %v1331
        %v1364 = vpack.c.bf16 %v1332, %v1332
        %v1365 = vpack.c.bf16 %v1333, %v1333
        %v1366 = vpack.c.bf16 %v1334, %v1334
        %v1367 = vpack.c.bf16 %v1335, %v1335
        %v1368 = vpack.c.bf16 %v1336, %v1336
        %v1369 = vpack.c.bf16 %v1337, %v1337
        %v1370 = vpack.c.bf16 %v1338, %v1338
        %v1371 = vpack.c.bf16 %v1339, %v1339
        %v1372 = vpack.c.bf16 %v1340, %v1340
        %v1373 = vpack.c.bf16 %v1341, %v1341
        %v1374 = vpack.c.bf16 %v1342, %v1342
        %v1375 = vpack.c.bf16 %v1343, %v1343
        %v1376 = vpack.c.bf16 %v1344, %v1344
        %v1377 = vpack.c.bf16 %v1345, %v1345
        %v1378 = vpack.c.bf16 %v1346, %v1346
        %v1379 = vld [vmem:[#allocation5 + $0x8] sm:$0xf]
        %v1380 = vld [vmem:[#allocation5 + $0x18] sm:$0xf]
        %v1381 = vld [vmem:[#allocation5 + $0x28] sm:$0xf]
        %v1382 = vld [vmem:[#allocation5 + $0x38] sm:$0xf]
        %v1383 = vld [vmem:[#allocation5 + $0x48] sm:$0xf]
        %v1384 = vld [vmem:[#allocation5 + $0x58] sm:$0xf]
        %v1385 = vld [vmem:[#allocation5 + $0x68] sm:$0xf]
        %v1386 = vld [vmem:[#allocation5 + $0x78] sm:$0xf]
        %v1387 = vld [vmem:[#allocation5 + $0x88] sm:$0xf]
        %v1388 = vld [vmem:[#allocation5 + $0x98] sm:$0xf]
        %v1389 = vld [vmem:[#allocation5 + $0xa8] sm:$0xf]
        %v1390 = vld [vmem:[#allocation5 + $0xb8] sm:$0xf]
        %v1391 = vld [vmem:[#allocation5 + $0xc8] sm:$0xf]
        %v1392 = vld [vmem:[#allocation5 + $0xd8] sm:$0xf]
        %v1393 = vld [vmem:[#allocation5 + $0xe8] sm:$0xf]
        %v1394 = vld [vmem:[#allocation5 + $0xf8] sm:$0xf]
        %v1411 = vunpack.c.l.b16 %v1379
        %v1412 = vunpack.c.l.b16 %v1380
        %v1413 = vunpack.c.l.b16 %v1381
        %v1414 = vunpack.c.l.b16 %v1382
        %v1415 = vunpack.c.l.b16 %v1383
        %v1416 = vunpack.c.l.b16 %v1384
        %v1417 = vunpack.c.l.b16 %v1385
        %v1418 = vunpack.c.l.b16 %v1386
        %v1419 = vunpack.c.l.b16 %v1387
        %v1420 = vunpack.c.l.b16 %v1388
        %v1421 = vunpack.c.l.b16 %v1389
        %v1422 = vunpack.c.l.b16 %v1390
        %v1423 = vunpack.c.l.b16 %v1391
        %v1424 = vunpack.c.l.b16 %v1392
        %v1425 = vunpack.c.l.b16 %v1393
        %v1426 = vunpack.c.l.b16 %v1394
        %v1427 = vpack.c.b16 %v1412, %v1411
        %v1428 = vpack.c.b16 %v1414, %v1413
        %v1429 = vpack.c.b16 %v1416, %v1415
        %v1430 = vpack.c.b16 %v1418, %v1417
        %v1431 = vpack.c.b16 %v1420, %v1419
        %v1432 = vpack.c.b16 %v1422, %v1421
        %v1433 = vpack.c.b16 %v1424, %v1423
        %v1434 = vpack.c.b16 %v1426, %v1425
        %1443 = vmatpush.bf16.msra.mxu0 %v1434
        %1444 = vmatpush.bf16.msra.mxu0 %v1433
        %1445 = vmatpush.bf16.msra.mxu0 %v1432
        %1446 = vmatpush.bf16.msra.mxu0 %v1431
        %1447 = vmatpush.bf16.msra.mxu0 %v1430
        %1448 = vmatpush.bf16.msra.mxu0 %v1429
        %1449 = vmatpush.bf16.msra.mxu0 %v1428
        %1450 = vmatpush.bf16.msra.mxu0 %v1427
        %1451 = vmatmul.bf16.gmra.mxu0 %v383
        %v1452 = vpop.f32.mrf.mxu0
        %v1453 = vadd.f32 0.0, %v1452
        %v1454 = vpop.f32.mrf.mxu0
        %v1455 = vadd.f32 0.0, %v1454
        %1456 = vmatmul.bf16.gmra.mxu0 %v384
        %v1457 = vpop.f32.mrf.mxu0
        %v1458 = vadd.f32 0.0, %v1457
        %v1459 = vpop.f32.mrf.mxu0
        %v1460 = vadd.f32 0.0, %v1459
        %1461 = vmatmul.bf16.gmra.mxu0 %v385
        %v1462 = vpop.f32.mrf.mxu0
        %v1463 = vadd.f32 0.0, %v1462
        %v1464 = vpop.f32.mrf.mxu0
        %v1465 = vadd.f32 0.0, %v1464
        %1466 = vmatmul.bf16.gmra.mxu0 %v386
        %v1467 = vpop.f32.mrf.mxu0
        %v1468 = vadd.f32 0.0, %v1467
        %v1469 = vpop.f32.mrf.mxu0
        %v1470 = vadd.f32 0.0, %v1469
        %1471 = vmatmul.bf16.gmra.mxu0 %v387
        %v1472 = vpop.f32.mrf.mxu0
        %v1473 = vadd.f32 0.0, %v1472
        %v1474 = vpop.f32.mrf.mxu0
        %v1475 = vadd.f32 0.0, %v1474
        %1476 = vmatmul.bf16.gmra.mxu0 %v388
        %v1477 = vpop.f32.mrf.mxu0
        %v1478 = vadd.f32 0.0, %v1477
        %v1479 = vpop.f32.mrf.mxu0
        %v1480 = vadd.f32 0.0, %v1479
        %1481 = vmatmul.bf16.gmra.mxu0 %v389
        %v1482 = vpop.f32.mrf.mxu0
        %v1483 = vadd.f32 0.0, %v1482
        %v1484 = vpop.f32.mrf.mxu0
        %v1485 = vadd.f32 0.0, %v1484
        %1486 = vmatmul.bf16.gmra.mxu0 %v390
        %v1487 = vpop.f32.mrf.mxu0
        %v1488 = vadd.f32 0.0, %v1487
        %v1489 = vpop.f32.mrf.mxu0
        %v1490 = vadd.f32 0.0, %v1489
        %1491 = vmatmul.bf16.gmra.mxu0 %v391
        %v1492 = vpop.f32.mrf.mxu0
        %v1493 = vadd.f32 0.0, %v1492
        %v1494 = vpop.f32.mrf.mxu0
        %v1495 = vadd.f32 0.0, %v1494
        %1496 = vmatmul.bf16.gmra.mxu0 %v392
        %v1497 = vpop.f32.mrf.mxu0
        %v1498 = vadd.f32 0.0, %v1497
        %v1499 = vpop.f32.mrf.mxu0
        %v1500 = vadd.f32 0.0, %v1499
        %1501 = vmatmul.bf16.gmra.mxu0 %v393
        %v1502 = vpop.f32.mrf.mxu0
        %v1503 = vadd.f32 0.0, %v1502
        %v1504 = vpop.f32.mrf.mxu0
        %v1505 = vadd.f32 0.0, %v1504
        %1506 = vmatmul.bf16.gmra.mxu0 %v394
        %v1507 = vpop.f32.mrf.mxu0
        %v1508 = vadd.f32 0.0, %v1507
        %v1509 = vpop.f32.mrf.mxu0
        %v1510 = vadd.f32 0.0, %v1509
        %1511 = vmatmul.bf16.gmra.mxu0 %v395
        %v1512 = vpop.f32.mrf.mxu0
        %v1513 = vadd.f32 0.0, %v1512
        %v1514 = vpop.f32.mrf.mxu0
        %v1515 = vadd.f32 0.0, %v1514
        %1516 = vmatmul.bf16.gmra.mxu0 %v396
        %v1517 = vpop.f32.mrf.mxu0
        %v1518 = vadd.f32 0.0, %v1517
        %v1519 = vpop.f32.mrf.mxu0
        %v1520 = vadd.f32 0.0, %v1519
        %1521 = vmatmul.bf16.gmra.mxu0 %v397
        %v1522 = vpop.f32.mrf.mxu0
        %v1523 = vadd.f32 0.0, %v1522
        %v1524 = vpop.f32.mrf.mxu0
        %v1525 = vadd.f32 0.0, %v1524
        %1526 = vmatmul.bf16.gmra.mxu0 %v398
        %v1527 = vpop.f32.mrf.mxu0
        %v1528 = vadd.f32 0.0, %v1527
        %v1529 = vpop.f32.mrf.mxu0
        %v1530 = vadd.f32 0.0, %v1529
        %1531 = vdwg.mxu0
        %v1532 = vld [vmem:[#allocation5 + $0xc] sm:$0xf]
        %v1533 = vld [vmem:[#allocation5 + $0x1c] sm:$0xf]
        %v1534 = vld [vmem:[#allocation5 + $0x2c] sm:$0xf]
        %v1535 = vld [vmem:[#allocation5 + $0x3c] sm:$0xf]
        %v1536 = vld [vmem:[#allocation5 + $0x4c] sm:$0xf]
        %v1537 = vld [vmem:[#allocation5 + $0x5c] sm:$0xf]
        %v1538 = vld [vmem:[#allocation5 + $0x6c] sm:$0xf]
        %v1539 = vld [vmem:[#allocation5 + $0x7c] sm:$0xf]
        %v1540 = vld [vmem:[#allocation5 + $0x8c] sm:$0xf]
        %v1541 = vld [vmem:[#allocation5 + $0x9c] sm:$0xf]
        %v1542 = vld [vmem:[#allocation5 + $0xac] sm:$0xf]
        %v1543 = vld [vmem:[#allocation5 + $0xbc] sm:$0xf]
        %v1544 = vld [vmem:[#allocation5 + $0xcc] sm:$0xf]
        %v1545 = vld [vmem:[#allocation5 + $0xdc] sm:$0xf]
        %v1546 = vld [vmem:[#allocation5 + $0xec] sm:$0xf]
        %v1547 = vld [vmem:[#allocation5 + $0xfc] sm:$0xf]
        %v1564 = vunpack.c.l.b16 %v1532
        %v1565 = vunpack.c.l.b16 %v1533
        %v1566 = vunpack.c.l.b16 %v1534
        %v1567 = vunpack.c.l.b16 %v1535
        %v1568 = vunpack.c.l.b16 %v1536
        %v1569 = vunpack.c.l.b16 %v1537
        %v1570 = vunpack.c.l.b16 %v1538
        %v1571 = vunpack.c.l.b16 %v1539
        %v1572 = vunpack.c.l.b16 %v1540
        %v1573 = vunpack.c.l.b16 %v1541
        %v1574 = vunpack.c.l.b16 %v1542
        %v1575 = vunpack.c.l.b16 %v1543
        %v1576 = vunpack.c.l.b16 %v1544
        %v1577 = vunpack.c.l.b16 %v1545
        %v1578 = vunpack.c.l.b16 %v1546
        %v1579 = vunpack.c.l.b16 %v1547
        %v1580 = vpack.c.b16 %v1565, %v1564
        %v1581 = vpack.c.b16 %v1567, %v1566
        %v1582 = vpack.c.b16 %v1569, %v1568
        %v1583 = vpack.c.b16 %v1571, %v1570
        %v1584 = vpack.c.b16 %v1573, %v1572
        %v1585 = vpack.c.b16 %v1575, %v1574
        %v1586 = vpack.c.b16 %v1577, %v1576
        %v1587 = vpack.c.b16 %v1579, %v1578
        %1596 = vmatpush.bf16.msra.mxu0 %v1587
        %1597 = vmatpush.bf16.msra.mxu0 %v1586
        %1598 = vmatpush.bf16.msra.mxu0 %v1585
        %1599 = vmatpush.bf16.msra.mxu0 %v1584
        %1600 = vmatpush.bf16.msra.mxu0 %v1583
        %1601 = vmatpush.bf16.msra.mxu0 %v1582
        %1602 = vmatpush.bf16.msra.mxu0 %v1581
        %1603 = vmatpush.bf16.msra.mxu0 %v1580
        %1604 = vmatmul.bf16.gmra.mxu0 %v383
        %v1605 = vpop.f32.mrf.mxu0
        %v1606 = vadd.f32 0.0, %v1605
        %v1607 = vpop.f32.mrf.mxu0
        %v1608 = vadd.f32 0.0, %v1607
        %1609 = vmatmul.bf16.gmra.mxu0 %v384
        %v1610 = vpop.f32.mrf.mxu0
        %v1611 = vadd.f32 0.0, %v1610
        %v1612 = vpop.f32.mrf.mxu0
        %v1613 = vadd.f32 0.0, %v1612
        %1614 = vmatmul.bf16.gmra.mxu0 %v385
        %v1615 = vpop.f32.mrf.mxu0
        %v1616 = vadd.f32 0.0, %v1615
        %v1617 = vpop.f32.mrf.mxu0
        %v1618 = vadd.f32 0.0, %v1617
        %1619 = vmatmul.bf16.gmra.mxu0 %v386
        %v1620 = vpop.f32.mrf.mxu0
        %v1621 = vadd.f32 0.0, %v1620
        %v1622 = vpop.f32.mrf.mxu0
        %v1623 = vadd.f32 0.0, %v1622
        %1624 = vmatmul.bf16.gmra.mxu0 %v387
        %v1625 = vpop.f32.mrf.mxu0
        %v1626 = vadd.f32 0.0, %v1625
        %v1627 = vpop.f32.mrf.mxu0
        %v1628 = vadd.f32 0.0, %v1627
        %1629 = vmatmul.bf16.gmra.mxu0 %v388
        %v1630 = vpop.f32.mrf.mxu0
        %v1631 = vadd.f32 0.0, %v1630
        %v1632 = vpop.f32.mrf.mxu0
        %v1633 = vadd.f32 0.0, %v1632
        %1634 = vmatmul.bf16.gmra.mxu0 %v389
        %v1635 = vpop.f32.mrf.mxu0
        %v1636 = vadd.f32 0.0, %v1635
        %v1637 = vpop.f32.mrf.mxu0
        %v1638 = vadd.f32 0.0, %v1637
        %1639 = vmatmul.bf16.gmra.mxu0 %v390
        %v1640 = vpop.f32.mrf.mxu0
        %v1641 = vadd.f32 0.0, %v1640
        %v1642 = vpop.f32.mrf.mxu0
        %v1643 = vadd.f32 0.0, %v1642
        %1644 = vmatmul.bf16.gmra.mxu0 %v391
        %v1645 = vpop.f32.mrf.mxu0
        %v1646 = vadd.f32 0.0, %v1645
        %v1647 = vpop.f32.mrf.mxu0
        %v1648 = vadd.f32 0.0, %v1647
        %1649 = vmatmul.bf16.gmra.mxu0 %v392
        %v1650 = vpop.f32.mrf.mxu0
        %v1651 = vadd.f32 0.0, %v1650
        %v1652 = vpop.f32.mrf.mxu0
        %v1653 = vadd.f32 0.0, %v1652
        %1654 = vmatmul.bf16.gmra.mxu0 %v393
        %v1655 = vpop.f32.mrf.mxu0
        %v1656 = vadd.f32 0.0, %v1655
        %v1657 = vpop.f32.mrf.mxu0
        %v1658 = vadd.f32 0.0, %v1657
        %1659 = vmatmul.bf16.gmra.mxu0 %v394
        %v1660 = vpop.f32.mrf.mxu0
        %v1661 = vadd.f32 0.0, %v1660
        %v1662 = vpop.f32.mrf.mxu0
        %v1663 = vadd.f32 0.0, %v1662
        %1664 = vmatmul.bf16.gmra.mxu0 %v395
        %v1665 = vpop.f32.mrf.mxu0
        %v1666 = vadd.f32 0.0, %v1665
        %v1667 = vpop.f32.mrf.mxu0
        %v1668 = vadd.f32 0.0, %v1667
        %1669 = vmatmul.bf16.gmra.mxu0 %v396
        %v1670 = vpop.f32.mrf.mxu0
        %v1671 = vadd.f32 0.0, %v1670
        %v1672 = vpop.f32.mrf.mxu0
        %v1673 = vadd.f32 0.0, %v1672
        %1674 = vmatmul.bf16.gmra.mxu0 %v397
        %v1675 = vpop.f32.mrf.mxu0
        %v1676 = vadd.f32 0.0, %v1675
        %v1677 = vpop.f32.mrf.mxu0
        %v1678 = vadd.f32 0.0, %v1677
        %1679 = vmatmul.bf16.gmra.mxu0 %v398
        %v1680 = vpop.f32.mrf.mxu0
        %v1681 = vadd.f32 0.0, %v1680
        %v1682 = vpop.f32.mrf.mxu0
        %v1683 = vadd.f32 0.0, %v1682
        %1684 = vdwg.mxu0
        %v1685 = vpack.c.bf16 %v1453, %v1453
        %v1686 = vpack.c.bf16 %v1455, %v1455
        %v1687 = vpack.c.bf16 %v1458, %v1458
        %v1688 = vpack.c.bf16 %v1460, %v1460
        %v1689 = vpack.c.bf16 %v1463, %v1463
        %v1690 = vpack.c.bf16 %v1465, %v1465
        %v1691 = vpack.c.bf16 %v1468, %v1468
        %v1692 = vpack.c.bf16 %v1470, %v1470
        %v1693 = vpack.c.bf16 %v1473, %v1473
        %v1694 = vpack.c.bf16 %v1475, %v1475
        %v1695 = vpack.c.bf16 %v1478, %v1478
        %v1696 = vpack.c.bf16 %v1480, %v1480
        %v1697 = vpack.c.bf16 %v1483, %v1483
        %v1698 = vpack.c.bf16 %v1485, %v1485
        %v1699 = vpack.c.bf16 %v1488, %v1488
        %v1700 = vpack.c.bf16 %v1490, %v1490
        %v1701 = vpack.c.bf16 %v1493, %v1493
        %v1702 = vpack.c.bf16 %v1495, %v1495
        %v1703 = vpack.c.bf16 %v1498, %v1498
        %v1704 = vpack.c.bf16 %v1500, %v1500
        %v1705 = vpack.c.bf16 %v1503, %v1503
        %v1706 = vpack.c.bf16 %v1505, %v1505
        %v1707 = vpack.c.bf16 %v1508, %v1508
        %v1708 = vpack.c.bf16 %v1510, %v1510
        %v1709 = vpack.c.bf16 %v1513, %v1513
        %v1710 = vpack.c.bf16 %v1515, %v1515
        %v1711 = vpack.c.bf16 %v1518, %v1518
        %v1712 = vpack.c.bf16 %v1520, %v1520
        %v1713 = vpack.c.bf16 %v1523, %v1523
        %v1714 = vpack.c.bf16 %v1525, %v1525
        %v1715 = vpack.c.bf16 %v1528, %v1528
        %v1716 = vpack.c.bf16 %v1530, %v1530
        %v1717 = vpack.c.bf16 %v1606, %v1606
        %v1718 = vpack.c.bf16 %v1608, %v1608
        %v1719 = vpack.c.bf16 %v1611, %v1611
        %v1720 = vpack.c.bf16 %v1613, %v1613
        %v1721 = vpack.c.bf16 %v1616, %v1616
        %v1722 = vpack.c.bf16 %v1618, %v1618
        %v1723 = vpack.c.bf16 %v1621, %v1621
        %v1724 = vpack.c.bf16 %v1623, %v1623
        %v1725 = vpack.c.bf16 %v1626, %v1626
        %v1726 = vpack.c.bf16 %v1628, %v1628
        %v1727 = vpack.c.bf16 %v1631, %v1631
        %v1728 = vpack.c.bf16 %v1633, %v1633
        %v1729 = vpack.c.bf16 %v1636, %v1636
        %v1730 = vpack.c.bf16 %v1638, %v1638
        %v1731 = vpack.c.bf16 %v1641, %v1641
        %v1732 = vpack.c.bf16 %v1643, %v1643
        %v1733 = vpack.c.bf16 %v1646, %v1646
        %v1734 = vpack.c.bf16 %v1648, %v1648
        %v1735 = vpack.c.bf16 %v1651, %v1651
        %v1736 = vpack.c.bf16 %v1653, %v1653
        %v1737 = vpack.c.bf16 %v1656, %v1656
        %v1738 = vpack.c.bf16 %v1658, %v1658
        %v1739 = vpack.c.bf16 %v1661, %v1661
        %v1740 = vpack.c.bf16 %v1663, %v1663
        %v1741 = vpack.c.bf16 %v1666, %v1666
        %v1742 = vpack.c.bf16 %v1668, %v1668
        %v1743 = vpack.c.bf16 %v1671, %v1671
        %v1744 = vpack.c.bf16 %v1673, %v1673
        %v1745 = vpack.c.bf16 %v1676, %v1676
        %v1746 = vpack.c.bf16 %v1678, %v1678
        %v1747 = vpack.c.bf16 %v1681, %v1681
        %v1748 = vpack.c.bf16 %v1683, %v1683
        %v1765 = vunpack.c.l.b16 %v1685
        %v1766 = vunpack.c.l.b16 %v1686
        %v1767 = vunpack.c.l.b16 %v1687
        %v1768 = vunpack.c.l.b16 %v1688
        %v1769 = vunpack.c.l.b16 %v1689
        %v1770 = vunpack.c.l.b16 %v1690
        %v1771 = vunpack.c.l.b16 %v1691
        %v1772 = vunpack.c.l.b16 %v1692
        %v1773 = vunpack.c.l.b16 %v1693
        %v1774 = vunpack.c.l.b16 %v1694
        %v1775 = vunpack.c.l.b16 %v1695
        %v1776 = vunpack.c.l.b16 %v1696
        %v1777 = vunpack.c.l.b16 %v1697
        %v1778 = vunpack.c.l.b16 %v1698
        %v1779 = vunpack.c.l.b16 %v1699
        %v1780 = vunpack.c.l.b16 %v1700
        %v1781 = vpack.c.b16 %v1766, %v1765
        %v1782 = vpack.c.b16 %v1768, %v1767
        %v1783 = vpack.c.b16 %v1770, %v1769
        %v1784 = vpack.c.b16 %v1772, %v1771
        %v1785 = vpack.c.b16 %v1774, %v1773
        %v1786 = vpack.c.b16 %v1776, %v1775
        %v1787 = vpack.c.b16 %v1778, %v1777
        %v1788 = vpack.c.b16 %v1780, %v1779
        %v1813 = vunpack.c.l.b16 %v1717
        %v1814 = vunpack.c.l.b16 %v1718
        %v1815 = vunpack.c.l.b16 %v1719
        %v1816 = vunpack.c.l.b16 %v1720
        %v1817 = vunpack.c.l.b16 %v1721
        %v1818 = vunpack.c.l.b16 %v1722
        %v1819 = vunpack.c.l.b16 %v1723
        %v1820 = vunpack.c.l.b16 %v1724
        %v1821 = vunpack.c.l.b16 %v1725
        %v1822 = vunpack.c.l.b16 %v1726
        %v1823 = vunpack.c.l.b16 %v1727
        %v1824 = vunpack.c.l.b16 %v1728
        %v1825 = vunpack.c.l.b16 %v1729
        %v1826 = vunpack.c.l.b16 %v1730
        %v1827 = vunpack.c.l.b16 %v1731
        %v1828 = vunpack.c.l.b16 %v1732
        %v1829 = vpack.c.b16 %v1814, %v1813
        %v1830 = vpack.c.b16 %v1816, %v1815
        %v1831 = vpack.c.b16 %v1818, %v1817
        %v1832 = vpack.c.b16 %v1820, %v1819
        %v1833 = vpack.c.b16 %v1822, %v1821
        %v1834 = vpack.c.b16 %v1824, %v1823
        %v1835 = vpack.c.b16 %v1826, %v1825
        %v1836 = vpack.c.b16 %v1828, %v1827
        %1845 = vmatpush.bf16.xpose.msra.mxu0 %v1836
        %1846 = vmatpush.bf16.xpose.msra.mxu0 %v1835
        %1847 = vmatpush.bf16.xpose.msra.mxu0 %v1834
        %1848 = vmatpush.bf16.xpose.msra.mxu0 %v1833
        %1849 = vmatpush.bf16.xpose.msra.mxu0 %v1832
        %1850 = vmatpush.bf16.xpose.msra.mxu0 %v1831
        %1851 = vmatpush.bf16.xpose.msra.mxu0 %v1830
        %1852 = vmatpush.bf16.xpose.msra.mxu0 %v1829
        %1853 = vmatmul.bf16.gmra.mxu0 %v1781
        %v1854 = vpop.f32.mrf.mxu0
        %v1855 = vadd.f32 0.0, %v1854
        %v1856 = vpop.f32.mrf.mxu0
        %v1857 = vadd.f32 0.0, %v1856
        %1858 = vmatmul.bf16.gmra.mxu0 %v1782
        %v1859 = vpop.f32.mrf.mxu0
        %v1860 = vadd.f32 0.0, %v1859
        %v1861 = vpop.f32.mrf.mxu0
        %v1862 = vadd.f32 0.0, %v1861
        %1863 = vmatmul.bf16.gmra.mxu0 %v1783
        %v1864 = vpop.f32.mrf.mxu0
        %v1865 = vadd.f32 0.0, %v1864
        %v1866 = vpop.f32.mrf.mxu0
        %v1867 = vadd.f32 0.0, %v1866
        %1868 = vmatmul.bf16.gmra.mxu0 %v1784
        %v1869 = vpop.f32.mrf.mxu0
        %v1870 = vadd.f32 0.0, %v1869
        %v1871 = vpop.f32.mrf.mxu0
        %v1872 = vadd.f32 0.0, %v1871
        %1873 = vmatmul.bf16.gmra.mxu0 %v1785
        %v1874 = vpop.f32.mrf.mxu0
        %v1875 = vadd.f32 0.0, %v1874
        %v1876 = vpop.f32.mrf.mxu0
        %v1877 = vadd.f32 0.0, %v1876
        %1878 = vmatmul.bf16.gmra.mxu0 %v1786
        %v1879 = vpop.f32.mrf.mxu0
        %v1880 = vadd.f32 0.0, %v1879
        %v1881 = vpop.f32.mrf.mxu0
        %v1882 = vadd.f32 0.0, %v1881
        %1883 = vmatmul.bf16.gmra.mxu0 %v1787
        %v1884 = vpop.f32.mrf.mxu0
        %v1885 = vadd.f32 0.0, %v1884
        %v1886 = vpop.f32.mrf.mxu0
        %v1887 = vadd.f32 0.0, %v1886
        %1888 = vmatmul.bf16.gmra.mxu0 %v1788
        %v1889 = vpop.f32.mrf.mxu0
        %v1890 = vadd.f32 0.0, %v1889
        %v1891 = vpop.f32.mrf.mxu0
        %v1892 = vadd.f32 0.0, %v1891
        %1893 = vdwg.mxu0
        %v1910 = vunpack.c.l.b16 %v1701
        %v1911 = vunpack.c.l.b16 %v1702
        %v1912 = vunpack.c.l.b16 %v1703
        %v1913 = vunpack.c.l.b16 %v1704
        %v1914 = vunpack.c.l.b16 %v1705
        %v1915 = vunpack.c.l.b16 %v1706
        %v1916 = vunpack.c.l.b16 %v1707
        %v1917 = vunpack.c.l.b16 %v1708
        %v1918 = vunpack.c.l.b16 %v1709
        %v1919 = vunpack.c.l.b16 %v1710
        %v1920 = vunpack.c.l.b16 %v1711
        %v1921 = vunpack.c.l.b16 %v1712
        %v1922 = vunpack.c.l.b16 %v1713
        %v1923 = vunpack.c.l.b16 %v1714
        %v1924 = vunpack.c.l.b16 %v1715
        %v1925 = vunpack.c.l.b16 %v1716
        %v1926 = vpack.c.b16 %v1911, %v1910
        %v1927 = vpack.c.b16 %v1913, %v1912
        %v1928 = vpack.c.b16 %v1915, %v1914
        %v1929 = vpack.c.b16 %v1917, %v1916
        %v1930 = vpack.c.b16 %v1919, %v1918
        %v1931 = vpack.c.b16 %v1921, %v1920
        %v1932 = vpack.c.b16 %v1923, %v1922
        %v1933 = vpack.c.b16 %v1925, %v1924
        %v1958 = vunpack.c.l.b16 %v1733
        %v1959 = vunpack.c.l.b16 %v1734
        %v1960 = vunpack.c.l.b16 %v1735
        %v1961 = vunpack.c.l.b16 %v1736
        %v1962 = vunpack.c.l.b16 %v1737
        %v1963 = vunpack.c.l.b16 %v1738
        %v1964 = vunpack.c.l.b16 %v1739
        %v1965 = vunpack.c.l.b16 %v1740
        %v1966 = vunpack.c.l.b16 %v1741
        %v1967 = vunpack.c.l.b16 %v1742
        %v1968 = vunpack.c.l.b16 %v1743
        %v1969 = vunpack.c.l.b16 %v1744
        %v1970 = vunpack.c.l.b16 %v1745
        %v1971 = vunpack.c.l.b16 %v1746
        %v1972 = vunpack.c.l.b16 %v1747
        %v1973 = vunpack.c.l.b16 %v1748
        %v1974 = vpack.c.b16 %v1959, %v1958
        %v1975 = vpack.c.b16 %v1961, %v1960
        %v1976 = vpack.c.b16 %v1963, %v1962
        %v1977 = vpack.c.b16 %v1965, %v1964
        %v1978 = vpack.c.b16 %v1967, %v1966
        %v1979 = vpack.c.b16 %v1969, %v1968
        %v1980 = vpack.c.b16 %v1971, %v1970
        %v1981 = vpack.c.b16 %v1973, %v1972
        %1990 = vmatpush.bf16.xpose.msra.mxu0 %v1981
        %1991 = vmatpush.bf16.xpose.msra.mxu0 %v1980
        %1992 = vmatpush.bf16.xpose.msra.mxu0 %v1979
        %1993 = vmatpush.bf16.xpose.msra.mxu0 %v1978
        %1994 = vmatpush.bf16.xpose.msra.mxu0 %v1977
        %1995 = vmatpush.bf16.xpose.msra.mxu0 %v1976
        %1996 = vmatpush.bf16.xpose.msra.mxu0 %v1975
        %1997 = vmatpush.bf16.xpose.msra.mxu0 %v1974
        %1998 = vmatmul.bf16.gmra.mxu0 %v1926
        %v1999 = vpop.f32.mrf.mxu0
        %v2000 = vadd.f32 0.0, %v1999
        %v2001 = vpop.f32.mrf.mxu0
        %v2002 = vadd.f32 0.0, %v2001
        %2003 = vmatmul.bf16.gmra.mxu0 %v1927
        %v2004 = vpop.f32.mrf.mxu0
        %v2005 = vadd.f32 0.0, %v2004
        %v2006 = vpop.f32.mrf.mxu0
        %v2007 = vadd.f32 0.0, %v2006
        %2008 = vmatmul.bf16.gmra.mxu0 %v1928
        %v2009 = vpop.f32.mrf.mxu0
        %v2010 = vadd.f32 0.0, %v2009
        %v2011 = vpop.f32.mrf.mxu0
        %v2012 = vadd.f32 0.0, %v2011
        %2013 = vmatmul.bf16.gmra.mxu0 %v1929
        %v2014 = vpop.f32.mrf.mxu0
        %v2015 = vadd.f32 0.0, %v2014
        %v2016 = vpop.f32.mrf.mxu0
        %v2017 = vadd.f32 0.0, %v2016
        %2018 = vmatmul.bf16.gmra.mxu0 %v1930
        %v2019 = vpop.f32.mrf.mxu0
        %v2020 = vadd.f32 0.0, %v2019
        %v2021 = vpop.f32.mrf.mxu0
        %v2022 = vadd.f32 0.0, %v2021
        %2023 = vmatmul.bf16.gmra.mxu0 %v1931
        %v2024 = vpop.f32.mrf.mxu0
        %v2025 = vadd.f32 0.0, %v2024
        %v2026 = vpop.f32.mrf.mxu0
        %v2027 = vadd.f32 0.0, %v2026
        %2028 = vmatmul.bf16.gmra.mxu0 %v1932
        %v2029 = vpop.f32.mrf.mxu0
        %v2030 = vadd.f32 0.0, %v2029
        %v2031 = vpop.f32.mrf.mxu0
        %v2032 = vadd.f32 0.0, %v2031
        %2033 = vmatmul.bf16.gmra.mxu0 %v1933
        %v2034 = vpop.f32.mrf.mxu0
        %v2035 = vadd.f32 0.0, %v2034
        %v2036 = vpop.f32.mrf.mxu0
        %v2037 = vadd.f32 0.0, %v2036
        %2038 = vdwg.mxu0
        %2039 = vmax.xlane.f32.xlu0 %v1855
        %v2040 = vpop.xlane.xlu0 %2039
        %2041 = vmax.xlane.f32.xlu0 %v1857
        %v2042 = vpop.xlane.xlu0 %2041
        %2043 = vmax.xlane.f32.xlu0 %v1860
        %v2044 = vpop.xlane.xlu0 %2043
        %2045 = vmax.xlane.f32.xlu0 %v1862
        %v2046 = vpop.xlane.xlu0 %2045
        %2047 = vmax.xlane.f32.xlu0 %v1865
        %v2048 = vpop.xlane.xlu0 %2047
        %2049 = vmax.xlane.f32.xlu0 %v1867
        %v2050 = vpop.xlane.xlu0 %2049
        %2051 = vmax.xlane.f32.xlu0 %v1870
        %v2052 = vpop.xlane.xlu0 %2051
        %2053 = vmax.xlane.f32.xlu0 %v1872
        %v2054 = vpop.xlane.xlu0 %2053
        %2055 = vmax.xlane.f32.xlu0 %v1875
        %v2056 = vpop.xlane.xlu0 %2055
        %2057 = vmax.xlane.f32.xlu0 %v1877
        %v2058 = vpop.xlane.xlu0 %2057
        %2059 = vmax.xlane.f32.xlu0 %v1880
        %v2060 = vpop.xlane.xlu0 %2059
        %2061 = vmax.xlane.f32.xlu0 %v1882
        %v2062 = vpop.xlane.xlu0 %2061
        %2063 = vmax.xlane.f32.xlu0 %v1885
        %v2064 = vpop.xlane.xlu0 %2063
        %2065 = vmax.xlane.f32.xlu0 %v1887
        %v2066 = vpop.xlane.xlu0 %2065
        %2067 = vmax.xlane.f32.xlu0 %v1890
        %v2068 = vpop.xlane.xlu0 %2067
        %2069 = vmax.xlane.f32.xlu0 %v1892
        %v2070 = vpop.xlane.xlu0 %2069
        %2071 = vmax.xlane.f32.xlu0 %v2000
        %v2072 = vpop.xlane.xlu0 %2071
        %2073 = vmax.xlane.f32.xlu0 %v2002
        %v2074 = vpop.xlane.xlu0 %2073
        %2075 = vmax.xlane.f32.xlu0 %v2005
        %v2076 = vpop.xlane.xlu0 %2075
        %2077 = vmax.xlane.f32.xlu0 %v2007
        %v2078 = vpop.xlane.xlu0 %2077
        %2079 = vmax.xlane.f32.xlu0 %v2010
        %v2080 = vpop.xlane.xlu0 %2079
        %2081 = vmax.xlane.f32.xlu0 %v2012
        %v2082 = vpop.xlane.xlu0 %2081
        %2083 = vmax.xlane.f32.xlu0 %v2015
        %v2084 = vpop.xlane.xlu0 %2083
        %2085 = vmax.xlane.f32.xlu0 %v2017
        %v2086 = vpop.xlane.xlu0 %2085
        %2087 = vmax.xlane.f32.xlu0 %v2020
        %v2088 = vpop.xlane.xlu0 %2087
        %2089 = vmax.xlane.f32.xlu0 %v2022
        %v2090 = vpop.xlane.xlu0 %2089
        %2091 = vmax.xlane.f32.xlu0 %v2025
        %v2092 = vpop.xlane.xlu0 %2091
        %2093 = vmax.xlane.f32.xlu0 %v2027
        %v2094 = vpop.xlane.xlu0 %2093
        %2095 = vmax.xlane.f32.xlu0 %v2030
        %v2096 = vpop.xlane.xlu0 %2095
        %2097 = vmax.xlane.f32.xlu0 %v2032
        %v2098 = vpop.xlane.xlu0 %2097
        %2099 = vmax.xlane.f32.xlu0 %v2035
        %v2100 = vpop.xlane.xlu0 %2099
        %2101 = vmax.xlane.f32.xlu0 %v2037
        %v2102 = vpop.xlane.xlu0 %2101
        %v2103 = vsub.f32 %v1855, %v2040
        %v2104 = vsub.f32 %v1857, %v2042
        %v2105 = vsub.f32 %v1860, %v2044
        %v2106 = vsub.f32 %v1862, %v2046
        %v2107 = vsub.f32 %v1865, %v2048
        %v2108 = vsub.f32 %v1867, %v2050
        %v2109 = vsub.f32 %v1870, %v2052
        %v2110 = vsub.f32 %v1872, %v2054
        %v2111 = vsub.f32 %v1875, %v2056
        %v2112 = vsub.f32 %v1877, %v2058
        %v2113 = vsub.f32 %v1880, %v2060
        %v2114 = vsub.f32 %v1882, %v2062
        %v2115 = vsub.f32 %v1885, %v2064
        %v2116 = vsub.f32 %v1887, %v2066
        %v2117 = vsub.f32 %v1890, %v2068
        %v2118 = vsub.f32 %v1892, %v2070
        %v2119 = vsub.f32 %v2000, %v2072
        %v2120 = vsub.f32 %v2002, %v2074
        %v2121 = vsub.f32 %v2005, %v2076
        %v2122 = vsub.f32 %v2007, %v2078
        %v2123 = vsub.f32 %v2010, %v2080
        %v2124 = vsub.f32 %v2012, %v2082
        %v2125 = vsub.f32 %v2015, %v2084
        %v2126 = vsub.f32 %v2017, %v2086
        %v2127 = vsub.f32 %v2020, %v2088
        %v2128 = vsub.f32 %v2022, %v2090
        %v2129 = vsub.f32 %v2025, %v2092
        %v2130 = vsub.f32 %v2027, %v2094
        %v2131 = vsub.f32 %v2030, %v2096
        %v2132 = vsub.f32 %v2032, %v2098
        %v2133 = vsub.f32 %v2035, %v2100
        %v2134 = vsub.f32 %v2037, %v2102
        %v2135 = vmul.f32 %v2103, 1.442695
        %v2136 = vpow.pop %v2135
        %v2137 = vmul.f32 %v2104, 1.442695
        %v2138 = vpow.pop %v2137
        %v2139 = vmul.f32 %v2105, 1.442695
        %v2140 = vpow.pop %v2139
        %v2141 = vmul.f32 %v2106, 1.442695
        %v2142 = vpow.pop %v2141
        %v2143 = vmul.f32 %v2107, 1.442695
        %v2144 = vpow.pop %v2143
        %v2145 = vmul.f32 %v2108, 1.442695
        %v2146 = vpow.pop %v2145
        %v2147 = vmul.f32 %v2109, 1.442695
        %v2148 = vpow.pop %v2147
        %v2149 = vmul.f32 %v2110, 1.442695
        %v2150 = vpow.pop %v2149
        %v2151 = vmul.f32 %v2111, 1.442695
        %v2152 = vpow.pop %v2151
        %v2153 = vmul.f32 %v2112, 1.442695
        %v2154 = vpow.pop %v2153
        %v2155 = vmul.f32 %v2113, 1.442695
        %v2156 = vpow.pop %v2155
        %v2157 = vmul.f32 %v2114, 1.442695
        %v2158 = vpow.pop %v2157
        %v2159 = vmul.f32 %v2115, 1.442695
        %v2160 = vpow.pop %v2159
        %v2161 = vmul.f32 %v2116, 1.442695
        %v2162 = vpow.pop %v2161
        %v2163 = vmul.f32 %v2117, 1.442695
        %v2164 = vpow.pop %v2163
        %v2165 = vmul.f32 %v2118, 1.442695
        %v2166 = vpow.pop %v2165
        %v2167 = vmul.f32 %v2119, 1.442695
        %v2168 = vpow.pop %v2167
        %v2169 = vmul.f32 %v2120, 1.442695
        %v2170 = vpow.pop %v2169
        %v2171 = vmul.f32 %v2121, 1.442695
        %v2172 = vpow.pop %v2171
        %v2173 = vmul.f32 %v2122, 1.442695
        %v2174 = vpow.pop %v2173
        %v2175 = vmul.f32 %v2123, 1.442695
        %v2176 = vpow.pop %v2175
        %v2177 = vmul.f32 %v2124, 1.442695
        %v2178 = vpow.pop %v2177
        %v2179 = vmul.f32 %v2125, 1.442695
        %v2180 = vpow.pop %v2179
        %v2181 = vmul.f32 %v2126, 1.442695
        %v2182 = vpow.pop %v2181
        %v2183 = vmul.f32 %v2127, 1.442695
        %v2184 = vpow.pop %v2183
        %v2185 = vmul.f32 %v2128, 1.442695
        %v2186 = vpow.pop %v2185
        %v2187 = vmul.f32 %v2129, 1.442695
        %v2188 = vpow.pop %v2187
        %v2189 = vmul.f32 %v2130, 1.442695
        %v2190 = vpow.pop %v2189
        %v2191 = vmul.f32 %v2131, 1.442695
        %v2192 = vpow.pop %v2191
        %v2193 = vmul.f32 %v2132, 1.442695
        %v2194 = vpow.pop %v2193
        %v2195 = vmul.f32 %v2133, 1.442695
        %v2196 = vpow.pop %v2195
        %v2197 = vmul.f32 %v2134, 1.442695
        %v2198 = vpow.pop %v2197
        %2199 = vadd.xlane.f32.xlu0 %v2136
        %v2200 = vpop.xlane.xlu0 %2199
        %2201 = vadd.xlane.f32.xlu0 %v2138
        %v2202 = vpop.xlane.xlu0 %2201
        %2203 = vadd.xlane.f32.xlu0 %v2140
        %v2204 = vpop.xlane.xlu0 %2203
        %2205 = vadd.xlane.f32.xlu0 %v2142
        %v2206 = vpop.xlane.xlu0 %2205
        %2207 = vadd.xlane.f32.xlu0 %v2144
        %v2208 = vpop.xlane.xlu0 %2207
        %2209 = vadd.xlane.f32.xlu0 %v2146
        %v2210 = vpop.xlane.xlu0 %2209
        %2211 = vadd.xlane.f32.xlu0 %v2148
        %v2212 = vpop.xlane.xlu0 %2211
        %2213 = vadd.xlane.f32.xlu0 %v2150
        %v2214 = vpop.xlane.xlu0 %2213
        %2215 = vadd.xlane.f32.xlu0 %v2152
        %v2216 = vpop.xlane.xlu0 %2215
        %2217 = vadd.xlane.f32.xlu0 %v2154
        %v2218 = vpop.xlane.xlu0 %2217
        %2219 = vadd.xlane.f32.xlu0 %v2156
        %v2220 = vpop.xlane.xlu0 %2219
        %2221 = vadd.xlane.f32.xlu0 %v2158
        %v2222 = vpop.xlane.xlu0 %2221
        %2223 = vadd.xlane.f32.xlu0 %v2160
        %v2224 = vpop.xlane.xlu0 %2223
        %2225 = vadd.xlane.f32.xlu0 %v2162
        %v2226 = vpop.xlane.xlu0 %2225
        %2227 = vadd.xlane.f32.xlu0 %v2164
        %v2228 = vpop.xlane.xlu0 %2227
        %2229 = vadd.xlane.f32.xlu0 %v2166
        %v2230 = vpop.xlane.xlu0 %2229
        %2231 = vadd.xlane.f32.xlu0 %v2168
        %v2232 = vpop.xlane.xlu0 %2231
        %2233 = vadd.xlane.f32.xlu0 %v2170
        %v2234 = vpop.xlane.xlu0 %2233
        %2235 = vadd.xlane.f32.xlu0 %v2172
        %v2236 = vpop.xlane.xlu0 %2235
        %2237 = vadd.xlane.f32.xlu0 %v2174
        %v2238 = vpop.xlane.xlu0 %2237
        %2239 = vadd.xlane.f32.xlu0 %v2176
        %v2240 = vpop.xlane.xlu0 %2239
        %2241 = vadd.xlane.f32.xlu0 %v2178
        %v2242 = vpop.xlane.xlu0 %2241
        %2243 = vadd.xlane.f32.xlu0 %v2180
        %v2244 = vpop.xlane.xlu0 %2243
        %2245 = vadd.xlane.f32.xlu0 %v2182
        %v2246 = vpop.xlane.xlu0 %2245
        %2247 = vadd.xlane.f32.xlu0 %v2184
        %v2248 = vpop.xlane.xlu0 %2247
        %2249 = vadd.xlane.f32.xlu0 %v2186
        %v2250 = vpop.xlane.xlu0 %2249
        %2251 = vadd.xlane.f32.xlu0 %v2188
        %v2252 = vpop.xlane.xlu0 %2251
        %2253 = vadd.xlane.f32.xlu0 %v2190
        %v2254 = vpop.xlane.xlu0 %2253
        %2255 = vadd.xlane.f32.xlu0 %v2192
        %v2256 = vpop.xlane.xlu0 %2255
        %2257 = vadd.xlane.f32.xlu0 %v2194
        %v2258 = vpop.xlane.xlu0 %2257
        %2259 = vadd.xlane.f32.xlu0 %v2196
        %v2260 = vpop.xlane.xlu0 %2259
        %2261 = vadd.xlane.f32.xlu0 %v2198
        %v2262 = vpop.xlane.xlu0 %2261
        %v2263 = vrcp.pop %v2200
        %v2264 = vrcp.pop %v2202
        %v2265 = vrcp.pop %v2204
        %v2266 = vrcp.pop %v2206
        %v2267 = vrcp.pop %v2208
        %v2268 = vrcp.pop %v2210
        %v2269 = vrcp.pop %v2212
        %v2270 = vrcp.pop %v2214
        %v2271 = vrcp.pop %v2216
        %v2272 = vrcp.pop %v2218
        %v2273 = vrcp.pop %v2220
        %v2274 = vrcp.pop %v2222
        %v2275 = vrcp.pop %v2224
        %v2276 = vrcp.pop %v2226
        %v2277 = vrcp.pop %v2228
        %v2278 = vrcp.pop %v2230
        %v2279 = vrcp.pop %v2232
        %v2280 = vrcp.pop %v2234
        %v2281 = vrcp.pop %v2236
        %v2282 = vrcp.pop %v2238
        %v2283 = vrcp.pop %v2240
        %v2284 = vrcp.pop %v2242
        %v2285 = vrcp.pop %v2244
        %v2286 = vrcp.pop %v2246
        %v2287 = vrcp.pop %v2248
        %v2288 = vrcp.pop %v2250
        %v2289 = vrcp.pop %v2252
        %v2290 = vrcp.pop %v2254
        %v2291 = vrcp.pop %v2256
        %v2292 = vrcp.pop %v2258
        %v2293 = vrcp.pop %v2260
        %v2294 = vrcp.pop %v2262
        %v2295 = vmul.f32 %v2136, %v2263
        %v2296 = vmul.f32 %v2138, %v2264
        %v2297 = vmul.f32 %v2140, %v2265
        %v2298 = vmul.f32 %v2142, %v2266
        %v2299 = vmul.f32 %v2144, %v2267
        %v2300 = vmul.f32 %v2146, %v2268
        %v2301 = vmul.f32 %v2148, %v2269
        %v2302 = vmul.f32 %v2150, %v2270
        %v2303 = vmul.f32 %v2152, %v2271
        %v2304 = vmul.f32 %v2154, %v2272
        %v2305 = vmul.f32 %v2156, %v2273
        %v2306 = vmul.f32 %v2158, %v2274
        %v2307 = vmul.f32 %v2160, %v2275
        %v2308 = vmul.f32 %v2162, %v2276
        %v2309 = vmul.f32 %v2164, %v2277
        %v2310 = vmul.f32 %v2166, %v2278
        %v2311 = vmul.f32 %v2168, %v2279
        %v2312 = vmul.f32 %v2170, %v2280
        %v2313 = vmul.f32 %v2172, %v2281
        %v2314 = vmul.f32 %v2174, %v2282
        %v2315 = vmul.f32 %v2176, %v2283
        %v2316 = vmul.f32 %v2178, %v2284
        %v2317 = vmul.f32 %v2180, %v2285
        %v2318 = vmul.f32 %v2182, %v2286
        %v2319 = vmul.f32 %v2184, %v2287
        %v2320 = vmul.f32 %v2186, %v2288
        %v2321 = vmul.f32 %v2188, %v2289
        %v2322 = vmul.f32 %v2190, %v2290
        %v2323 = vmul.f32 %v2192, %v2291
        %v2324 = vmul.f32 %v2194, %v2292
        %v2325 = vmul.f32 %v2196, %v2293
        %v2326 = vmul.f32 %v2198, %v2294
        %v2327 = vpack.c.bf16 %v2295, %v2295
        %v2328 = vpack.c.bf16 %v2296, %v2296
        %v2329 = vpack.c.bf16 %v2297, %v2297
        %v2330 = vpack.c.bf16 %v2298, %v2298
        %v2331 = vpack.c.bf16 %v2299, %v2299
        %v2332 = vpack.c.bf16 %v2300, %v2300
        %v2333 = vpack.c.bf16 %v2301, %v2301
        %v2334 = vpack.c.bf16 %v2302, %v2302
        %v2335 = vpack.c.bf16 %v2303, %v2303
        %v2336 = vpack.c.bf16 %v2304, %v2304
        %v2337 = vpack.c.bf16 %v2305, %v2305
        %v2338 = vpack.c.bf16 %v2306, %v2306
        %v2339 = vpack.c.bf16 %v2307, %v2307
        %v2340 = vpack.c.bf16 %v2308, %v2308
        %v2341 = vpack.c.bf16 %v2309, %v2309
        %v2342 = vpack.c.bf16 %v2310, %v2310
        %v2343 = vpack.c.bf16 %v2311, %v2311
        %v2344 = vpack.c.bf16 %v2312, %v2312
        %v2345 = vpack.c.bf16 %v2313, %v2313
        %v2346 = vpack.c.bf16 %v2314, %v2314
        %v2347 = vpack.c.bf16 %v2315, %v2315
        %v2348 = vpack.c.bf16 %v2316, %v2316
        %v2349 = vpack.c.bf16 %v2317, %v2317
        %v2350 = vpack.c.bf16 %v2318, %v2318
        %v2351 = vpack.c.bf16 %v2319, %v2319
        %v2352 = vpack.c.bf16 %v2320, %v2320
        %v2353 = vpack.c.bf16 %v2321, %v2321
        %v2354 = vpack.c.bf16 %v2322, %v2322
        %v2355 = vpack.c.bf16 %v2323, %v2323
        %v2356 = vpack.c.bf16 %v2324, %v2324
        %v2357 = vpack.c.bf16 %v2325, %v2325
        %v2358 = vpack.c.bf16 %v2326, %v2326
        %v2391 = vunpack.c.l.b16 %v1347
        %v2392 = vunpack.c.l.b16 %v1348
        %v2393 = vunpack.c.l.b16 %v1349
        %v2394 = vunpack.c.l.b16 %v1350
        %v2395 = vunpack.c.l.b16 %v1351
        %v2396 = vunpack.c.l.b16 %v1352
        %v2397 = vunpack.c.l.b16 %v1353
        %v2398 = vunpack.c.l.b16 %v1354
        %v2399 = vunpack.c.l.b16 %v1355
        %v2400 = vunpack.c.l.b16 %v1356
        %v2401 = vunpack.c.l.b16 %v1357
        %v2402 = vunpack.c.l.b16 %v1358
        %v2403 = vunpack.c.l.b16 %v1359
        %v2404 = vunpack.c.l.b16 %v1360
        %v2405 = vunpack.c.l.b16 %v1361
        %v2406 = vunpack.c.l.b16 %v1362
        %v2407 = vunpack.c.l.b16 %v1363
        %v2408 = vunpack.c.l.b16 %v1364
        %v2409 = vunpack.c.l.b16 %v1365
        %v2410 = vunpack.c.l.b16 %v1366
        %v2411 = vunpack.c.l.b16 %v1367
        %v2412 = vunpack.c.l.b16 %v1368
        %v2413 = vunpack.c.l.b16 %v1369
        %v2414 = vunpack.c.l.b16 %v1370
        %v2415 = vunpack.c.l.b16 %v1371
        %v2416 = vunpack.c.l.b16 %v1372
        %v2417 = vunpack.c.l.b16 %v1373
        %v2418 = vunpack.c.l.b16 %v1374
        %v2419 = vunpack.c.l.b16 %v1375
        %v2420 = vunpack.c.l.b16 %v1376
        %v2421 = vunpack.c.l.b16 %v1377
        %v2422 = vunpack.c.l.b16 %v1378
        %v2423 = vpack.c.b16 %v2392, %v2391
        %v2424 = vpack.c.b16 %v2394, %v2393
        %v2425 = vpack.c.b16 %v2396, %v2395
        %v2426 = vpack.c.b16 %v2398, %v2397
        %v2427 = vpack.c.b16 %v2400, %v2399
        %v2428 = vpack.c.b16 %v2402, %v2401
        %v2429 = vpack.c.b16 %v2404, %v2403
        %v2430 = vpack.c.b16 %v2406, %v2405
        %v2431 = vpack.c.b16 %v2408, %v2407
        %v2432 = vpack.c.b16 %v2410, %v2409
        %v2433 = vpack.c.b16 %v2412, %v2411
        %v2434 = vpack.c.b16 %v2414, %v2413
        %v2435 = vpack.c.b16 %v2416, %v2415
        %v2436 = vpack.c.b16 %v2418, %v2417
        %v2437 = vpack.c.b16 %v2420, %v2419
        %v2438 = vpack.c.b16 %v2422, %v2421
        %v2487 = vunpack.c.l.b16 %v2327
        %v2488 = vunpack.c.l.b16 %v2328
        %v2489 = vunpack.c.l.b16 %v2329
        %v2490 = vunpack.c.l.b16 %v2330
        %v2491 = vunpack.c.l.b16 %v2331
        %v2492 = vunpack.c.l.b16 %v2332
        %v2493 = vunpack.c.l.b16 %v2333
        %v2494 = vunpack.c.l.b16 %v2334
        %v2495 = vunpack.c.l.b16 %v2335
        %v2496 = vunpack.c.l.b16 %v2336
        %v2497 = vunpack.c.l.b16 %v2337
        %v2498 = vunpack.c.l.b16 %v2338
        %v2499 = vunpack.c.l.b16 %v2339
        %v2500 = vunpack.c.l.b16 %v2340
        %v2501 = vunpack.c.l.b16 %v2341
        %v2502 = vunpack.c.l.b16 %v2342
        %v2503 = vunpack.c.l.b16 %v2343
        %v2504 = vunpack.c.l.b16 %v2344
        %v2505 = vunpack.c.l.b16 %v2345
        %v2506 = vunpack.c.l.b16 %v2346
        %v2507 = vunpack.c.l.b16 %v2347
        %v2508 = vunpack.c.l.b16 %v2348
        %v2509 = vunpack.c.l.b16 %v2349
        %v2510 = vunpack.c.l.b16 %v2350
        %v2511 = vunpack.c.l.b16 %v2351
        %v2512 = vunpack.c.l.b16 %v2352
        %v2513 = vunpack.c.l.b16 %v2353
        %v2514 = vunpack.c.l.b16 %v2354
        %v2515 = vunpack.c.l.b16 %v2355
        %v2516 = vunpack.c.l.b16 %v2356
        %v2517 = vunpack.c.l.b16 %v2357
        %v2518 = vunpack.c.l.b16 %v2358
        %v2519 = vpack.c.b16 %v2488, %v2487
        %v2520 = vpack.c.b16 %v2490, %v2489
        %v2521 = vpack.c.b16 %v2492, %v2491
        %v2522 = vpack.c.b16 %v2494, %v2493
        %v2523 = vpack.c.b16 %v2496, %v2495
        %v2524 = vpack.c.b16 %v2498, %v2497
        %v2525 = vpack.c.b16 %v2500, %v2499
        %v2526 = vpack.c.b16 %v2502, %v2501
        %v2527 = vpack.c.b16 %v2504, %v2503
        %v2528 = vpack.c.b16 %v2506, %v2505
        %v2529 = vpack.c.b16 %v2508, %v2507
        %v2530 = vpack.c.b16 %v2510, %v2509
        %v2531 = vpack.c.b16 %v2512, %v2511
        %v2532 = vpack.c.b16 %v2514, %v2513
        %v2533 = vpack.c.b16 %v2516, %v2515
        %v2534 = vpack.c.b16 %v2518, %v2517
        %v2551 = vld [vmem:[#allocation8] sm:$0xf]
        %v2552 = vld [vmem:[#allocation8 + $0x4] sm:$0xf]
        %v2553 = vld [vmem:[#allocation8 + $0x8] sm:$0xf]
        %v2554 = vld [vmem:[#allocation8 + $0xc] sm:$0xf]
        %v2555 = vld [vmem:[#allocation8 + $0x10] sm:$0xf]
        %v2556 = vld [vmem:[#allocation8 + $0x14] sm:$0xf]
        %v2557 = vld [vmem:[#allocation8 + $0x18] sm:$0xf]
        %v2558 = vld [vmem:[#allocation8 + $0x1c] sm:$0xf]
        %v2559 = vld [vmem:[#allocation8 + $0x20] sm:$0xf]
        %v2560 = vld [vmem:[#allocation8 + $0x24] sm:$0xf]
        %v2561 = vld [vmem:[#allocation8 + $0x28] sm:$0xf]
        %v2562 = vld [vmem:[#allocation8 + $0x2c] sm:$0xf]
        %v2563 = vld [vmem:[#allocation8 + $0x30] sm:$0xf]
        %v2564 = vld [vmem:[#allocation8 + $0x34] sm:$0xf]
        %v2565 = vld [vmem:[#allocation8 + $0x38] sm:$0xf]
        %v2566 = vld [vmem:[#allocation8 + $0x3c] sm:$0xf]
        %v2567 = vld [vmem:[#allocation8 + $0x40] sm:$0xf]
        %v2568 = vld [vmem:[#allocation8 + $0x44] sm:$0xf]
        %v2569 = vld [vmem:[#allocation8 + $0x48] sm:$0xf]
        %v2570 = vld [vmem:[#allocation8 + $0x4c] sm:$0xf]
        %v2571 = vld [vmem:[#allocation8 + $0x50] sm:$0xf]
        %v2572 = vld [vmem:[#allocation8 + $0x54] sm:$0xf]
        %v2573 = vld [vmem:[#allocation8 + $0x58] sm:$0xf]
        %v2574 = vld [vmem:[#allocation8 + $0x5c] sm:$0xf]
        %v2575 = vld [vmem:[#allocation8 + $0x60] sm:$0xf]
        %v2576 = vld [vmem:[#allocation8 + $0x64] sm:$0xf]
        %v2577 = vld [vmem:[#allocation8 + $0x68] sm:$0xf]
        %v2578 = vld [vmem:[#allocation8 + $0x6c] sm:$0xf]
        %v2579 = vld [vmem:[#allocation8 + $0x70] sm:$0xf]
        %v2580 = vld [vmem:[#allocation8 + $0x74] sm:$0xf]
        %v2581 = vld [vmem:[#allocation8 + $0x78] sm:$0xf]
        %v2582 = vld [vmem:[#allocation8 + $0x7c] sm:$0xf]
        %v2615 = vunpack.c.l.b16 %v2551
        %v2616 = vunpack.c.l.b16 %v2552
        %v2617 = vunpack.c.l.b16 %v2553
        %v2618 = vunpack.c.l.b16 %v2554
        %v2619 = vunpack.c.l.b16 %v2555
        %v2620 = vunpack.c.l.b16 %v2556
        %v2621 = vunpack.c.l.b16 %v2557
        %v2622 = vunpack.c.l.b16 %v2558
        %v2623 = vunpack.c.l.b16 %v2559
        %v2624 = vunpack.c.l.b16 %v2560
        %v2625 = vunpack.c.l.b16 %v2561
        %v2626 = vunpack.c.l.b16 %v2562
        %v2627 = vunpack.c.l.b16 %v2563
        %v2628 = vunpack.c.l.b16 %v2564
        %v2629 = vunpack.c.l.b16 %v2565
        %v2630 = vunpack.c.l.b16 %v2566
        %v2631 = vunpack.c.l.b16 %v2567
        %v2632 = vunpack.c.l.b16 %v2568
        %v2633 = vunpack.c.l.b16 %v2569
        %v2634 = vunpack.c.l.b16 %v2570
        %v2635 = vunpack.c.l.b16 %v2571
        %v2636 = vunpack.c.l.b16 %v2572
        %v2637 = vunpack.c.l.b16 %v2573
        %v2638 = vunpack.c.l.b16 %v2574
        %v2639 = vunpack.c.l.b16 %v2575
        %v2640 = vunpack.c.l.b16 %v2576
        %v2641 = vunpack.c.l.b16 %v2577
        %v2642 = vunpack.c.l.b16 %v2578
        %v2643 = vunpack.c.l.b16 %v2579
        %v2644 = vunpack.c.l.b16 %v2580
        %v2645 = vunpack.c.l.b16 %v2581
        %v2646 = vunpack.c.l.b16 %v2582
        %v2647 = vpack.c.b16 %v2616, %v2615
        %v2648 = vpack.c.b16 %v2618, %v2617
        %v2649 = vpack.c.b16 %v2620, %v2619
        %v2650 = vpack.c.b16 %v2622, %v2621
        %v2651 = vpack.c.b16 %v2624, %v2623
        %v2652 = vpack.c.b16 %v2626, %v2625
        %v2653 = vpack.c.b16 %v2628, %v2627
        %v2654 = vpack.c.b16 %v2630, %v2629
        %v2655 = vpack.c.b16 %v2632, %v2631
        %v2656 = vpack.c.b16 %v2634, %v2633
        %v2657 = vpack.c.b16 %v2636, %v2635
        %v2658 = vpack.c.b16 %v2638, %v2637
        %v2659 = vpack.c.b16 %v2640, %v2639
        %v2660 = vpack.c.b16 %v2642, %v2641
        %v2661 = vpack.c.b16 %v2644, %v2643
        %v2662 = vpack.c.b16 %v2646, %v2645
        %2679 = vmatpush.bf16.msra.mxu0 %v2654
        %2680 = vmatpush.bf16.msra.mxu0 %v2653
        %2681 = vmatpush.bf16.msra.mxu0 %v2652
        %2682 = vmatpush.bf16.msra.mxu0 %v2651
        %2683 = vmatpush.bf16.msra.mxu0 %v2650
        %2684 = vmatpush.bf16.msra.mxu0 %v2649
        %2685 = vmatpush.bf16.msra.mxu0 %v2648
        %2686 = vmatpush.bf16.msra.mxu0 %v2647
        %2687 = vmatmul.bf16.gmra.mxu0 %v2423
        %v2688 = vpop.f32.mrf.mxu0
        %v2689 = vadd.f32 0.0, %v2688
        %v2690 = vpop.f32.mrf.mxu0
        %v2691 = vadd.f32 0.0, %v2690
        %2692 = vmatmul.bf16.gmra.mxu0 %v2424
        %v2693 = vpop.f32.mrf.mxu0
        %v2694 = vadd.f32 0.0, %v2693
        %v2695 = vpop.f32.mrf.mxu0
        %v2696 = vadd.f32 0.0, %v2695
        %2697 = vmatmul.bf16.gmra.mxu0 %v2425
        %v2698 = vpop.f32.mrf.mxu0
        %v2699 = vadd.f32 0.0, %v2698
        %v2700 = vpop.f32.mrf.mxu0
        %v2701 = vadd.f32 0.0, %v2700
        %2702 = vmatmul.bf16.gmra.mxu0 %v2426
        %v2703 = vpop.f32.mrf.mxu0
        %v2704 = vadd.f32 0.0, %v2703
        %v2705 = vpop.f32.mrf.mxu0
        %v2706 = vadd.f32 0.0, %v2705
        %2707 = vmatmul.bf16.gmra.mxu0 %v2427
        %v2708 = vpop.f32.mrf.mxu0
        %v2709 = vadd.f32 0.0, %v2708
        %v2710 = vpop.f32.mrf.mxu0
        %v2711 = vadd.f32 0.0, %v2710
        %2712 = vmatmul.bf16.gmra.mxu0 %v2428
        %v2713 = vpop.f32.mrf.mxu0
        %v2714 = vadd.f32 0.0, %v2713
        %v2715 = vpop.f32.mrf.mxu0
        %v2716 = vadd.f32 0.0, %v2715
        %2717 = vmatmul.bf16.gmra.mxu0 %v2429
        %v2718 = vpop.f32.mrf.mxu0
        %v2719 = vadd.f32 0.0, %v2718
        %v2720 = vpop.f32.mrf.mxu0
        %v2721 = vadd.f32 0.0, %v2720
        %2722 = vmatmul.bf16.gmra.mxu0 %v2430
        %v2723 = vpop.f32.mrf.mxu0
        %v2724 = vadd.f32 0.0, %v2723
        %v2725 = vpop.f32.mrf.mxu0
        %v2726 = vadd.f32 0.0, %v2725
        %2727 = vmatmul.bf16.gmra.mxu0 %v2431
        %v2728 = vpop.f32.mrf.mxu0
        %v2729 = vadd.f32 0.0, %v2728
        %v2730 = vpop.f32.mrf.mxu0
        %v2731 = vadd.f32 0.0, %v2730
        %2732 = vmatmul.bf16.gmra.mxu0 %v2432
        %v2733 = vpop.f32.mrf.mxu0
        %v2734 = vadd.f32 0.0, %v2733
        %v2735 = vpop.f32.mrf.mxu0
        %v2736 = vadd.f32 0.0, %v2735
        %2737 = vmatmul.bf16.gmra.mxu0 %v2433
        %v2738 = vpop.f32.mrf.mxu0
        %v2739 = vadd.f32 0.0, %v2738
        %v2740 = vpop.f32.mrf.mxu0
        %v2741 = vadd.f32 0.0, %v2740
        %2742 = vmatmul.bf16.gmra.mxu0 %v2434
        %v2743 = vpop.f32.mrf.mxu0
        %v2744 = vadd.f32 0.0, %v2743
        %v2745 = vpop.f32.mrf.mxu0
        %v2746 = vadd.f32 0.0, %v2745
        %2747 = vmatmul.bf16.gmra.mxu0 %v2435
        %v2748 = vpop.f32.mrf.mxu0
        %v2749 = vadd.f32 0.0, %v2748
        %v2750 = vpop.f32.mrf.mxu0
        %v2751 = vadd.f32 0.0, %v2750
        %2752 = vmatmul.bf16.gmra.mxu0 %v2436
        %v2753 = vpop.f32.mrf.mxu0
        %v2754 = vadd.f32 0.0, %v2753
        %v2755 = vpop.f32.mrf.mxu0
        %v2756 = vadd.f32 0.0, %v2755
        %2757 = vmatmul.bf16.gmra.mxu0 %v2437
        %v2758 = vpop.f32.mrf.mxu0
        %v2759 = vadd.f32 0.0, %v2758
        %v2760 = vpop.f32.mrf.mxu0
        %v2761 = vadd.f32 0.0, %v2760
        %2762 = vmatmul.bf16.gmra.mxu0 %v2438
        %v2763 = vpop.f32.mrf.mxu0
        %v2764 = vadd.f32 0.0, %v2763
        %v2765 = vpop.f32.mrf.mxu0
        %v2766 = vadd.f32 0.0, %v2765
        %2767 = vdwg.mxu0
        %2768 = vmatpush.bf16.msra.mxu0 %v2662
        %2769 = vmatpush.bf16.msra.mxu0 %v2661
        %2770 = vmatpush.bf16.msra.mxu0 %v2660
        %2771 = vmatpush.bf16.msra.mxu0 %v2659
        %2772 = vmatpush.bf16.msra.mxu0 %v2658
        %2773 = vmatpush.bf16.msra.mxu0 %v2657
        %2774 = vmatpush.bf16.msra.mxu0 %v2656
        %2775 = vmatpush.bf16.msra.mxu0 %v2655
        %2776 = vmatmul.bf16.gmra.mxu0 %v2519
        %v2777 = vpop.f32.mrf.mxu0
        %v2778 = vadd.f32 %v2689, %v2777
        %v2779 = vpop.f32.mrf.mxu0
        %v2780 = vadd.f32 %v2691, %v2779
        %2781 = vmatmul.bf16.gmra.mxu0 %v2520
        %v2782 = vpop.f32.mrf.mxu0
        %v2783 = vadd.f32 %v2694, %v2782
        %v2784 = vpop.f32.mrf.mxu0
        %v2785 = vadd.f32 %v2696, %v2784
        %2786 = vmatmul.bf16.gmra.mxu0 %v2521
        %v2787 = vpop.f32.mrf.mxu0
        %v2788 = vadd.f32 %v2699, %v2787
        %v2789 = vpop.f32.mrf.mxu0
        %v2790 = vadd.f32 %v2701, %v2789
        %2791 = vmatmul.bf16.gmra.mxu0 %v2522
        %v2792 = vpop.f32.mrf.mxu0
        %v2793 = vadd.f32 %v2704, %v2792
        %v2794 = vpop.f32.mrf.mxu0
        %v2795 = vadd.f32 %v2706, %v2794
        %2796 = vmatmul.bf16.gmra.mxu0 %v2523
        %v2797 = vpop.f32.mrf.mxu0
        %v2798 = vadd.f32 %v2709, %v2797
        %v2799 = vpop.f32.mrf.mxu0
        %v2800 = vadd.f32 %v2711, %v2799
        %2801 = vmatmul.bf16.gmra.mxu0 %v2524
        %v2802 = vpop.f32.mrf.mxu0
        %v2803 = vadd.f32 %v2714, %v2802
        %v2804 = vpop.f32.mrf.mxu0
        %v2805 = vadd.f32 %v2716, %v2804
        %2806 = vmatmul.bf16.gmra.mxu0 %v2525
        %v2807 = vpop.f32.mrf.mxu0
        %v2808 = vadd.f32 %v2719, %v2807
        %v2809 = vpop.f32.mrf.mxu0
        %v2810 = vadd.f32 %v2721, %v2809
        %2811 = vmatmul.bf16.gmra.mxu0 %v2526
        %v2812 = vpop.f32.mrf.mxu0
        %v2813 = vadd.f32 %v2724, %v2812
        %v2814 = vpop.f32.mrf.mxu0
        %v2815 = vadd.f32 %v2726, %v2814
        %2816 = vmatmul.bf16.gmra.mxu0 %v2527
        %v2817 = vpop.f32.mrf.mxu0
        %v2818 = vadd.f32 %v2729, %v2817
        %v2819 = vpop.f32.mrf.mxu0
        %v2820 = vadd.f32 %v2731, %v2819
        %2821 = vmatmul.bf16.gmra.mxu0 %v2528
        %v2822 = vpop.f32.mrf.mxu0
        %v2823 = vadd.f32 %v2734, %v2822
        %v2824 = vpop.f32.mrf.mxu0
        %v2825 = vadd.f32 %v2736, %v2824
        %2826 = vmatmul.bf16.gmra.mxu0 %v2529
        %v2827 = vpop.f32.mrf.mxu0
        %v2828 = vadd.f32 %v2739, %v2827
        %v2829 = vpop.f32.mrf.mxu0
        %v2830 = vadd.f32 %v2741, %v2829
        %2831 = vmatmul.bf16.gmra.mxu0 %v2530
        %v2832 = vpop.f32.mrf.mxu0
        %v2833 = vadd.f32 %v2744, %v2832
        %v2834 = vpop.f32.mrf.mxu0
        %v2835 = vadd.f32 %v2746, %v2834
        %2836 = vmatmul.bf16.gmra.mxu0 %v2531
        %v2837 = vpop.f32.mrf.mxu0
        %v2838 = vadd.f32 %v2749, %v2837
        %v2839 = vpop.f32.mrf.mxu0
        %v2840 = vadd.f32 %v2751, %v2839
        %2841 = vmatmul.bf16.gmra.mxu0 %v2532
        %v2842 = vpop.f32.mrf.mxu0
        %v2843 = vadd.f32 %v2754, %v2842
        %v2844 = vpop.f32.mrf.mxu0
        %v2845 = vadd.f32 %v2756, %v2844
        %2846 = vmatmul.bf16.gmra.mxu0 %v2533
        %v2847 = vpop.f32.mrf.mxu0
        %v2848 = vadd.f32 %v2759, %v2847
        %v2849 = vpop.f32.mrf.mxu0
        %v2850 = vadd.f32 %v2761, %v2849
        %2851 = vmatmul.bf16.gmra.mxu0 %v2534
        %v2852 = vpop.f32.mrf.mxu0
        %v2853 = vadd.f32 %v2764, %v2852
        %v2854 = vpop.f32.mrf.mxu0
        %v2855 = vadd.f32 %v2766, %v2854
        %2856 = vdwg.mxu0
        %v2857 = vmul.f32 %v2778, %v2778
        %v2858 = vmul.f32 %v2780, %v2780
        %v2859 = vmul.f32 %v2783, %v2783
        %v2860 = vmul.f32 %v2785, %v2785
        %v2861 = vmul.f32 %v2788, %v2788
        %v2862 = vmul.f32 %v2790, %v2790
        %v2863 = vmul.f32 %v2793, %v2793
        %v2864 = vmul.f32 %v2795, %v2795
        %v2865 = vmul.f32 %v2798, %v2798
        %v2866 = vmul.f32 %v2800, %v2800
        %v2867 = vmul.f32 %v2803, %v2803
        %v2868 = vmul.f32 %v2805, %v2805
        %v2869 = vmul.f32 %v2808, %v2808
        %v2870 = vmul.f32 %v2810, %v2810
        %v2871 = vmul.f32 %v2813, %v2813
        %v2872 = vmul.f32 %v2815, %v2815
        %v2873 = vmul.f32 %v2818, %v2818
        %v2874 = vmul.f32 %v2820, %v2820
        %v2875 = vmul.f32 %v2823, %v2823
        %v2876 = vmul.f32 %v2825, %v2825
        %v2877 = vmul.f32 %v2828, %v2828
        %v2878 = vmul.f32 %v2830, %v2830
        %v2879 = vmul.f32 %v2833, %v2833
        %v2880 = vmul.f32 %v2835, %v2835
        %v2881 = vmul.f32 %v2838, %v2838
        %v2882 = vmul.f32 %v2840, %v2840
        %v2883 = vmul.f32 %v2843, %v2843
        %v2884 = vmul.f32 %v2845, %v2845
        %v2885 = vmul.f32 %v2848, %v2848
        %v2886 = vmul.f32 %v2850, %v2850
        %v2887 = vmul.f32 %v2853, %v2853
        %v2888 = vmul.f32 %v2855, %v2855
        %v2889 = vpack.c.bf16 %v2857, %v2857
        %v2890 = vpack.c.bf16 %v2858, %v2858
        %v2891 = vpack.c.bf16 %v2859, %v2859
        %v2892 = vpack.c.bf16 %v2860, %v2860
        %v2893 = vpack.c.bf16 %v2861, %v2861
        %v2894 = vpack.c.bf16 %v2862, %v2862
        %v2895 = vpack.c.bf16 %v2863, %v2863
        %v2896 = vpack.c.bf16 %v2864, %v2864
        %v2897 = vpack.c.bf16 %v2865, %v2865
        %v2898 = vpack.c.bf16 %v2866, %v2866
        %v2899 = vpack.c.bf16 %v2867, %v2867
        %v2900 = vpack.c.bf16 %v2868, %v2868
        %v2901 = vpack.c.bf16 %v2869, %v2869
        %v2902 = vpack.c.bf16 %v2870, %v2870
        %v2903 = vpack.c.bf16 %v2871, %v2871
        %v2904 = vpack.c.bf16 %v2872, %v2872
        %v2905 = vpack.c.bf16 %v2873, %v2873
        %v2906 = vpack.c.bf16 %v2874, %v2874
        %v2907 = vpack.c.bf16 %v2875, %v2875
        %v2908 = vpack.c.bf16 %v2876, %v2876
        %v2909 = vpack.c.bf16 %v2877, %v2877
        %v2910 = vpack.c.bf16 %v2878, %v2878
        %v2911 = vpack.c.bf16 %v2879, %v2879
        %v2912 = vpack.c.bf16 %v2880, %v2880
        %v2913 = vpack.c.bf16 %v2881, %v2881
        %v2914 = vpack.c.bf16 %v2882, %v2882
        %v2915 = vpack.c.bf16 %v2883, %v2883
        %v2916 = vpack.c.bf16 %v2884, %v2884
        %v2917 = vpack.c.bf16 %v2885, %v2885
        %v2918 = vpack.c.bf16 %v2886, %v2886
        %v2919 = vpack.c.bf16 %v2887, %v2887
        %v2920 = vpack.c.bf16 %v2888, %v2888
        %v2921 = vld [vmem:[#allocation7] sm:$0xf]
        %v2922 = vld [vmem:[#allocation7 + $0x4] sm:$0xf]
        %v2923 = vld [vmem:[#allocation7 + $0x8] sm:$0xf]
        %v2924 = vld [vmem:[#allocation7 + $0xc] sm:$0xf]
        %v2925 = vld [vmem:[#allocation7 + $0x10] sm:$0xf]
        %v2926 = vld [vmem:[#allocation7 + $0x14] sm:$0xf]
        %v2927 = vld [vmem:[#allocation7 + $0x18] sm:$0xf]
        %v2928 = vld [vmem:[#allocation7 + $0x1c] sm:$0xf]
        %v2929 = vld [vmem:[#allocation7 + $0x20] sm:$0xf]
        %v2930 = vld [vmem:[#allocation7 + $0x24] sm:$0xf]
        %v2931 = vld [vmem:[#allocation7 + $0x28] sm:$0xf]
        %v2932 = vld [vmem:[#allocation7 + $0x2c] sm:$0xf]
        %v2933 = vld [vmem:[#allocation7 + $0x30] sm:$0xf]
        %v2934 = vld [vmem:[#allocation7 + $0x34] sm:$0xf]
        %v2935 = vld [vmem:[#allocation7 + $0x38] sm:$0xf]
        %v2936 = vld [vmem:[#allocation7 + $0x3c] sm:$0xf]
        %v2953 = vunpack.c.l.b16 %v2921
        %v2954 = vunpack.c.l.b16 %v2922
        %v2955 = vunpack.c.l.b16 %v2923
        %v2956 = vunpack.c.l.b16 %v2924
        %v2957 = vunpack.c.l.b16 %v2925
        %v2958 = vunpack.c.l.b16 %v2926
        %v2959 = vunpack.c.l.b16 %v2927
        %v2960 = vunpack.c.l.b16 %v2928
        %v2961 = vunpack.c.l.b16 %v2929
        %v2962 = vunpack.c.l.b16 %v2930
        %v2963 = vunpack.c.l.b16 %v2931
        %v2964 = vunpack.c.l.b16 %v2932
        %v2965 = vunpack.c.l.b16 %v2933
        %v2966 = vunpack.c.l.b16 %v2934
        %v2967 = vunpack.c.l.b16 %v2935
        %v2968 = vunpack.c.l.b16 %v2936
        %v2969 = vpack.c.b16 %v2954, %v2953
        %v2970 = vpack.c.b16 %v2956, %v2955
        %v2971 = vpack.c.b16 %v2958, %v2957
        %v2972 = vpack.c.b16 %v2960, %v2959
        %v2973 = vpack.c.b16 %v2962, %v2961
        %v2974 = vpack.c.b16 %v2964, %v2963
        %v2975 = vpack.c.b16 %v2966, %v2965
        %v2976 = vpack.c.b16 %v2968, %v2967
        %2985 = vmatpush.bf16.msra.mxu0 %v2976
        %2986 = vmatpush.bf16.msra.mxu0 %v2975
        %2987 = vmatpush.bf16.msra.mxu0 %v2974
        %2988 = vmatpush.bf16.msra.mxu0 %v2973
        %2989 = vmatpush.bf16.msra.mxu0 %v2972
        %2990 = vmatpush.bf16.msra.mxu0 %v2971
        %2991 = vmatpush.bf16.msra.mxu0 %v2970
        %2992 = vmatpush.bf16.msra.mxu0 %v2969
        %2993 = vmatmul.bf16.gmra.mxu0 %v383
        %v2994 = vpop.f32.mrf.mxu0
        %v2995 = vadd.f32 0.0, %v2994
        %v2996 = vpop.f32.mrf.mxu0
        %v2997 = vadd.f32 0.0, %v2996
        %2998 = vmatmul.bf16.gmra.mxu0 %v384
        %v2999 = vpop.f32.mrf.mxu0
        %v3000 = vadd.f32 0.0, %v2999
        %v3001 = vpop.f32.mrf.mxu0
        %v3002 = vadd.f32 0.0, %v3001
        %3003 = vmatmul.bf16.gmra.mxu0 %v385
        %v3004 = vpop.f32.mrf.mxu0
        %v3005 = vadd.f32 0.0, %v3004
        %v3006 = vpop.f32.mrf.mxu0
        %v3007 = vadd.f32 0.0, %v3006
        %3008 = vmatmul.bf16.gmra.mxu0 %v386
        %v3009 = vpop.f32.mrf.mxu0
        %v3010 = vadd.f32 0.0, %v3009
        %v3011 = vpop.f32.mrf.mxu0
        %v3012 = vadd.f32 0.0, %v3011
        %3013 = vmatmul.bf16.gmra.mxu0 %v387
        %v3014 = vpop.f32.mrf.mxu0
        %v3015 = vadd.f32 0.0, %v3014
        %v3016 = vpop.f32.mrf.mxu0
        %v3017 = vadd.f32 0.0, %v3016
        %3018 = vmatmul.bf16.gmra.mxu0 %v388
        %v3019 = vpop.f32.mrf.mxu0
        %v3020 = vadd.f32 0.0, %v3019
        %v3021 = vpop.f32.mrf.mxu0
        %v3022 = vadd.f32 0.0, %v3021
        %3023 = vmatmul.bf16.gmra.mxu0 %v389
        %v3024 = vpop.f32.mrf.mxu0
        %v3025 = vadd.f32 0.0, %v3024
        %v3026 = vpop.f32.mrf.mxu0
        %v3027 = vadd.f32 0.0, %v3026
        %3028 = vmatmul.bf16.gmra.mxu0 %v390
        %v3029 = vpop.f32.mrf.mxu0
        %v3030 = vadd.f32 0.0, %v3029
        %v3031 = vpop.f32.mrf.mxu0
        %v3032 = vadd.f32 0.0, %v3031
        %3033 = vmatmul.bf16.gmra.mxu0 %v391
        %v3034 = vpop.f32.mrf.mxu0
        %v3035 = vadd.f32 0.0, %v3034
        %v3036 = vpop.f32.mrf.mxu0
        %v3037 = vadd.f32 0.0, %v3036
        %3038 = vmatmul.bf16.gmra.mxu0 %v392
        %v3039 = vpop.f32.mrf.mxu0
        %v3040 = vadd.f32 0.0, %v3039
        %v3041 = vpop.f32.mrf.mxu0
        %v3042 = vadd.f32 0.0, %v3041
        %3043 = vmatmul.bf16.gmra.mxu0 %v393
        %v3044 = vpop.f32.mrf.mxu0
        %v3045 = vadd.f32 0.0, %v3044
        %v3046 = vpop.f32.mrf.mxu0
        %v3047 = vadd.f32 0.0, %v3046
        %3048 = vmatmul.bf16.gmra.mxu0 %v394
        %v3049 = vpop.f32.mrf.mxu0
        %v3050 = vadd.f32 0.0, %v3049
        %v3051 = vpop.f32.mrf.mxu0
        %v3052 = vadd.f32 0.0, %v3051
        %3053 = vmatmul.bf16.gmra.mxu0 %v395
        %v3054 = vpop.f32.mrf.mxu0
        %v3055 = vadd.f32 0.0, %v3054
        %v3056 = vpop.f32.mrf.mxu0
        %v3057 = vadd.f32 0.0, %v3056
        %3058 = vmatmul.bf16.gmra.mxu0 %v396
        %v3059 = vpop.f32.mrf.mxu0
        %v3060 = vadd.f32 0.0, %v3059
        %v3061 = vpop.f32.mrf.mxu0
        %v3062 = vadd.f32 0.0, %v3061
        %3063 = vmatmul.bf16.gmra.mxu0 %v397
        %v3064 = vpop.f32.mrf.mxu0
        %v3065 = vadd.f32 0.0, %v3064
        %v3066 = vpop.f32.mrf.mxu0
        %v3067 = vadd.f32 0.0, %v3066
        %3068 = vmatmul.bf16.gmra.mxu0 %v398
        %v3069 = vpop.f32.mrf.mxu0
        %v3070 = vadd.f32 0.0, %v3069
        %v3071 = vpop.f32.mrf.mxu0
        %v3072 = vadd.f32 0.0, %v3071
        %3073 = vdwg.mxu0
        %v3074 = vpack.c.bf16 %v2995, %v2995
        %v3075 = vpack.c.bf16 %v2997, %v2997
        %v3076 = vpack.c.bf16 %v3000, %v3000
        %v3077 = vpack.c.bf16 %v3002, %v3002
        %v3078 = vpack.c.bf16 %v3005, %v3005
        %v3079 = vpack.c.bf16 %v3007, %v3007
        %v3080 = vpack.c.bf16 %v3010, %v3010
        %v3081 = vpack.c.bf16 %v3012, %v3012
        %v3082 = vpack.c.bf16 %v3015, %v3015
        %v3083 = vpack.c.bf16 %v3017, %v3017
        %v3084 = vpack.c.bf16 %v3020, %v3020
        %v3085 = vpack.c.bf16 %v3022, %v3022
        %v3086 = vpack.c.bf16 %v3025, %v3025
        %v3087 = vpack.c.bf16 %v3027, %v3027
        %v3088 = vpack.c.bf16 %v3030, %v3030
        %v3089 = vpack.c.bf16 %v3032, %v3032
        %v3090 = vpack.c.bf16 %v3035, %v3035
        %v3091 = vpack.c.bf16 %v3037, %v3037
        %v3092 = vpack.c.bf16 %v3040, %v3040
        %v3093 = vpack.c.bf16 %v3042, %v3042
        %v3094 = vpack.c.bf16 %v3045, %v3045
        %v3095 = vpack.c.bf16 %v3047, %v3047
        %v3096 = vpack.c.bf16 %v3050, %v3050
        %v3097 = vpack.c.bf16 %v3052, %v3052
        %v3098 = vpack.c.bf16 %v3055, %v3055
        %v3099 = vpack.c.bf16 %v3057, %v3057
        %v3100 = vpack.c.bf16 %v3060, %v3060
        %v3101 = vpack.c.bf16 %v3062, %v3062
        %v3102 = vpack.c.bf16 %v3065, %v3065
        %v3103 = vpack.c.bf16 %v3067, %v3067
        %v3104 = vpack.c.bf16 %v3070, %v3070
        %v3105 = vpack.c.bf16 %v3072, %v3072
        %v3122 = vunpack.c.l.b16 %v2889
        %v3123 = vunpack.c.l.b16 %v2890
        %v3124 = vunpack.c.l.b16 %v2891
        %v3125 = vunpack.c.l.b16 %v2892
        %v3126 = vunpack.c.l.b16 %v2893
        %v3127 = vunpack.c.l.b16 %v2894
        %v3128 = vunpack.c.l.b16 %v2895
        %v3129 = vunpack.c.l.b16 %v2896
        %v3130 = vunpack.c.l.b16 %v2897
        %v3131 = vunpack.c.l.b16 %v2898
        %v3132 = vunpack.c.l.b16 %v2899
        %v3133 = vunpack.c.l.b16 %v2900
        %v3134 = vunpack.c.l.b16 %v2901
        %v3135 = vunpack.c.l.b16 %v2902
        %v3136 = vunpack.c.l.b16 %v2903
        %v3137 = vunpack.c.l.b16 %v2904
        %v3138 = vpack.c.b16 %v3123, %v3122
        %v3139 = vpack.c.b16 %v3125, %v3124
        %v3140 = vpack.c.b16 %v3127, %v3126
        %v3141 = vpack.c.b16 %v3129, %v3128
        %v3142 = vpack.c.b16 %v3131, %v3130
        %v3143 = vpack.c.b16 %v3133, %v3132
        %v3144 = vpack.c.b16 %v3135, %v3134
        %v3145 = vpack.c.b16 %v3137, %v3136
        %v3170 = vunpack.c.l.b16 %v3074
        %v3171 = vunpack.c.l.b16 %v3075
        %v3172 = vunpack.c.l.b16 %v3076
        %v3173 = vunpack.c.l.b16 %v3077
        %v3174 = vunpack.c.l.b16 %v3078
        %v3175 = vunpack.c.l.b16 %v3079
        %v3176 = vunpack.c.l.b16 %v3080
        %v3177 = vunpack.c.l.b16 %v3081
        %v3178 = vunpack.c.l.b16 %v3082
        %v3179 = vunpack.c.l.b16 %v3083
        %v3180 = vunpack.c.l.b16 %v3084
        %v3181 = vunpack.c.l.b16 %v3085
        %v3182 = vunpack.c.l.b16 %v3086
        %v3183 = vunpack.c.l.b16 %v3087
        %v3184 = vunpack.c.l.b16 %v3088
        %v3185 = vunpack.c.l.b16 %v3089
        %v3186 = vpack.c.b16 %v3171, %v3170
        %v3187 = vpack.c.b16 %v3173, %v3172
        %v3188 = vpack.c.b16 %v3175, %v3174
        %v3189 = vpack.c.b16 %v3177, %v3176
        %v3190 = vpack.c.b16 %v3179, %v3178
        %v3191 = vpack.c.b16 %v3181, %v3180
        %v3192 = vpack.c.b16 %v3183, %v3182
        %v3193 = vpack.c.b16 %v3185, %v3184
        %3202 = vmatpush.bf16.msra.mxu0 %v3193
        %3203 = vmatpush.bf16.msra.mxu0 %v3192
        %3204 = vmatpush.bf16.msra.mxu0 %v3191
        %3205 = vmatpush.bf16.msra.mxu0 %v3190
        %3206 = vmatpush.bf16.msra.mxu0 %v3189
        %3207 = vmatpush.bf16.msra.mxu0 %v3188
        %3208 = vmatpush.bf16.msra.mxu0 %v3187
        %3209 = vmatpush.bf16.msra.mxu0 %v3186
        %3210 = vmatmul.bf16.gmra.mxu0 %v3138
        %v3211 = vpop.f32.mrf.mxu0
        %v3212 = vadd.f32 0.0, %v3211
        %v3213 = vpop.f32.mrf.mxu0
        %v3214 = vadd.f32 0.0, %v3213
        %3215 = vmatmul.bf16.gmra.mxu0 %v3139
        %v3216 = vpop.f32.mrf.mxu0
        %v3217 = vadd.f32 0.0, %v3216
        %v3218 = vpop.f32.mrf.mxu0
        %v3219 = vadd.f32 0.0, %v3218
        %3220 = vmatmul.bf16.gmra.mxu0 %v3140
        %v3221 = vpop.f32.mrf.mxu0
        %v3222 = vadd.f32 0.0, %v3221
        %v3223 = vpop.f32.mrf.mxu0
        %v3224 = vadd.f32 0.0, %v3223
        %3225 = vmatmul.bf16.gmra.mxu0 %v3141
        %v3226 = vpop.f32.mrf.mxu0
        %v3227 = vadd.f32 0.0, %v3226
        %v3228 = vpop.f32.mrf.mxu0
        %v3229 = vadd.f32 0.0, %v3228
        %3230 = vmatmul.bf16.gmra.mxu0 %v3142
        %v3231 = vpop.f32.mrf.mxu0
        %v3232 = vadd.f32 0.0, %v3231
        %v3233 = vpop.f32.mrf.mxu0
        %v3234 = vadd.f32 0.0, %v3233
        %3235 = vmatmul.bf16.gmra.mxu0 %v3143
        %v3236 = vpop.f32.mrf.mxu0
        %v3237 = vadd.f32 0.0, %v3236
        %v3238 = vpop.f32.mrf.mxu0
        %v3239 = vadd.f32 0.0, %v3238
        %3240 = vmatmul.bf16.gmra.mxu0 %v3144
        %v3241 = vpop.f32.mrf.mxu0
        %v3242 = vadd.f32 0.0, %v3241
        %v3243 = vpop.f32.mrf.mxu0
        %v3244 = vadd.f32 0.0, %v3243
        %3245 = vmatmul.bf16.gmra.mxu0 %v3145
        %v3246 = vpop.f32.mrf.mxu0
        %v3247 = vadd.f32 0.0, %v3246
        %v3248 = vpop.f32.mrf.mxu0
        %v3249 = vadd.f32 0.0, %v3248
        %3250 = vdwg.mxu0
        %v3267 = vunpack.c.l.b16 %v2905
        %v3268 = vunpack.c.l.b16 %v2906
        %v3269 = vunpack.c.l.b16 %v2907
        %v3270 = vunpack.c.l.b16 %v2908
        %v3271 = vunpack.c.l.b16 %v2909
        %v3272 = vunpack.c.l.b16 %v2910
        %v3273 = vunpack.c.l.b16 %v2911
        %v3274 = vunpack.c.l.b16 %v2912
        %v3275 = vunpack.c.l.b16 %v2913
        %v3276 = vunpack.c.l.b16 %v2914
        %v3277 = vunpack.c.l.b16 %v2915
        %v3278 = vunpack.c.l.b16 %v2916
        %v3279 = vunpack.c.l.b16 %v2917
        %v3280 = vunpack.c.l.b16 %v2918
        %v3281 = vunpack.c.l.b16 %v2919
        %v3282 = vunpack.c.l.b16 %v2920
        %v3283 = vpack.c.b16 %v3268, %v3267
        %v3284 = vpack.c.b16 %v3270, %v3269
        %v3285 = vpack.c.b16 %v3272, %v3271
        %v3286 = vpack.c.b16 %v3274, %v3273
        %v3287 = vpack.c.b16 %v3276, %v3275
        %v3288 = vpack.c.b16 %v3278, %v3277
        %v3289 = vpack.c.b16 %v3280, %v3279
        %v3290 = vpack.c.b16 %v3282, %v3281
        %v3315 = vunpack.c.l.b16 %v3090
        %v3316 = vunpack.c.l.b16 %v3091
        %v3317 = vunpack.c.l.b16 %v3092
        %v3318 = vunpack.c.l.b16 %v3093
        %v3319 = vunpack.c.l.b16 %v3094
        %v3320 = vunpack.c.l.b16 %v3095
        %v3321 = vunpack.c.l.b16 %v3096
        %v3322 = vunpack.c.l.b16 %v3097
        %v3323 = vunpack.c.l.b16 %v3098
        %v3324 = vunpack.c.l.b16 %v3099
        %v3325 = vunpack.c.l.b16 %v3100
        %v3326 = vunpack.c.l.b16 %v3101
        %v3327 = vunpack.c.l.b16 %v3102
        %v3328 = vunpack.c.l.b16 %v3103
        %v3329 = vunpack.c.l.b16 %v3104
        %v3330 = vunpack.c.l.b16 %v3105
        %v3331 = vpack.c.b16 %v3316, %v3315
        %v3332 = vpack.c.b16 %v3318, %v3317
        %v3333 = vpack.c.b16 %v3320, %v3319
        %v3334 = vpack.c.b16 %v3322, %v3321
        %v3335 = vpack.c.b16 %v3324, %v3323
        %v3336 = vpack.c.b16 %v3326, %v3325
        %v3337 = vpack.c.b16 %v3328, %v3327
        %v3338 = vpack.c.b16 %v3330, %v3329
        %3347 = vmatpush.bf16.msra.mxu0 %v3338
        %3348 = vmatpush.bf16.msra.mxu0 %v3337
        %3349 = vmatpush.bf16.msra.mxu0 %v3336
        %3350 = vmatpush.bf16.msra.mxu0 %v3335
        %3351 = vmatpush.bf16.msra.mxu0 %v3334
        %3352 = vmatpush.bf16.msra.mxu0 %v3333
        %3353 = vmatpush.bf16.msra.mxu0 %v3332
        %3354 = vmatpush.bf16.msra.mxu0 %v3331
        %3355 = vmatmul.bf16.gmra.mxu0 %v3283
        %v3356 = vpop.f32.mrf.mxu0
        %v3357 = vadd.f32 0.0, %v3356
        %v3358 = vpop.f32.mrf.mxu0
        %v3359 = vadd.f32 0.0, %v3358
        %3360 = vmatmul.bf16.gmra.mxu0 %v3284
        %v3361 = vpop.f32.mrf.mxu0
        %v3362 = vadd.f32 0.0, %v3361
        %v3363 = vpop.f32.mrf.mxu0
        %v3364 = vadd.f32 0.0, %v3363
        %3365 = vmatmul.bf16.gmra.mxu0 %v3285
        %v3366 = vpop.f32.mrf.mxu0
        %v3367 = vadd.f32 0.0, %v3366
        %v3368 = vpop.f32.mrf.mxu0
        %v3369 = vadd.f32 0.0, %v3368
        %3370 = vmatmul.bf16.gmra.mxu0 %v3286
        %v3371 = vpop.f32.mrf.mxu0
        %v3372 = vadd.f32 0.0, %v3371
        %v3373 = vpop.f32.mrf.mxu0
        %v3374 = vadd.f32 0.0, %v3373
        %3375 = vmatmul.bf16.gmra.mxu0 %v3287
        %v3376 = vpop.f32.mrf.mxu0
        %v3377 = vadd.f32 0.0, %v3376
        %v3378 = vpop.f32.mrf.mxu0
        %v3379 = vadd.f32 0.0, %v3378
        %3380 = vmatmul.bf16.gmra.mxu0 %v3288
        %v3381 = vpop.f32.mrf.mxu0
        %v3382 = vadd.f32 0.0, %v3381
        %v3383 = vpop.f32.mrf.mxu0
        %v3384 = vadd.f32 0.0, %v3383
        %3385 = vmatmul.bf16.gmra.mxu0 %v3289
        %v3386 = vpop.f32.mrf.mxu0
        %v3387 = vadd.f32 0.0, %v3386
        %v3388 = vpop.f32.mrf.mxu0
        %v3389 = vadd.f32 0.0, %v3388
        %3390 = vmatmul.bf16.gmra.mxu0 %v3290
        %v3391 = vpop.f32.mrf.mxu0
        %v3392 = vadd.f32 0.0, %v3391
        %v3393 = vpop.f32.mrf.mxu0
        %v3394 = vadd.f32 0.0, %v3393
        %3395 = vdwg.mxu0
        %3396 = vst [vmem:[%s268] sm:$0xff] %v3212
        %3397 = vst [vmem:[%s268 + $0x8] sm:$0xff] %v3214
        %3398 = vst [vmem:[%s268 + $0x10] sm:$0xff] %v3217
        %3399 = vst [vmem:[%s268 + $0x18] sm:$0xff] %v3219
        %3400 = vst [vmem:[%s268 + $0x20] sm:$0xff] %v3222
        %3401 = vst [vmem:[%s268 + $0x28] sm:$0xff] %v3224
        %3402 = vst [vmem:[%s268 + $0x30] sm:$0xff] %v3227
        %3403 = vst [vmem:[%s268 + $0x38] sm:$0xff] %v3229
        %3404 = vst [vmem:[%s268 + $0x40] sm:$0xff] %v3232
        %3405 = vst [vmem:[%s268 + $0x48] sm:$0xff] %v3234
        %3406 = vst [vmem:[%s268 + $0x50] sm:$0xff] %v3237
        %3407 = vst [vmem:[%s268 + $0x58] sm:$0xff] %v3239
        %3408 = vst [vmem:[%s268 + $0x60] sm:$0xff] %v3242
        %3409 = vst [vmem:[%s268 + $0x68] sm:$0xff] %v3244
        %3410 = vst [vmem:[%s268 + $0x70] sm:$0xff] %v3247
        %3411 = vst [vmem:[%s268 + $0x78] sm:$0xff] %v3249
        %3412 = vst [vmem:[%s268 + $0x80] sm:$0xff] %v3357
        %3413 = vst [vmem:[%s268 + $0x88] sm:$0xff] %v3359
        %3414 = vst [vmem:[%s268 + $0x90] sm:$0xff] %v3362
        %3415 = vst [vmem:[%s268 + $0x98] sm:$0xff] %v3364
        %3416 = vst [vmem:[%s268 + $0xa0] sm:$0xff] %v3367
        %3417 = vst [vmem:[%s268 + $0xa8] sm:$0xff] %v3369
        %3418 = vst [vmem:[%s268 + $0xb0] sm:$0xff] %v3372
        %3419 = vst [vmem:[%s268 + $0xb8] sm:$0xff] %v3374
        %3420 = vst [vmem:[%s268 + $0xc0] sm:$0xff] %v3377
        %3421 = vst [vmem:[%s268 + $0xc8] sm:$0xff] %v3379
        %3422 = vst [vmem:[%s268 + $0xd0] sm:$0xff] %v3382
        %3423 = vst [vmem:[%s268 + $0xd8] sm:$0xff] %v3384
        %3424 = vst [vmem:[%s268 + $0xe0] sm:$0xff] %v3387
        %3425 = vst [vmem:[%s268 + $0xe8] sm:$0xff] %v3389
        %3426 = vst [vmem:[%s268 + $0xf0] sm:$0xff] %v3392
        %3427 = vst [vmem:[%s268 + $0xf8] sm:$0xff] %v3394
        %s3428 = sand.u32 %s120, 1
        %s3429 = scalar_lea.sflag [#allocation4], %s3428
        %s3430 = sand.u32 %s120, 1
        %s3431 = smul.addr %s3430, 256
        %s3432 = scalar_lea.vmem [#allocation10], %s3431
        // Predicated region
        $region53: #{tpu_custom_call.1} parent=35 // pred_check
          %p3433 = pneg %p130
        $region54: #{tpu_custom_call.1} parent=35 // pred_check_branch
          %3435 = sbr.rel (%p3433) target = $region56
        $region55: #{tpu_custom_call.1} parent=35 // pred_region
          %s3436 = smul.u32 2, %s23
          %3438 = vsyncadd %s3429, 0
          %s3439 = smul.addr %s3436, 16
          %s3440 = smul.addr %s3439, 8
          %s3441 = scalar_lea.hbm %s4, %s3440
          %s3442 = sshll.u32 %s3432, 4
          %s3443 = int_to_ptr.vmem [resolvable:$true] %s3442
          %s3444 = sshll.u32 %s3441, 4
          %s3445 = int_to_ptr.hbm [resolvable:$true] %s3444
          %3450 = dma.vmem_to_hbm [thread:$0]  %s3443, 4096, %s3445, %s3429, 128, 128, 8
        $region56: #{tpu_custom_call.1} parent=35 // pred_fallthru
          _
      $region36: #{tpu_custom_call.1} parent=5 // pred_fallthru
        _
      %p3451 = scmp.le.s32.totalorder 2, %s18
      // Predicated region
      $region57: #{tpu_custom_call.1} parent=5 // pred_check
        %p3452 = pneg %p3451
      $region58: #{tpu_custom_call.1} parent=5 // pred_check_branch
        %3454 = sbr.rel (%p3452) target = $region60
      $region59: #{tpu_custom_call.1} parent=5 // pred_region
        %s3455 = ssub.s32 %s18, 2
        // Predicated region
        $region61: #{tpu_custom_call.1} parent=59 // pred_check
          %p3456 = pneg %p136
        $region62: #{tpu_custom_call.1} parent=59 // pred_check_branch
          %3458 = sbr.rel (%p3456) target = $region64
        $region63: #{tpu_custom_call.1} parent=59 // pred_region
          %s3459 = sand.u32 %s121, 1
          %s3460 = scalar_lea.sflag [#allocation4], %s3459
          %s3461 = sand.u32 %s121, 1
          %s3462 = smul.addr %s3461, 256
          %s3463 = scalar_lea.vmem [#allocation10], %s3462
          %3465 = dma.done %s3460, 4096
        $region64: #{tpu_custom_call.1} parent=59 // pred_fallthru
          _
      $region60: #{tpu_custom_call.1} parent=5 // pred_fallthru
        _
    $region6: #{tpu_custom_call.1} parent=1 // loop_footer
      %s22 = sadd.s32 1, %s18
    $region7: #{tpu_custom_call.1} parent=1 // loop_footer_branch
      %17 = sbr.rel target = $region3
    $region8: #{tpu_custom_call.1} parent=1 // loop_exit
      _
    %3466 = vsyncpa [#allocation3], 1
    %s3467 = scalar_lea.sflag [#allocation3], 1
    %3468 = vsyncpa %s3467, 1
    %3469 = vsyncpa [#allocation6], 1
    %3470 = vsyncpa [#allocation9], 1
    %3471 = vsyncpa [#allocation4], 1
    %s3472 = scalar_lea.sflag [#allocation4], 1
    %3473 = vsyncpa %s3472, 1

</llo_original>
